<compile_context>
chip_gen: v5e
topology: v5e:2x2
jax: 0.10.0
libtpu: 0.0.40
codegen_flags: <defaults>
</compile_context>

<pallas_src>
import functools

import jax
import jax.numpy as jnp
from jax import lax
from jax.experimental import pallas as pl
from jax.experimental.pallas import tpu as pltpu


_VMEM_BUDGET_BYTES = 20 * 1024 * 1024   # tile-selection budget (fits v5e/v6e/v7x)
_VMEM_LIMIT_BYTES = 48 * 1024 * 1024    # scoped VMEM limit (< v7x's 64 MiB physical)
_MAX_STATIC_UNROLL = 16                 # larger time chunks use fori_loop(unroll=8)


# -------------------- fused projection + bidirectional LSTM ------------------
def _bilstm_kernel(xf_ref, xb_ref, wxf_ref, wxb_ref, bf_ref, bb_ref,
                   whf_ref, whb_ref, of_ref, ob_ref,
                   hf_sc, hb_sc, cf_sc, cb_sc, gf_sc, gb_sc,
                   *, hidden, t_blk):
    H = hidden
    Bblk = xf_ref.shape[0]

    # program_id(1) is the sequential time-chunk axis; reset carried state at
    # the start of every time sweep (also re-runs per batch block / per core).
    @pl.when(pl.program_id(1) == 0)
    def _():
        hf_sc[...] = jnp.zeros_like(hf_sc)
        hb_sc[...] = jnp.zeros_like(hb_sc)
        cf_sc[...] = jnp.zeros_like(cf_sc)
        cb_sc[...] = jnp.zeros_like(cb_sc)

    # ---- fused input projection (Linear + dropout(0) folded into W_ih) ----
    # One (Bblk*t_blk, Din) x (Din, 4H) bf16 matmul per direction; the result
    # stays in VMEM scratch (no xg HBM round trip).
    xf = xf_ref[...].reshape(Bblk * t_blk, -1).astype(jnp.bfloat16)
    xb = xb_ref[...].reshape(Bblk * t_blk, -1).astype(jnp.bfloat16)
    gf_sc[...] = (jnp.dot(xf, wxf_ref[...], preferred_element_type=jnp.float32)
                  + bf_ref[...]).reshape(Bblk, t_blk, 4 * H)
    gb_sc[...] = (jnp.dot(xb, wxb_ref[...], preferred_element_type=jnp.float32)
                  + bb_ref[...]).reshape(Bblk, t_blk, 4 * H)

    whf = whf_ref[...]   # (H, 4H) bf16, hoisted out of the time loop
    whb = whb_ref[...]

    def step(s, sr):
        # Per-direction recurrent matmuls (half the MACs of a block-diag form),
        # bf16 operands, f32 accumulate.
        rec_f = jnp.dot(hf_sc[...].astype(jnp.bfloat16), whf,
                        preferred_element_type=jnp.float32)           # (Bblk, 4H)
        rec_b = jnp.dot(hb_sc[...].astype(jnp.bfloat16), whb,
                        preferred_element_type=jnp.float32)
        gf = gf_sc[:, pl.ds(s, 1), :][:, 0, :] + rec_f
        gb = gb_sc[:, pl.ds(sr, 1), :][:, 0, :] + rec_b

        # Gate columns pre-ordered [i, f, o, g]: one wide sigmoid slab and one
        # tanh slab per direction, nonlinearities kept in f32 (safe on v5e).
        sig_f = jax.nn.sigmoid(gf[:, :3 * H])
        sig_b = jax.nn.sigmoid(gb[:, :3 * H])
        g_f = jnp.tanh(gf[:, 3 * H:])
        g_b = jnp.tanh(gb[:, 3 * H:])

        c_f = sig_f[:, H:2 * H] * cf_sc[...] + sig_f[:, :H] * g_f
        c_b = sig_b[:, H:2 * H] * cb_sc[...] + sig_b[:, :H] * g_b
        h_f = sig_f[:, 2 * H:] * jnp.tanh(c_f)
        h_b = sig_b[:, 2 * H:] * jnp.tanh(c_b)

        # Full-ref state stores (no lane-sliced partial stores).
        cf_sc[...] = c_f
        cb_sc[...] = c_b
        hf_sc[...] = h_f
        hb_sc[...] = h_b

        of_ref[:, pl.ds(s, 1), :] = h_f[:, None, :]
        ob_ref[:, pl.ds(sr, 1), :] = h_b[:, None, :]

    if t_blk <= _MAX_STATIC_UNROLL:
        for s in range(t_blk):           # bounded static unroll
            step(s, t_blk - 1 - s)
    else:
        def body(s, carry):              # bounded live ranges for long chunks
            step(s, t_blk - 1 - s)
            return carry
        lax.fori_loop(0, t_blk, body, 0, unroll=8)


def _estimate_vmem_bytes(Bblk, t_blk, Din, H):
    f32, bf16 = 4, 2
    io = 2 * 2 * Bblk * t_blk * (Din + H) * f32        # x/out blocks, 2 dirs, 2 bufs
    w = 2 * 2 * (Din + H) * 4 * H * bf16 + 2 * 2 * 4 * H * f32
    scratch = 2 * Bblk * t_blk * 4 * H * f32 + 4 * Bblk * H * f32
    return io + w + scratch


def _pick_time_block(T, Bblk, Din, H):
    """Largest layout-legal time chunk (divides T, %8==0 or full-extent) that
    fits the VMEM budget (keeps v7x's smaller VMEM happy)."""
    cands = [c for c in (32, 24, 16, 8) if c < T and T % c == 0]
    if T <= 32 or not cands:
        cands.append(T)                  # full-extent block is always legal
    cands = sorted(set(cands), reverse=True)
    for c in cands:
        if _estimate_vmem_bytes(Bblk, c, Din, H) <= _VMEM_BUDGET_BYTES:
            return c
    return cands[-1]


def _num_tensorcores_per_chip():
    try:
        kind = jax.devices()[0].device_kind.lower()
    except Exception:
        return 1
    return 2 if "v7" in kind else 1


def _default_batch_blocks(B):
    # v7x has two TensorCores per chip: split the BATCH (never time) across
    # them.  On single-TC chips keep nb=1 (splitting only lengthens the serial
    # recurrence there).
    return 2 if (B % 2 == 0 and _num_tensorcores_per_chip() >= 2) else 1


def pallas_bilstm(x, fp, *, batch_blocks=None):
    """x: (B, T, Din) f32; fp: folded params (gate order [i,f,o,g]).
    Returns (out_f, out_b), each (B, T, H) f32, batch-first."""
    B, T, Din = x.shape
    H = fp["wh_f"].shape[0]
    nb = batch_blocks if batch_blocks is not None else _default_batch_blocks(B)
    assert B % nb == 0
    Bblk = B // nb
    t_blk = _pick_time_block(T, Bblk, Din, H)
    assert T % t_blk == 0
    nc = T // t_blk

    kernel = functools.partial(_bilstm_kernel, hidden=H, t_blk=t_blk)
    const = lambda b, c: (0, 0)
    return pl.pallas_call(
        kernel,
        out_shape=(jax.ShapeDtypeStruct((B, T, H), jnp.float32),
                   jax.ShapeDtypeStruct((B, T, H), jnp.float32)),
        grid=(nb, nc),
        in_specs=[
            # x streamed twice: forward-time chunks and reversed-time chunks
            # (the backward direction's flip is free in the index_map).
            pl.BlockSpec((Bblk, t_blk, Din), lambda b, c: (b, c, 0)),
            pl.BlockSpec((Bblk, t_blk, Din), lambda b, c: (b, nc - 1 - c, 0)),
            pl.BlockSpec((Din, 4 * H), const),    # folded W_ih fwd (bf16)
            pl.BlockSpec((Din, 4 * H), const),    # folded W_ih bwd (bf16)
            pl.BlockSpec((1, 4 * H), const),      # folded bias fwd (f32)
            pl.BlockSpec((1, 4 * H), const),      # folded bias bwd (f32)
            pl.BlockSpec((H, 4 * H), const),      # W_hh fwd (bf16)
            pl.BlockSpec((H, 4 * H), const),      # W_hh bwd (bf16)
        ],
        out_specs=(
            pl.BlockSpec((Bblk, t_blk, H), lambda b, c: (b, c, 0)),
            pl.BlockSpec((Bblk, t_blk, H), lambda b, c: (b, nc - 1 - c, 0)),
        ),
        scratch_shapes=[
            pltpu.VMEM((Bblk, H), jnp.float32),             # h fwd
            pltpu.VMEM((Bblk, H), jnp.float32),             # h bwd
            pltpu.VMEM((Bblk, H), jnp.float32),             # c fwd
            pltpu.VMEM((Bblk, H), jnp.float32),             # c bwd
            pltpu.VMEM((Bblk, t_blk, 4 * H), jnp.float32),  # fwd gate pre-acts
            pltpu.VMEM((Bblk, t_blk, 4 * H), jnp.float32),  # bwd gate pre-acts
        ],
        compiler_params=pltpu.CompilerParams(
            # batch axis parallel (v7x 2-TC), time axis MUST stay sequential.
            dimension_semantics=("parallel", "arbitrary"),
            vmem_limit_bytes=_VMEM_LIMIT_BYTES),
    )(x, x, fp["wx_f"], fp["wx_b"], fp["b_f"], fp["b_b"],
      fp["wh_f"], fp["wh_b"])


# ------------------------------- parameters ---------------------------------
def init_params(key, input_size, output_size, hidden_size):
    ks = jax.random.split(key, 10)
    lin_bound = 1.0 / (input_size ** 0.5)
    lstm_bound = 1.0 / (hidden_size ** 0.5)
    u = lambda k, shape, bnd: jax.random.uniform(
        k, shape, jnp.float32, minval=-bnd, maxval=bnd)
    return {
        # Linear: stored as (Din, Dout) == W.T of torch's (Dout, Din)
        "w_lin": u(ks[0], (input_size, output_size), lin_bound),
        "b_lin": u(ks[1], (output_size,), lin_bound),
        # LSTM (torch gate order i,f,g,o): W_ih.T, W_hh.T, b = b_ih + b_hh
        "wx_f": u(ks[2], (output_size, 4 * hidden_size), lstm_bound),
        "wh_f": u(ks[3], (hidden_size, 4 * hidden_size), lstm_bound),
        "b_f": u(ks[4], (4 * hidden_size,), lstm_bound)
               + u(ks[5], (4 * hidden_size,), lstm_bound),
        "wx_b": u(ks[6], (output_size, 4 * hidden_size), lstm_bound),
        "wh_b": u(ks[7], (hidden_size, 4 * hidden_size), lstm_bound),
        "b_b": u(ks[8], (4 * hidden_size,), lstm_bound)
               + u(ks[9], (4 * hidden_size,), lstm_bound),
    }


def _reorder_gates(a):
    """[i, f, g, o] -> [i, f, o, g] along the last axis."""
    i, f, g, o = jnp.split(a, 4, axis=-1)
    return jnp.concatenate([i, f, o, g], axis=-1)


def fold_params(p):
    """Fold Linear into the LSTM input projection (dropout p=0.0 == identity)
    and reorder gate columns to [i, f, o, g]."""
    def one_dir(wx, wh, b):
        wxc = _reorder_gates(p["w_lin"] @ wx)            # (Din, 4H)
        bc = _reorder_gates(p["b_lin"] @ wx + b)         # (4H,)
        whc = _reorder_gates(wh)                         # (H, 4H)
        return (wxc.astype(jnp.bfloat16),
                bc.reshape(1, -1).astype(jnp.float32),
                whc.astype(jnp.bfloat16))
    wxf, bf, whf = one_dir(p["wx_f"], p["wh_f"], p["b_f"])
    wxb, bb, whb = one_dir(p["wx_b"], p["wh_b"], p["b_b"])
    return {"wx_f": wxf, "wx_b": wxb, "b_f": bf, "b_b": bb,
            "wh_f": whf, "wh_b": whb}


# ----------------------------- composition layer ----------------------------
@jax.jit
def composition_layer(x, fp):
    """x: (B, T, input_size) -> (B, T, 2*hidden_size)."""
    out_f, out_b = pallas_bilstm(x, fp)
    # Concat kept in XLA: with H < 128 a lane-split block into one (B,T,2H)
    # buffer is not layout-legal, and fwd/bwd halves of a time chunk are
    # produced at different (sequential) grid steps.
    return jnp.concatenate([out_f, out_b], axis=-1)      # (B, T, 2H)


# ------------------------------ pure-JAX reference --------------------------
def reference_forward(x, p):
    """f32 reference with the exact semantics of the torch module."""
    y = x @ p["w_lin"] + p["b_lin"]
    B, T, _ = y.shape
    H = p["wh_f"].shape[0]

    def run(wx, wh, b, reverse):
        h = jnp.zeros((B, H), jnp.float32)
        c = jnp.zeros((B, H), jnp.float32)
        outs = [None] * T
        order = range(T - 1, -1, -1) if reverse else range(T)
        for t in order:
            g = y[:, t, :] @ wx + h @ wh + b
            i = jax.nn.sigmoid(g[:, 0:H])
            f = jax.nn.sigmoid(g[:, H:2 * H])
            gg = jnp.tanh(g[:, 2 * H:3 * H])
            o = jax.nn.sigmoid(g[:, 3 * H:4 * H])
            c = f * c + i * gg
            h = o * jnp.tanh(c)
            outs[t] = h
        return jnp.stack(outs, axis=1)

    hf = run(p["wx_f"], p["wh_f"], p["b_f"], False)
    hb = run(p["wx_b"], p["wh_b"], p["b_b"], True)
    return jnp.concatenate([hf, hb], axis=-1)


if __name__ == "__main__":
    input_size, output_size, hidden_size = 16, 32, 32
    B, T = 2, 8

    key = jax.random.PRNGKey(0)
    k_x, k_p = jax.random.split(key)
    x = jax.random.normal(k_x, (B, T, input_size), jnp.float32)
    params = init_params(k_p, input_size, output_size, hidden_size)
    fp = fold_params(params)

    out = composition_layer(x, fp)
    out = jax.block_until_ready(out)
    assert out.shape == (B, T, 2 * hidden_size), out.shape

    # sanity check vs unfused f32 reference (bf16 matmuls -> loose tolerance)
    ref = reference_forward(x, params)
    err = float(jnp.max(jnp.abs(out - ref)))
    assert err < 5e-2, f"max abs error {err}"

    print("KERNEL_OK")
</pallas_src>

<mosaic_0001>
module attributes {stable_mosaic.version = 11 : i64} {
  func.func @_bilstm_kernel(%arg0: i32, %arg1: i32, %arg2: memref<2x8x16xf32, #tpu.memory_space<vmem>>, %arg3: memref<2x8x16xf32, #tpu.memory_space<vmem>>, %arg4: memref<16x128xbf16, #tpu.memory_space<vmem>>, %arg5: memref<16x128xbf16, #tpu.memory_space<vmem>>, %arg6: memref<1x128xf32, #tpu.memory_space<vmem>>, %arg7: memref<1x128xf32, #tpu.memory_space<vmem>>, %arg8: memref<32x128xbf16, #tpu.memory_space<vmem>>, %arg9: memref<32x128xbf16, #tpu.memory_space<vmem>>, %arg10: memref<2x8x32xf32, #tpu.memory_space<vmem>>, %arg11: memref<2x8x32xf32, #tpu.memory_space<vmem>>, %arg12: memref<2x32xf32, #tpu.memory_space<vmem>>, %arg13: memref<2x32xf32, #tpu.memory_space<vmem>>, %arg14: memref<2x32xf32, #tpu.memory_space<vmem>>, %arg15: memref<2x32xf32, #tpu.memory_space<vmem>>, %arg16: memref<2x8x128xf32, #tpu.memory_space<vmem>>, %arg17: memref<2x8x128xf32, #tpu.memory_space<vmem>>) attributes {dimension_semantics = [#tpu.dimension_semantics<parallel>, #tpu.dimension_semantics<arbitrary>], iteration_bounds = array<i64: 1, 1>, scalar_prefetch = 0 : i64, scratch_operands = 6 : i64, tpu.core_type = #tpu.core_type<tc>, window_params = [{transform_indices = @transform_0, window_bounds = array<i64: 2, 8, 16>}, {transform_indices = @transform_1, window_bounds = array<i64: 2, 8, 16>}, {pipeline_mode = #tpu.pipeline_mode<synchronous>, transform_indices = @transform_2, window_bounds = array<i64: 16, 128>}, {pipeline_mode = #tpu.pipeline_mode<synchronous>, transform_indices = @transform_3, window_bounds = array<i64: 16, 128>}, {pipeline_mode = #tpu.pipeline_mode<synchronous>, transform_indices = @transform_4, window_bounds = array<i64: 1, 128>}, {pipeline_mode = #tpu.pipeline_mode<synchronous>, transform_indices = @transform_5, window_bounds = array<i64: 1, 128>}, {pipeline_mode = #tpu.pipeline_mode<synchronous>, transform_indices = @transform_6, window_bounds = array<i64: 32, 128>}, {pipeline_mode = #tpu.pipeline_mode<synchronous>, transform_indices = @transform_7, window_bounds = array<i64: 32, 128>}, {transform_indices = @transform_8, window_bounds = array<i64: 2, 8, 32>}, {transform_indices = @transform_9, window_bounds = array<i64: 2, 8, 32>}]} {
    %c0_i32 = arith.constant 0 : i32
    %0 = arith.cmpi eq, %arg1, %c0_i32 : i32
    %1 = arith.extui %0 : i1 to i32
    %c0_i32_0 = arith.constant 0 : i32
    %2 = arith.cmpi ne, %1, %c0_i32_0 : i32
    scf.if %2 {
      %cst_274 = arith.constant 0.000000e+00 : f32
      %457 = vector.broadcast %cst_274 : f32 to vector<2x32xf32>
      %c0_275 = arith.constant 0 : index
      %c0_276 = arith.constant 0 : index
      %458 = vector.load %arg12[%c0_275, %c0_276] : memref<2x32xf32, #tpu.memory_space<vmem>>, vector<2x32xf32>
      tpu.vector_store %arg12[%c0_275, %c0_276], %457 {strides = array<i32>} : memref<2x32xf32, #tpu.memory_space<vmem>>, vector<2x32xf32>,
      %cst_277 = arith.constant 0.000000e+00 : f32
      %459 = vector.broadcast %cst_277 : f32 to vector<2x32xf32>
      %c0_278 = arith.constant 0 : index
      %c0_279 = arith.constant 0 : index
      %460 = vector.load %arg13[%c0_278, %c0_279] : memref<2x32xf32, #tpu.memory_space<vmem>>, vector<2x32xf32>
      tpu.vector_store %arg13[%c0_278, %c0_279], %459 {strides = array<i32>} : memref<2x32xf32, #tpu.memory_space<vmem>>, vector<2x32xf32>,
      %cst_280 = arith.constant 0.000000e+00 : f32
      %461 = vector.broadcast %cst_280 : f32 to vector<2x32xf32>
      %c0_281 = arith.constant 0 : index
      %c0_282 = arith.constant 0 : index
      %462 = vector.load %arg14[%c0_281, %c0_282] : memref<2x32xf32, #tpu.memory_space<vmem>>, vector<2x32xf32>
      tpu.vector_store %arg14[%c0_281, %c0_282], %461 {strides = array<i32>} : memref<2x32xf32, #tpu.memory_space<vmem>>, vector<2x32xf32>,
      %cst_283 = arith.constant 0.000000e+00 : f32
      %463 = vector.broadcast %cst_283 : f32 to vector<2x32xf32>
      %c0_284 = arith.constant 0 : index
      %c0_285 = arith.constant 0 : index
      %464 = vector.load %arg15[%c0_284, %c0_285] : memref<2x32xf32, #tpu.memory_space<vmem>>, vector<2x32xf32>
      tpu.vector_store %arg15[%c0_284, %c0_285], %463 {strides = array<i32>} : memref<2x32xf32, #tpu.memory_space<vmem>>, vector<2x32xf32>,
    } else {
    }
    %c0 = arith.constant 0 : index
    %c0_1 = arith.constant 0 : index
    %c0_2 = arith.constant 0 : index
    %3 = vector.load %arg2[%c0, %c0_1, %c0_2] : memref<2x8x16xf32, #tpu.memory_space<vmem>>, vector<2x8x16xf32>
    %4 = vector.shape_cast %3 : vector<2x8x16xf32> to vector<16x16xf32>
    %5 = arith.truncf %4 : vector<16x16xf32> to vector<16x16xbf16>
    %c0_3 = arith.constant 0 : index
    %c0_4 = arith.constant 0 : index
    %c0_5 = arith.constant 0 : index
    %6 = vector.load %arg3[%c0_3, %c0_4, %c0_5] : memref<2x8x16xf32, #tpu.memory_space<vmem>>, vector<2x8x16xf32>
    %7 = vector.shape_cast %6 : vector<2x8x16xf32> to vector<16x16xf32>
    %8 = arith.truncf %7 : vector<16x16xf32> to vector<16x16xbf16>
    %c0_6 = arith.constant 0 : index
    %c0_7 = arith.constant 0 : index
    %9 = vector.load %arg4[%c0_6, %c0_7] : memref<16x128xbf16, #tpu.memory_space<vmem>>, vector<16x128xbf16>
    %cst = arith.constant dense<0.000000e+00> : vector<16x128xf32>
    %10 = tpu.matmul %5, %9, %cst {dimension_numbers = #tpu.dot_dimension_numbers<[1], [0], [0], [1], [0, 0, 1, 1], [], []>} : vector<16x16xbf16>, vector<16x128xbf16>, vector<16x128xf32> -> vector<16x128xf32>
    %c0_8 = arith.constant 0 : index
    %c0_9 = arith.constant 0 : index
    %11 = vector.load %arg6[%c0_8, %c0_9] : memref<1x128xf32, #tpu.memory_space<vmem>>, vector<1x128xf32>
    %12 = vector.broadcast %11 : vector<1x128xf32> to vector<16x128xf32>
    %13 = arith.addf %10, %12 : vector<16x128xf32>
    %14 = vector.shape_cast %13 : vector<16x128xf32> to vector<2x8x128xf32>
    %c0_10 = arith.constant 0 : index
    %c0_11 = arith.constant 0 : index
    %c0_12 = arith.constant 0 : index
    %15 = vector.load %arg16[%c0_10, %c0_11, %c0_12] : memref<2x8x128xf32, #tpu.memory_space<vmem>>, vector<2x8x128xf32>
    tpu.vector_store %arg16[%c0_10, %c0_11, %c0_12], %14 {strides = array<i32>} : memref<2x8x128xf32, #tpu.memory_space<vmem>>, vector<2x8x128xf32>,
    %c0_13 = arith.constant 0 : index
    %c0_14 = arith.constant 0 : index
    %16 = vector.load %arg5[%c0_13, %c0_14] : memref<16x128xbf16, #tpu.memory_space<vmem>>, vector<16x128xbf16>
    %cst_15 = arith.constant dense<0.000000e+00> : vector<16x128xf32>
    %17 = tpu.matmul %8, %16, %cst_15 {dimension_numbers = #tpu.dot_dimension_numbers<[1], [0], [0], [1], [0, 0, 1, 1], [], []>} : vector<16x16xbf16>, vector<16x128xbf16>, vector<16x128xf32> -> vector<16x128xf32>
    %c0_16 = arith.constant 0 : index
    %c0_17 = arith.constant 0 : index
    %18 = vector.load %arg7[%c0_16, %c0_17] : memref<1x128xf32, #tpu.memory_space<vmem>>, vector<1x128xf32>
    %19 = vector.broadcast %18 : vector<1x128xf32> to vector<16x128xf32>
    %20 = arith.addf %17, %19 : vector<16x128xf32>
    %21 = vector.shape_cast %20 : vector<16x128xf32> to vector<2x8x128xf32>
    %c0_18 = arith.constant 0 : index
    %c0_19 = arith.constant 0 : index
    %c0_20 = arith.constant 0 : index
    %22 = vector.load %arg17[%c0_18, %c0_19, %c0_20] : memref<2x8x128xf32, #tpu.memory_space<vmem>>, vector<2x8x128xf32>
    tpu.vector_store %arg17[%c0_18, %c0_19, %c0_20], %21 {strides = array<i32>} : memref<2x8x128xf32, #tpu.memory_space<vmem>>, vector<2x8x128xf32>,
    %c0_21 = arith.constant 0 : index
    %c0_22 = arith.constant 0 : index
    %23 = vector.load %arg8[%c0_21, %c0_22] : memref<32x128xbf16, #tpu.memory_space<vmem>>, vector<32x128xbf16>
    %c0_23 = arith.constant 0 : index
    %c0_24 = arith.constant 0 : index
    %24 = vector.load %arg9[%c0_23, %c0_24] : memref<32x128xbf16, #tpu.memory_space<vmem>>, vector<32x128xbf16>
    %c0_25 = arith.constant 0 : index
    %c0_26 = arith.constant 0 : index
    %25 = vector.load %arg12[%c0_25, %c0_26] : memref<2x32xf32, #tpu.memory_space<vmem>>, vector<2x32xf32>
    %26 = arith.truncf %25 : vector<2x32xf32> to vector<2x32xbf16>
    %cst_27 = arith.constant dense<0.000000e+00> : vector<2x128xf32>
    %27 = tpu.matmul %26, %23, %cst_27 {dimension_numbers = #tpu.dot_dimension_numbers<[1], [0], [0], [1], [0, 0, 1, 1], [], []>} : vector<2x32xbf16>, vector<32x128xbf16>, vector<2x128xf32> -> vector<2x128xf32>
    %c0_28 = arith.constant 0 : index
    %c0_29 = arith.constant 0 : index
    %28 = vector.load %arg13[%c0_28, %c0_29] : memref<2x32xf32, #tpu.memory_space<vmem>>, vector<2x32xf32>
    %29 = arith.truncf %28 : vector<2x32xf32> to vector<2x32xbf16>
    %cst_30 = arith.constant dense<0.000000e+00> : vector<2x128xf32>
    %30 = tpu.matmul %29, %24, %cst_30 {dimension_numbers = #tpu.dot_dimension_numbers<[1], [0], [0], [1], [0, 0, 1, 1], [], []>} : vector<2x32xbf16>, vector<32x128xbf16>, vector<2x128xf32> -> vector<2x128xf32>
    %c0_31 = arith.constant 0 : index
    %c0_32 = arith.constant 0 : index
    %c0_33 = arith.constant 0 : index
    %31 = vector.load %arg16[%c0_31, %c0_32, %c0_33] : memref<2x8x128xf32, #tpu.memory_space<vmem>>, vector<2x1x128xf32>
    %32 = vector.shape_cast %31 : vector<2x1x128xf32> to vector<2x128xf32>
    %33 = arith.addf %32, %27 : vector<2x128xf32>
    %c0_34 = arith.constant 0 : index
    %c7 = arith.constant 7 : index
    %c0_35 = arith.constant 0 : index
    %34 = vector.load %arg17[%c0_34, %c7, %c0_35] : memref<2x8x128xf32, #tpu.memory_space<vmem>>, vector<2x1x128xf32>
    %35 = vector.shape_cast %34 : vector<2x1x128xf32> to vector<2x128xf32>
    %36 = arith.addf %35, %30 : vector<2x128xf32>
    %37 = vector.extract_strided_slice %33 {offsets = [0, 0], sizes = [2, 96], strides = [1, 1]} : vector<2x128xf32> to vector<2x96xf32>
    %38 = arith.negf %37 : vector<2x96xf32>
    %39 = math.exp %38 : vector<2x96xf32>
    %cst_36 = arith.constant 1.000000e+00 : f32
    %40 = vector.broadcast %cst_36 : f32 to vector<2x96xf32>
    %41 = arith.addf %40, %39 : vector<2x96xf32>
    %42 = arith.divf %40, %41 : vector<2x96xf32>
    %43 = vector.extract_strided_slice %36 {offsets = [0, 0], sizes = [2, 96], strides = [1, 1]} : vector<2x128xf32> to vector<2x96xf32>
    %44 = arith.negf %43 : vector<2x96xf32>
    %45 = math.exp %44 : vector<2x96xf32>
    %cst_37 = arith.constant 1.000000e+00 : f32
    %46 = vector.broadcast %cst_37 : f32 to vector<2x96xf32>
    %47 = arith.addf %46, %45 : vector<2x96xf32>
    %48 = arith.divf %46, %47 : vector<2x96xf32>
    %49 = vector.extract_strided_slice %33 {offsets = [0, 96], sizes = [2, 32], strides = [1, 1]} : vector<2x128xf32> to vector<2x32xf32>
    %50 = math.tanh %49 : vector<2x32xf32>
    %51 = vector.extract_strided_slice %36 {offsets = [0, 96], sizes = [2, 32], strides = [1, 1]} : vector<2x128xf32> to vector<2x32xf32>
    %52 = math.tanh %51 : vector<2x32xf32>
    %53 = vector.extract_strided_slice %42 {offsets = [0, 32], sizes = [2, 32], strides = [1, 1]} : vector<2x96xf32> to vector<2x32xf32>
    %c0_38 = arith.constant 0 : index
    %c0_39 = arith.constant 0 : index
    %54 = vector.load %arg14[%c0_38, %c0_39] : memref<2x32xf32, #tpu.memory_space<vmem>>, vector<2x32xf32>
    %55 = arith.mulf %53, %54 : vector<2x32xf32>
    %56 = vector.extract_strided_slice %42 {offsets = [0, 0], sizes = [2, 32], strides = [1, 1]} : vector<2x96xf32> to vector<2x32xf32>
    %57 = arith.mulf %56, %50 : vector<2x32xf32>
    %58 = arith.addf %55, %57 : vector<2x32xf32>
    %59 = vector.extract_strided_slice %48 {offsets = [0, 32], sizes = [2, 32], strides = [1, 1]} : vector<2x96xf32> to vector<2x32xf32>
    %c0_40 = arith.constant 0 : index
    %c0_41 = arith.constant 0 : index
    %60 = vector.load %arg15[%c0_40, %c0_41] : memref<2x32xf32, #tpu.memory_space<vmem>>, vector<2x32xf32>
    %61 = arith.mulf %59, %60 : vector<2x32xf32>
    %62 = vector.extract_strided_slice %48 {offsets = [0, 0], sizes = [2, 32], strides = [1, 1]} : vector<2x96xf32> to vector<2x32xf32>
    %63 = arith.mulf %62, %52 : vector<2x32xf32>
    %64 = arith.addf %61, %63 : vector<2x32xf32>
    %65 = vector.extract_strided_slice %42 {offsets = [0, 64], sizes = [2, 32], strides = [1, 1]} : vector<2x96xf32> to vector<2x32xf32>
    %66 = math.tanh %58 : vector<2x32xf32>
    %67 = arith.mulf %65, %66 : vector<2x32xf32>
    %68 = vector.extract_strided_slice %48 {offsets = [0, 64], sizes = [2, 32], strides = [1, 1]} : vector<2x96xf32> to vector<2x32xf32>
    %69 = math.tanh %64 : vector<2x32xf32>
    %70 = arith.mulf %68, %69 : vector<2x32xf32>
    %c0_42 = arith.constant 0 : index
    %c0_43 = arith.constant 0 : index
    %71 = vector.load %arg14[%c0_42, %c0_43] : memref<2x32xf32, #tpu.memory_space<vmem>>, vector<2x32xf32>
    tpu.vector_store %arg14[%c0_42, %c0_43], %58 {strides = array<i32>} : memref<2x32xf32, #tpu.memory_space<vmem>>, vector<2x32xf32>,
    %c0_44 = arith.constant 0 : index
    %c0_45 = arith.constant 0 : index
    %72 = vector.load %arg15[%c0_44, %c0_45] : memref<2x32xf32, #tpu.memory_space<vmem>>, vector<2x32xf32>
    tpu.vector_store %arg15[%c0_44, %c0_45], %64 {strides = array<i32>} : memref<2x32xf32, #tpu.memory_space<vmem>>, vector<2x32xf32>,
    %c0_46 = arith.constant 0 : index
    %c0_47 = arith.constant 0 : index
    %73 = vector.load %arg12[%c0_46, %c0_47] : memref<2x32xf32, #tpu.memory_space<vmem>>, vector<2x32xf32>
    tpu.vector_store %arg12[%c0_46, %c0_47], %67 {strides = array<i32>} : memref<2x32xf32, #tpu.memory_space<vmem>>, vector<2x32xf32>,
    %c0_48 = arith.constant 0 : index
    %c0_49 = arith.constant 0 : index
    %74 = vector.load %arg13[%c0_48, %c0_49] : memref<2x32xf32, #tpu.memory_space<vmem>>, vector<2x32xf32>
    tpu.vector_store %arg13[%c0_48, %c0_49], %70 {strides = array<i32>} : memref<2x32xf32, #tpu.memory_space<vmem>>, vector<2x32xf32>,
    %75 = vector.shape_cast %67 : vector<2x32xf32> to vector<2x1x32xf32>
    %c0_50 = arith.constant 0 : index
    %c0_51 = arith.constant 0 : index
    %c0_52 = arith.constant 0 : index
    %76 = vector.load %arg10[%c0_50, %c0_51, %c0_52] : memref<2x8x32xf32, #tpu.memory_space<vmem>>, vector<2x1x32xf32>
    tpu.vector_store %arg10[%c0_50, %c0_51, %c0_52], %75 {strides = array<i32>} : memref<2x8x32xf32, #tpu.memory_space<vmem>>, vector<2x1x32xf32>,
    %77 = vector.shape_cast %70 : vector<2x32xf32> to vector<2x1x32xf32>
    %c0_53 = arith.constant 0 : index
    %c7_54 = arith.constant 7 : index
    %c0_55 = arith.constant 0 : index
    %78 = vector.load %arg11[%c0_53, %c7_54, %c0_55] : memref<2x8x32xf32, #tpu.memory_space<vmem>>, vector<2x1x32xf32>
    tpu.vector_store %arg11[%c0_53, %c7_54, %c0_55], %77 {strides = array<i32>} : memref<2x8x32xf32, #tpu.memory_space<vmem>>, vector<2x1x32xf32>,
    %c0_56 = arith.constant 0 : index
    %c0_57 = arith.constant 0 : index
    %79 = vector.load %arg12[%c0_56, %c0_57] : memref<2x32xf32, #tpu.memory_space<vmem>>, vector<2x32xf32>
    %80 = arith.truncf %79 : vector<2x32xf32> to vector<2x32xbf16>
    %cst_58 = arith.constant dense<0.000000e+00> : vector<2x128xf32>
    %81 = tpu.matmul %80, %23, %cst_58 {dimension_numbers = #tpu.dot_dimension_numbers<[1], [0], [0], [1], [0, 0, 1, 1], [], []>} : vector<2x32xbf16>, vector<32x128xbf16>, vector<2x128xf32> -> vector<2x128xf32>
    %c0_59 = arith.constant 0 : index
    %c0_60 = arith.constant 0 : index
    %82 = vector.load %arg13[%c0_59, %c0_60] : memref<2x32xf32, #tpu.memory_space<vmem>>, vector<2x32xf32>
    %83 = arith.truncf %82 : vector<2x32xf32> to vector<2x32xbf16>
    %cst_61 = arith.constant dense<0.000000e+00> : vector<2x128xf32>
    %84 = tpu.matmul %83, %24, %cst_61 {dimension_numbers = #tpu.dot_dimension_numbers<[1], [0], [0], [1], [0, 0, 1, 1], [], []>} : vector<2x32xbf16>, vector<32x128xbf16>, vector<2x128xf32> -> vector<2x128xf32>
    %c0_62 = arith.constant 0 : index
    %c1 = arith.constant 1 : index
    %c0_63 = arith.constant 0 : index
    %85 = vector.load %arg16[%c0_62, %c1, %c0_63] : memref<2x8x128xf32, #tpu.memory_space<vmem>>, vector<2x1x128xf32>
    %86 = vector.shape_cast %85 : vector<2x1x128xf32> to vector<2x128xf32>
    %87 = arith.addf %86, %81 : vector<2x128xf32>
    %c0_64 = arith.constant 0 : index
    %c6 = arith.constant 6 : index
    %c0_65 = arith.constant 0 : index
    %88 = vector.load %arg17[%c0_64, %c6, %c0_65] : memref<2x8x128xf32, #tpu.memory_space<vmem>>, vector<2x1x128xf32>
    %89 = vector.shape_cast %88 : vector<2x1x128xf32> to vector<2x128xf32>
    %90 = arith.addf %89, %84 : vector<2x128xf32>
    %91 = vector.extract_strided_slice %87 {offsets = [0, 0], sizes = [2, 96], strides = [1, 1]} : vector<2x128xf32> to vector<2x96xf32>
    %92 = arith.negf %91 : vector<2x96xf32>
    %93 = math.exp %92 : vector<2x96xf32>
    %cst_66 = arith.constant 1.000000e+00 : f32
    %94 = vector.broadcast %cst_66 : f32 to vector<2x96xf32>
    %95 = arith.addf %94, %93 : vector<2x96xf32>
    %96 = arith.divf %94, %95 : vector<2x96xf32>
    %97 = vector.extract_strided_slice %90 {offsets = [0, 0], sizes = [2, 96], strides = [1, 1]} : vector<2x128xf32> to vector<2x96xf32>
    %98 = arith.negf %97 : vector<2x96xf32>
    %99 = math.exp %98 : vector<2x96xf32>
    %cst_67 = arith.constant 1.000000e+00 : f32
    %100 = vector.broadcast %cst_67 : f32 to vector<2x96xf32>
    %101 = arith.addf %100, %99 : vector<2x96xf32>
    %102 = arith.divf %100, %101 : vector<2x96xf32>
    %103 = vector.extract_strided_slice %87 {offsets = [0, 96], sizes = [2, 32], strides = [1, 1]} : vector<2x128xf32> to vector<2x32xf32>
    %104 = math.tanh %103 : vector<2x32xf32>
    %105 = vector.extract_strided_slice %90 {offsets = [0, 96], sizes = [2, 32], strides = [1, 1]} : vector<2x128xf32> to vector<2x32xf32>
    %106 = math.tanh %105 : vector<2x32xf32>
    %107 = vector.extract_strided_slice %96 {offsets = [0, 32], sizes = [2, 32], strides = [1, 1]} : vector<2x96xf32> to vector<2x32xf32>
    %c0_68 = arith.constant 0 : index
    %c0_69 = arith.constant 0 : index
    %108 = vector.load %arg14[%c0_68, %c0_69] : memref<2x32xf32, #tpu.memory_space<vmem>>, vector<2x32xf32>
    %109 = arith.mulf %107, %108 : vector<2x32xf32>
    %110 = vector.extract_strided_slice %96 {offsets = [0, 0], sizes = [2, 32], strides = [1, 1]} : vector<2x96xf32> to vector<2x32xf32>
    %111 = arith.mulf %110, %104 : vector<2x32xf32>
    %112 = arith.addf %109, %111 : vector<2x32xf32>
    %113 = vector.extract_strided_slice %102 {offsets = [0, 32], sizes = [2, 32], strides = [1, 1]} : vector<2x96xf32> to vector<2x32xf32>
    %c0_70 = arith.constant 0 : index
    %c0_71 = arith.constant 0 : index
    %114 = vector.load %arg15[%c0_70, %c0_71] : memref<2x32xf32, #tpu.memory_space<vmem>>, vector<2x32xf32>
    %115 = arith.mulf %113, %114 : vector<2x32xf32>
    %116 = vector.extract_strided_slice %102 {offsets = [0, 0], sizes = [2, 32], strides = [1, 1]} : vector<2x96xf32> to vector<2x32xf32>
    %117 = arith.mulf %116, %106 : vector<2x32xf32>
    %118 = arith.addf %115, %117 : vector<2x32xf32>
    %119 = vector.extract_strided_slice %96 {offsets = [0, 64], sizes = [2, 32], strides = [1, 1]} : vector<2x96xf32> to vector<2x32xf32>
    %120 = math.tanh %112 : vector<2x32xf32>
    %121 = arith.mulf %119, %120 : vector<2x32xf32>
    %122 = vector.extract_strided_slice %102 {offsets = [0, 64], sizes = [2, 32], strides = [1, 1]} : vector<2x96xf32> to vector<2x32xf32>
    %123 = math.tanh %118 : vector<2x32xf32>
    %124 = arith.mulf %122, %123 : vector<2x32xf32>
    %c0_72 = arith.constant 0 : index
    %c0_73 = arith.constant 0 : index
    %125 = vector.load %arg14[%c0_72, %c0_73] : memref<2x32xf32, #tpu.memory_space<vmem>>, vector<2x32xf32>
    tpu.vector_store %arg14[%c0_72, %c0_73], %112 {strides = array<i32>} : memref<2x32xf32, #tpu.memory_space<vmem>>, vector<2x32xf32>,
    %c0_74 = arith.constant 0 : index
    %c0_75 = arith.constant 0 : index
    %126 = vector.load %arg15[%c0_74, %c0_75] : memref<2x32xf32, #tpu.memory_space<vmem>>, vector<2x32xf32>
    tpu.vector_store %arg15[%c0_74, %c0_75], %118 {strides = array<i32>} : memref<2x32xf32, #tpu.memory_space<vmem>>, vector<2x32xf32>,
    %c0_76 = arith.constant 0 : index
    %c0_77 = arith.constant 0 : index
    %127 = vector.load %arg12[%c0_76, %c0_77] : memref<2x32xf32, #tpu.memory_space<vmem>>, vector<2x32xf32>
    tpu.vector_store %arg12[%c0_76, %c0_77], %121 {strides = array<i32>} : memref<2x32xf32, #tpu.memory_space<vmem>>, vector<2x32xf32>,
    %c0_78 = arith.constant 0 : index
    %c0_79 = arith.constant 0 : index
    %128 = vector.load %arg13[%c0_78, %c0_79] : memref<2x32xf32, #tpu.memory_space<vmem>>, vector<2x32xf32>
    tpu.vector_store %arg13[%c0_78, %c0_79], %124 {strides = array<i32>} : memref<2x32xf32, #tpu.memory_space<vmem>>, vector<2x32xf32>,
    %129 = vector.shape_cast %121 : vector<2x32xf32> to vector<2x1x32xf32>
    %c0_80 = arith.constant 0 : index
    %c1_81 = arith.constant 1 : index
    %c0_82 = arith.constant 0 : index
    %130 = vector.load %arg10[%c0_80, %c1_81, %c0_82] : memref<2x8x32xf32, #tpu.memory_space<vmem>>, vector<2x1x32xf32>
    tpu.vector_store %arg10[%c0_80, %c1_81, %c0_82], %129 {strides = array<i32>} : memref<2x8x32xf32, #tpu.memory_space<vmem>>, vector<2x1x32xf32>,
    %131 = vector.shape_cast %124 : vector<2x32xf32> to vector<2x1x32xf32>
    %c0_83 = arith.constant 0 : index
    %c6_84 = arith.constant 6 : index
    %c0_85 = arith.constant 0 : index
    %132 = vector.load %arg11[%c0_83, %c6_84, %c0_85] : memref<2x8x32xf32, #tpu.memory_space<vmem>>, vector<2x1x32xf32>
    tpu.vector_store %arg11[%c0_83, %c6_84, %c0_85], %131 {strides = array<i32>} : memref<2x8x32xf32, #tpu.memory_space<vmem>>, vector<2x1x32xf32>,
    %c0_86 = arith.constant 0 : index
    %c0_87 = arith.constant 0 : index
    %133 = vector.load %arg12[%c0_86, %c0_87] : memref<2x32xf32, #tpu.memory_space<vmem>>, vector<2x32xf32>
    %134 = arith.truncf %133 : vector<2x32xf32> to vector<2x32xbf16>
    %cst_88 = arith.constant dense<0.000000e+00> : vector<2x128xf32>
    %135 = tpu.matmul %134, %23, %cst_88 {dimension_numbers = #tpu.dot_dimension_numbers<[1], [0], [0], [1], [0, 0, 1, 1], [], []>} : vector<2x32xbf16>, vector<32x128xbf16>, vector<2x128xf32> -> vector<2x128xf32>
    %c0_89 = arith.constant 0 : index
    %c0_90 = arith.constant 0 : index
    %136 = vector.load %arg13[%c0_89, %c0_90] : memref<2x32xf32, #tpu.memory_space<vmem>>, vector<2x32xf32>
    %137 = arith.truncf %136 : vector<2x32xf32> to vector<2x32xbf16>
    %cst_91 = arith.constant dense<0.000000e+00> : vector<2x128xf32>
    %138 = tpu.matmul %137, %24, %cst_91 {dimension_numbers = #tpu.dot_dimension_numbers<[1], [0], [0], [1], [0, 0, 1, 1], [], []>} : vector<2x32xbf16>, vector<32x128xbf16>, vector<2x128xf32> -> vector<2x128xf32>
    %c0_92 = arith.constant 0 : index
    %c2 = arith.constant 2 : index
    %c0_93 = arith.constant 0 : index
    %139 = vector.load %arg16[%c0_92, %c2, %c0_93] : memref<2x8x128xf32, #tpu.memory_space<vmem>>, vector<2x1x128xf32>
    %140 = vector.shape_cast %139 : vector<2x1x128xf32> to vector<2x128xf32>
    %141 = arith.addf %140, %135 : vector<2x128xf32>
    %c0_94 = arith.constant 0 : index
    %c5 = arith.constant 5 : index
    %c0_95 = arith.constant 0 : index
    %142 = vector.load %arg17[%c0_94, %c5, %c0_95] : memref<2x8x128xf32, #tpu.memory_space<vmem>>, vector<2x1x128xf32>
    %143 = vector.shape_cast %142 : vector<2x1x128xf32> to vector<2x128xf32>
    %144 = arith.addf %143, %138 : vector<2x128xf32>
    %145 = vector.extract_strided_slice %141 {offsets = [0, 0], sizes = [2, 96], strides = [1, 1]} : vector<2x128xf32> to vector<2x96xf32>
    %146 = arith.negf %145 : vector<2x96xf32>
    %147 = math.exp %146 : vector<2x96xf32>
    %cst_96 = arith.constant 1.000000e+00 : f32
    %148 = vector.broadcast %cst_96 : f32 to vector<2x96xf32>
    %149 = arith.addf %148, %147 : vector<2x96xf32>
    %150 = arith.divf %148, %149 : vector<2x96xf32>
    %151 = vector.extract_strided_slice %144 {offsets = [0, 0], sizes = [2, 96], strides = [1, 1]} : vector<2x128xf32> to vector<2x96xf32>
    %152 = arith.negf %151 : vector<2x96xf32>
    %153 = math.exp %152 : vector<2x96xf32>
    %cst_97 = arith.constant 1.000000e+00 : f32
    %154 = vector.broadcast %cst_97 : f32 to vector<2x96xf32>
    %155 = arith.addf %154, %153 : vector<2x96xf32>
    %156 = arith.divf %154, %155 : vector<2x96xf32>
    %157 = vector.extract_strided_slice %141 {offsets = [0, 96], sizes = [2, 32], strides = [1, 1]} : vector<2x128xf32> to vector<2x32xf32>
    %158 = math.tanh %157 : vector<2x32xf32>
    %159 = vector.extract_strided_slice %144 {offsets = [0, 96], sizes = [2, 32], strides = [1, 1]} : vector<2x128xf32> to vector<2x32xf32>
    %160 = math.tanh %159 : vector<2x32xf32>
    %161 = vector.extract_strided_slice %150 {offsets = [0, 32], sizes = [2, 32], strides = [1, 1]} : vector<2x96xf32> to vector<2x32xf32>
    %c0_98 = arith.constant 0 : index
    %c0_99 = arith.constant 0 : index
    %162 = vector.load %arg14[%c0_98, %c0_99] : memref<2x32xf32, #tpu.memory_space<vmem>>, vector<2x32xf32>
    %163 = arith.mulf %161, %162 : vector<2x32xf32>
    %164 = vector.extract_strided_slice %150 {offsets = [0, 0], sizes = [2, 32], strides = [1, 1]} : vector<2x96xf32> to vector<2x32xf32>
    %165 = arith.mulf %164, %158 : vector<2x32xf32>
    %166 = arith.addf %163, %165 : vector<2x32xf32>
    %167 = vector.extract_strided_slice %156 {offsets = [0, 32], sizes = [2, 32], strides = [1, 1]} : vector<2x96xf32> to vector<2x32xf32>
    %c0_100 = arith.constant 0 : index
    %c0_101 = arith.constant 0 : index
    %168 = vector.load %arg15[%c0_100, %c0_101] : memref<2x32xf32, #tpu.memory_space<vmem>>, vector<2x32xf32>
    %169 = arith.mulf %167, %168 : vector<2x32xf32>
    %170 = vector.extract_strided_slice %156 {offsets = [0, 0], sizes = [2, 32], strides = [1, 1]} : vector<2x96xf32> to vector<2x32xf32>
    %171 = arith.mulf %170, %160 : vector<2x32xf32>
    %172 = arith.addf %169, %171 : vector<2x32xf32>
    %173 = vector.extract_strided_slice %150 {offsets = [0, 64], sizes = [2, 32], strides = [1, 1]} : vector<2x96xf32> to vector<2x32xf32>
    %174 = math.tanh %166 : vector<2x32xf32>
    %175 = arith.mulf %173, %174 : vector<2x32xf32>
    %176 = vector.extract_strided_slice %156 {offsets = [0, 64], sizes = [2, 32], strides = [1, 1]} : vector<2x96xf32> to vector<2x32xf32>
    %177 = math.tanh %172 : vector<2x32xf32>
    %178 = arith.mulf %176, %177 : vector<2x32xf32>
    %c0_102 = arith.constant 0 : index
    %c0_103 = arith.constant 0 : index
    %179 = vector.load %arg14[%c0_102, %c0_103] : memref<2x32xf32, #tpu.memory_space<vmem>>, vector<2x32xf32>
    tpu.vector_store %arg14[%c0_102, %c0_103], %166 {strides = array<i32>} : memref<2x32xf32, #tpu.memory_space<vmem>>, vector<2x32xf32>,
    %c0_104 = arith.constant 0 : index
    %c0_105 = arith.constant 0 : index
    %180 = vector.load %arg15[%c0_104, %c0_105] : memref<2x32xf32, #tpu.memory_space<vmem>>, vector<2x32xf32>
    tpu.vector_store %arg15[%c0_104, %c0_105], %172 {strides = array<i32>} : memref<2x32xf32, #tpu.memory_space<vmem>>, vector<2x32xf32>,
    %c0_106 = arith.constant 0 : index
    %c0_107 = arith.constant 0 : index
    %181 = vector.load %arg12[%c0_106, %c0_107] : memref<2x32xf32, #tpu.memory_space<vmem>>, vector<2x32xf32>
    tpu.vector_store %arg12[%c0_106, %c0_107], %175 {strides = array<i32>} : memref<2x32xf32, #tpu.memory_space<vmem>>, vector<2x32xf32>,
    %c0_108 = arith.constant 0 : index
    %c0_109 = arith.constant 0 : index
    %182 = vector.load %arg13[%c0_108, %c0_109] : memref<2x32xf32, #tpu.memory_space<vmem>>, vector<2x32xf32>
    tpu.vector_store %arg13[%c0_108, %c0_109], %178 {strides = array<i32>} : memref<2x32xf32, #tpu.memory_space<vmem>>, vector<2x32xf32>,
    %183 = vector.shape_cast %175 : vector<2x32xf32> to vector<2x1x32xf32>
    %c0_110 = arith.constant 0 : index
    %c2_111 = arith.constant 2 : index
    %c0_112 = arith.constant 0 : index
    %184 = vector.load %arg10[%c0_110, %c2_111, %c0_112] : memref<2x8x32xf32, #tpu.memory_space<vmem>>, vector<2x1x32xf32>
    tpu.vector_store %arg10[%c0_110, %c2_111, %c0_112], %183 {strides = array<i32>} : memref<2x8x32xf32, #tpu.memory_space<vmem>>, vector<2x1x32xf32>,
    %185 = vector.shape_cast %178 : vector<2x32xf32> to vector<2x1x32xf32>
    %c0_113 = arith.constant 0 : index
    %c5_114 = arith.constant 5 : index
    %c0_115 = arith.constant 0 : index
    %186 = vector.load %arg11[%c0_113, %c5_114, %c0_115] : memref<2x8x32xf32, #tpu.memory_space<vmem>>, vector<2x1x32xf32>
    tpu.vector_store %arg11[%c0_113, %c5_114, %c0_115], %185 {strides = array<i32>} : memref<2x8x32xf32, #tpu.memory_space<vmem>>, vector<2x1x32xf32>,
    %c0_116 = arith.constant 0 : index
    %c0_117 = arith.constant 0 : index
    %187 = vector.load %arg12[%c0_116, %c0_117] : memref<2x32xf32, #tpu.memory_space<vmem>>, vector<2x32xf32>
    %188 = arith.truncf %187 : vector<2x32xf32> to vector<2x32xbf16>
    %cst_118 = arith.constant dense<0.000000e+00> : vector<2x128xf32>
    %189 = tpu.matmul %188, %23, %cst_118 {dimension_numbers = #tpu.dot_dimension_numbers<[1], [0], [0], [1], [0, 0, 1, 1], [], []>} : vector<2x32xbf16>, vector<32x128xbf16>, vector<2x128xf32> -> vector<2x128xf32>
    %c0_119 = arith.constant 0 : index
    %c0_120 = arith.constant 0 : index
    %190 = vector.load %arg13[%c0_119, %c0_120] : memref<2x32xf32, #tpu.memory_space<vmem>>, vector<2x32xf32>
    %191 = arith.truncf %190 : vector<2x32xf32> to vector<2x32xbf16>
    %cst_121 = arith.constant dense<0.000000e+00> : vector<2x128xf32>
    %192 = tpu.matmul %191, %24, %cst_121 {dimension_numbers = #tpu.dot_dimension_numbers<[1], [0], [0], [1], [0, 0, 1, 1], [], []>} : vector<2x32xbf16>, vector<32x128xbf16>, vector<2x128xf32> -> vector<2x128xf32>
    %c0_122 = arith.constant 0 : index
    %c3 = arith.constant 3 : index
    %c0_123 = arith.constant 0 : index
    %193 = vector.load %arg16[%c0_122, %c3, %c0_123] : memref<2x8x128xf32, #tpu.memory_space<vmem>>, vector<2x1x128xf32>
    %194 = vector.shape_cast %193 : vector<2x1x128xf32> to vector<2x128xf32>
    %195 = arith.addf %194, %189 : vector<2x128xf32>
    %c0_124 = arith.constant 0 : index
    %c4 = arith.constant 4 : index
    %c0_125 = arith.constant 0 : index
    %196 = vector.load %arg17[%c0_124, %c4, %c0_125] : memref<2x8x128xf32, #tpu.memory_space<vmem>>, vector<2x1x128xf32>
    %197 = vector.shape_cast %196 : vector<2x1x128xf32> to vector<2x128xf32>
    %198 = arith.addf %197, %192 : vector<2x128xf32>
    %199 = vector.extract_strided_slice %195 {offsets = [0, 0], sizes = [2, 96], strides = [1, 1]} : vector<2x128xf32> to vector<2x96xf32>
    %200 = arith.negf %199 : vector<2x96xf32>
    %201 = math.exp %200 : vector<2x96xf32>
    %cst_126 = arith.constant 1.000000e+00 : f32
    %202 = vector.broadcast %cst_126 : f32 to vector<2x96xf32>
    %203 = arith.addf %202, %201 : vector<2x96xf32>
    %204 = arith.divf %202, %203 : vector<2x96xf32>
    %205 = vector.extract_strided_slice %198 {offsets = [0, 0], sizes = [2, 96], strides = [1, 1]} : vector<2x128xf32> to vector<2x96xf32>
    %206 = arith.negf %205 : vector<2x96xf32>
    %207 = math.exp %206 : vector<2x96xf32>
    %cst_127 = arith.constant 1.000000e+00 : f32
    %208 = vector.broadcast %cst_127 : f32 to vector<2x96xf32>
    %209 = arith.addf %208, %207 : vector<2x96xf32>
    %210 = arith.divf %208, %209 : vector<2x96xf32>
    %211 = vector.extract_strided_slice %195 {offsets = [0, 96], sizes = [2, 32], strides = [1, 1]} : vector<2x128xf32> to vector<2x32xf32>
    %212 = math.tanh %211 : vector<2x32xf32>
    %213 = vector.extract_strided_slice %198 {offsets = [0, 96], sizes = [2, 32], strides = [1, 1]} : vector<2x128xf32> to vector<2x32xf32>
    %214 = math.tanh %213 : vector<2x32xf32>
    %215 = vector.extract_strided_slice %204 {offsets = [0, 32], sizes = [2, 32], strides = [1, 1]} : vector<2x96xf32> to vector<2x32xf32>
    %c0_128 = arith.constant 0 : index
    %c0_129 = arith.constant 0 : index
    %216 = vector.load %arg14[%c0_128, %c0_129] : memref<2x32xf32, #tpu.memory_space<vmem>>, vector<2x32xf32>
    %217 = arith.mulf %215, %216 : vector<2x32xf32>
    %218 = vector.extract_strided_slice %204 {offsets = [0, 0], sizes = [2, 32], strides = [1, 1]} : vector<2x96xf32> to vector<2x32xf32>
    %219 = arith.mulf %218, %212 : vector<2x32xf32>
    %220 = arith.addf %217, %219 : vector<2x32xf32>
    %221 = vector.extract_strided_slice %210 {offsets = [0, 32], sizes = [2, 32], strides = [1, 1]} : vector<2x96xf32> to vector<2x32xf32>
    %c0_130 = arith.constant 0 : index
    %c0_131 = arith.constant 0 : index
    %222 = vector.load %arg15[%c0_130, %c0_131] : memref<2x32xf32, #tpu.memory_space<vmem>>, vector<2x32xf32>
    %223 = arith.mulf %221, %222 : vector<2x32xf32>
    %224 = vector.extract_strided_slice %210 {offsets = [0, 0], sizes = [2, 32], strides = [1, 1]} : vector<2x96xf32> to vector<2x32xf32>
    %225 = arith.mulf %224, %214 : vector<2x32xf32>
    %226 = arith.addf %223, %225 : vector<2x32xf32>
    %227 = vector.extract_strided_slice %204 {offsets = [0, 64], sizes = [2, 32], strides = [1, 1]} : vector<2x96xf32> to vector<2x32xf32>
    %228 = math.tanh %220 : vector<2x32xf32>
    %229 = arith.mulf %227, %228 : vector<2x32xf32>
    %230 = vector.extract_strided_slice %210 {offsets = [0, 64], sizes = [2, 32], strides = [1, 1]} : vector<2x96xf32> to vector<2x32xf32>
    %231 = math.tanh %226 : vector<2x32xf32>
    %232 = arith.mulf %230, %231 : vector<2x32xf32>
    %c0_132 = arith.constant 0 : index
    %c0_133 = arith.constant 0 : index
    %233 = vector.load %arg14[%c0_132, %c0_133] : memref<2x32xf32, #tpu.memory_space<vmem>>, vector<2x32xf32>
    tpu.vector_store %arg14[%c0_132, %c0_133], %220 {strides = array<i32>} : memref<2x32xf32, #tpu.memory_space<vmem>>, vector<2x32xf32>,
    %c0_134 = arith.constant 0 : index
    %c0_135 = arith.constant 0 : index
    %234 = vector.load %arg15[%c0_134, %c0_135] : memref<2x32xf32, #tpu.memory_space<vmem>>, vector<2x32xf32>
    tpu.vector_store %arg15[%c0_134, %c0_135], %226 {strides = array<i32>} : memref<2x32xf32, #tpu.memory_space<vmem>>, vector<2x32xf32>,
    %c0_136 = arith.constant 0 : index
    %c0_137 = arith.constant 0 : index
    %235 = vector.load %arg12[%c0_136, %c0_137] : memref<2x32xf32, #tpu.memory_space<vmem>>, vector<2x32xf32>
    tpu.vector_store %arg12[%c0_136, %c0_137], %229 {strides = array<i32>} : memref<2x32xf32, #tpu.memory_space<vmem>>, vector<2x32xf32>,
    %c0_138 = arith.constant 0 : index
    %c0_139 = arith.constant 0 : index
    %236 = vector.load %arg13[%c0_138, %c0_139] : memref<2x32xf32, #tpu.memory_space<vmem>>, vector<2x32xf32>
    tpu.vector_store %arg13[%c0_138, %c0_139], %232 {strides = array<i32>} : memref<2x32xf32, #tpu.memory_space<vmem>>, vector<2x32xf32>,
    %237 = vector.shape_cast %229 : vector<2x32xf32> to vector<2x1x32xf32>
    %c0_140 = arith.constant 0 : index
    %c3_141 = arith.constant 3 : index
    %c0_142 = arith.constant 0 : index
    %238 = vector.load %arg10[%c0_140, %c3_141, %c0_142] : memref<2x8x32xf32, #tpu.memory_space<vmem>>, vector<2x1x32xf32>
    tpu.vector_store %arg10[%c0_140, %c3_141, %c0_142], %237 {strides = array<i32>} : memref<2x8x32xf32, #tpu.memory_space<vmem>>, vector<2x1x32xf32>,
    %239 = vector.shape_cast %232 : vector<2x32xf32> to vector<2x1x32xf32>
    %c0_143 = arith.constant 0 : index
    %c4_144 = arith.constant 4 : index
    %c0_145 = arith.constant 0 : index
    %240 = vector.load %arg11[%c0_143, %c4_144, %c0_145] : memref<2x8x32xf32, #tpu.memory_space<vmem>>, vector<2x1x32xf32>
    tpu.vector_store %arg11[%c0_143, %c4_144, %c0_145], %239 {strides = array<i32>} : memref<2x8x32xf32, #tpu.memory_space<vmem>>, vector<2x1x32xf32>,
    %c0_146 = arith.constant 0 : index
    %c0_147 = arith.constant 0 : index
    %241 = vector.load %arg12[%c0_146, %c0_147] : memref<2x32xf32, #tpu.memory_space<vmem>>, vector<2x32xf32>
    %242 = arith.truncf %241 : vector<2x32xf32> to vector<2x32xbf16>
    %cst_148 = arith.constant dense<0.000000e+00> : vector<2x128xf32>
    %243 = tpu.matmul %242, %23, %cst_148 {dimension_numbers = #tpu.dot_dimension_numbers<[1], [0], [0], [1], [0, 0, 1, 1], [], []>} : vector<2x32xbf16>, vector<32x128xbf16>, vector<2x128xf32> -> vector<2x128xf32>
    %c0_149 = arith.constant 0 : index
    %c0_150 = arith.constant 0 : index
    %244 = vector.load %arg13[%c0_149, %c0_150] : memref<2x32xf32, #tpu.memory_space<vmem>>, vector<2x32xf32>
    %245 = arith.truncf %244 : vector<2x32xf32> to vector<2x32xbf16>
    %cst_151 = arith.constant dense<0.000000e+00> : vector<2x128xf32>
    %246 = tpu.matmul %245, %24, %cst_151 {dimension_numbers = #tpu.dot_dimension_numbers<[1], [0], [0], [1], [0, 0, 1, 1], [], []>} : vector<2x32xbf16>, vector<32x128xbf16>, vector<2x128xf32> -> vector<2x128xf32>
    %c0_152 = arith.constant 0 : index
    %c4_153 = arith.constant 4 : index
    %c0_154 = arith.constant 0 : index
    %247 = vector.load %arg16[%c0_152, %c4_153, %c0_154] : memref<2x8x128xf32, #tpu.memory_space<vmem>>, vector<2x1x128xf32>
    %248 = vector.shape_cast %247 : vector<2x1x128xf32> to vector<2x128xf32>
    %249 = arith.addf %248, %243 : vector<2x128xf32>
    %c0_155 = arith.constant 0 : index
    %c3_156 = arith.constant 3 : index
    %c0_157 = arith.constant 0 : index
    %250 = vector.load %arg17[%c0_155, %c3_156, %c0_157] : memref<2x8x128xf32, #tpu.memory_space<vmem>>, vector<2x1x128xf32>
    %251 = vector.shape_cast %250 : vector<2x1x128xf32> to vector<2x128xf32>
    %252 = arith.addf %251, %246 : vector<2x128xf32>
    %253 = vector.extract_strided_slice %249 {offsets = [0, 0], sizes = [2, 96], strides = [1, 1]} : vector<2x128xf32> to vector<2x96xf32>
    %254 = arith.negf %253 : vector<2x96xf32>
    %255 = math.exp %254 : vector<2x96xf32>
    %cst_158 = arith.constant 1.000000e+00 : f32
    %256 = vector.broadcast %cst_158 : f32 to vector<2x96xf32>
    %257 = arith.addf %256, %255 : vector<2x96xf32>
    %258 = arith.divf %256, %257 : vector<2x96xf32>
    %259 = vector.extract_strided_slice %252 {offsets = [0, 0], sizes = [2, 96], strides = [1, 1]} : vector<2x128xf32> to vector<2x96xf32>
    %260 = arith.negf %259 : vector<2x96xf32>
    %261 = math.exp %260 : vector<2x96xf32>
    %cst_159 = arith.constant 1.000000e+00 : f32
    %262 = vector.broadcast %cst_159 : f32 to vector<2x96xf32>
    %263 = arith.addf %262, %261 : vector<2x96xf32>
    %264 = arith.divf %262, %263 : vector<2x96xf32>
    %265 = vector.extract_strided_slice %249 {offsets = [0, 96], sizes = [2, 32], strides = [1, 1]} : vector<2x128xf32> to vector<2x32xf32>
    %266 = math.tanh %265 : vector<2x32xf32>
    %267 = vector.extract_strided_slice %252 {offsets = [0, 96], sizes = [2, 32], strides = [1, 1]} : vector<2x128xf32> to vector<2x32xf32>
    %268 = math.tanh %267 : vector<2x32xf32>
    %269 = vector.extract_strided_slice %258 {offsets = [0, 32], sizes = [2, 32], strides = [1, 1]} : vector<2x96xf32> to vector<2x32xf32>
    %c0_160 = arith.constant 0 : index
    %c0_161 = arith.constant 0 : index
    %270 = vector.load %arg14[%c0_160, %c0_161] : memref<2x32xf32, #tpu.memory_space<vmem>>, vector<2x32xf32>
    %271 = arith.mulf %269, %270 : vector<2x32xf32>
    %272 = vector.extract_strided_slice %258 {offsets = [0, 0], sizes = [2, 32], strides = [1, 1]} : vector<2x96xf32> to vector<2x32xf32>
    %273 = arith.mulf %272, %266 : vector<2x32xf32>
    %274 = arith.addf %271, %273 : vector<2x32xf32>
    %275 = vector.extract_strided_slice %264 {offsets = [0, 32], sizes = [2, 32], strides = [1, 1]} : vector<2x96xf32> to vector<2x32xf32>
    %c0_162 = arith.constant 0 : index
    %c0_163 = arith.constant 0 : index
    %276 = vector.load %arg15[%c0_162, %c0_163] : memref<2x32xf32, #tpu.memory_space<vmem>>, vector<2x32xf32>
    %277 = arith.mulf %275, %276 : vector<2x32xf32>
    %278 = vector.extract_strided_slice %264 {offsets = [0, 0], sizes = [2, 32], strides = [1, 1]} : vector<2x96xf32> to vector<2x32xf32>
    %279 = arith.mulf %278, %268 : vector<2x32xf32>
    %280 = arith.addf %277, %279 : vector<2x32xf32>
    %281 = vector.extract_strided_slice %258 {offsets = [0, 64], sizes = [2, 32], strides = [1, 1]} : vector<2x96xf32> to vector<2x32xf32>
    %282 = math.tanh %274 : vector<2x32xf32>
    %283 = arith.mulf %281, %282 : vector<2x32xf32>
    %284 = vector.extract_strided_slice %264 {offsets = [0, 64], sizes = [2, 32], strides = [1, 1]} : vector<2x96xf32> to vector<2x32xf32>
    %285 = math.tanh %280 : vector<2x32xf32>
    %286 = arith.mulf %284, %285 : vector<2x32xf32>
    %c0_164 = arith.constant 0 : index
    %c0_165 = arith.constant 0 : index
    %287 = vector.load %arg14[%c0_164, %c0_165] : memref<2x32xf32, #tpu.memory_space<vmem>>, vector<2x32xf32>
    tpu.vector_store %arg14[%c0_164, %c0_165], %274 {strides = array<i32>} : memref<2x32xf32, #tpu.memory_space<vmem>>, vector<2x32xf32>,
    %c0_166 = arith.constant 0 : index
    %c0_167 = arith.constant 0 : index
    %288 = vector.load %arg15[%c0_166, %c0_167] : memref<2x32xf32, #tpu.memory_space<vmem>>, vector<2x32xf32>
    tpu.vector_store %arg15[%c0_166, %c0_167], %280 {strides = array<i32>} : memref<2x32xf32, #tpu.memory_space<vmem>>, vector<2x32xf32>,
    %c0_168 = arith.constant 0 : index
    %c0_169 = arith.constant 0 : index
    %289 = vector.load %arg12[%c0_168, %c0_169] : memref<2x32xf32, #tpu.memory_space<vmem>>, vector<2x32xf32>
    tpu.vector_store %arg12[%c0_168, %c0_169], %283 {strides = array<i32>} : memref<2x32xf32, #tpu.memory_space<vmem>>, vector<2x32xf32>,
    %c0_170 = arith.constant 0 : index
    %c0_171 = arith.constant 0 : index
    %290 = vector.load %arg13[%c0_170, %c0_171] : memref<2x32xf32, #tpu.memory_space<vmem>>, vector<2x32xf32>
    tpu.vector_store %arg13[%c0_170, %c0_171], %286 {strides = array<i32>} : memref<2x32xf32, #tpu.memory_space<vmem>>, vector<2x32xf32>,
    %291 = vector.shape_cast %283 : vector<2x32xf32> to vector<2x1x32xf32>
    %c0_172 = arith.constant 0 : index
    %c4_173 = arith.constant 4 : index
    %c0_174 = arith.constant 0 : index
    %292 = vector.load %arg10[%c0_172, %c4_173, %c0_174] : memref<2x8x32xf32, #tpu.memory_space<vmem>>, vector<2x1x32xf32>
    tpu.vector_store %arg10[%c0_172, %c4_173, %c0_174], %291 {strides = array<i32>} : memref<2x8x32xf32, #tpu.memory_space<vmem>>, vector<2x1x32xf32>,
    %293 = vector.shape_cast %286 : vector<2x32xf32> to vector<2x1x32xf32>
    %c0_175 = arith.constant 0 : index
    %c3_176 = arith.constant 3 : index
    %c0_177 = arith.constant 0 : index
    %294 = vector.load %arg11[%c0_175, %c3_176, %c0_177] : memref<2x8x32xf32, #tpu.memory_space<vmem>>, vector<2x1x32xf32>
    tpu.vector_store %arg11[%c0_175, %c3_176, %c0_177], %293 {strides = array<i32>} : memref<2x8x32xf32, #tpu.memory_space<vmem>>, vector<2x1x32xf32>,
    %c0_178 = arith.constant 0 : index
    %c0_179 = arith.constant 0 : index
    %295 = vector.load %arg12[%c0_178, %c0_179] : memref<2x32xf32, #tpu.memory_space<vmem>>, vector<2x32xf32>
    %296 = arith.truncf %295 : vector<2x32xf32> to vector<2x32xbf16>
    %cst_180 = arith.constant dense<0.000000e+00> : vector<2x128xf32>
    %297 = tpu.matmul %296, %23, %cst_180 {dimension_numbers = #tpu.dot_dimension_numbers<[1], [0], [0], [1], [0, 0, 1, 1], [], []>} : vector<2x32xbf16>, vector<32x128xbf16>, vector<2x128xf32> -> vector<2x128xf32>
    %c0_181 = arith.constant 0 : index
    %c0_182 = arith.constant 0 : index
    %298 = vector.load %arg13[%c0_181, %c0_182] : memref<2x32xf32, #tpu.memory_space<vmem>>, vector<2x32xf32>
    %299 = arith.truncf %298 : vector<2x32xf32> to vector<2x32xbf16>
    %cst_183 = arith.constant dense<0.000000e+00> : vector<2x128xf32>
    %300 = tpu.matmul %299, %24, %cst_183 {dimension_numbers = #tpu.dot_dimension_numbers<[1], [0], [0], [1], [0, 0, 1, 1], [], []>} : vector<2x32xbf16>, vector<32x128xbf16>, vector<2x128xf32> -> vector<2x128xf32>
    %c0_184 = arith.constant 0 : index
    %c5_185 = arith.constant 5 : index
    %c0_186 = arith.constant 0 : index
    %301 = vector.load %arg16[%c0_184, %c5_185, %c0_186] : memref<2x8x128xf32, #tpu.memory_space<vmem>>, vector<2x1x128xf32>
    %302 = vector.shape_cast %301 : vector<2x1x128xf32> to vector<2x128xf32>
    %303 = arith.addf %302, %297 : vector<2x128xf32>
    %c0_187 = arith.constant 0 : index
    %c2_188 = arith.constant 2 : index
    %c0_189 = arith.constant 0 : index
    %304 = vector.load %arg17[%c0_187, %c2_188, %c0_189] : memref<2x8x128xf32, #tpu.memory_space<vmem>>, vector<2x1x128xf32>
    %305 = vector.shape_cast %304 : vector<2x1x128xf32> to vector<2x128xf32>
    %306 = arith.addf %305, %300 : vector<2x128xf32>
    %307 = vector.extract_strided_slice %303 {offsets = [0, 0], sizes = [2, 96], strides = [1, 1]} : vector<2x128xf32> to vector<2x96xf32>
    %308 = arith.negf %307 : vector<2x96xf32>
    %309 = math.exp %308 : vector<2x96xf32>
    %cst_190 = arith.constant 1.000000e+00 : f32
    %310 = vector.broadcast %cst_190 : f32 to vector<2x96xf32>
    %311 = arith.addf %310, %309 : vector<2x96xf32>
    %312 = arith.divf %310, %311 : vector<2x96xf32>
    %313 = vector.extract_strided_slice %306 {offsets = [0, 0], sizes = [2, 96], strides = [1, 1]} : vector<2x128xf32> to vector<2x96xf32>
    %314 = arith.negf %313 : vector<2x96xf32>
    %315 = math.exp %314 : vector<2x96xf32>
    %cst_191 = arith.constant 1.000000e+00 : f32
    %316 = vector.broadcast %cst_191 : f32 to vector<2x96xf32>
    %317 = arith.addf %316, %315 : vector<2x96xf32>
    %318 = arith.divf %316, %317 : vector<2x96xf32>
    %319 = vector.extract_strided_slice %303 {offsets = [0, 96], sizes = [2, 32], strides = [1, 1]} : vector<2x128xf32> to vector<2x32xf32>
    %320 = math.tanh %319 : vector<2x32xf32>
    %321 = vector.extract_strided_slice %306 {offsets = [0, 96], sizes = [2, 32], strides = [1, 1]} : vector<2x128xf32> to vector<2x32xf32>
    %322 = math.tanh %321 : vector<2x32xf32>
    %323 = vector.extract_strided_slice %312 {offsets = [0, 32], sizes = [2, 32], strides = [1, 1]} : vector<2x96xf32> to vector<2x32xf32>
    %c0_192 = arith.constant 0 : index
    %c0_193 = arith.constant 0 : index
    %324 = vector.load %arg14[%c0_192, %c0_193] : memref<2x32xf32, #tpu.memory_space<vmem>>, vector<2x32xf32>
    %325 = arith.mulf %323, %324 : vector<2x32xf32>
    %326 = vector.extract_strided_slice %312 {offsets = [0, 0], sizes = [2, 32], strides = [1, 1]} : vector<2x96xf32> to vector<2x32xf32>
    %327 = arith.mulf %326, %320 : vector<2x32xf32>
    %328 = arith.addf %325, %327 : vector<2x32xf32>
    %329 = vector.extract_strided_slice %318 {offsets = [0, 32], sizes = [2, 32], strides = [1, 1]} : vector<2x96xf32> to vector<2x32xf32>
    %c0_194 = arith.constant 0 : index
    %c0_195 = arith.constant 0 : index
    %330 = vector.load %arg15[%c0_194, %c0_195] : memref<2x32xf32, #tpu.memory_space<vmem>>, vector<2x32xf32>
    %331 = arith.mulf %329, %330 : vector<2x32xf32>
    %332 = vector.extract_strided_slice %318 {offsets = [0, 0], sizes = [2, 32], strides = [1, 1]} : vector<2x96xf32> to vector<2x32xf32>
    %333 = arith.mulf %332, %322 : vector<2x32xf32>
    %334 = arith.addf %331, %333 : vector<2x32xf32>
    %335 = vector.extract_strided_slice %312 {offsets = [0, 64], sizes = [2, 32], strides = [1, 1]} : vector<2x96xf32> to vector<2x32xf32>
    %336 = math.tanh %328 : vector<2x32xf32>
    %337 = arith.mulf %335, %336 : vector<2x32xf32>
    %338 = vector.extract_strided_slice %318 {offsets = [0, 64], sizes = [2, 32], strides = [1, 1]} : vector<2x96xf32> to vector<2x32xf32>
    %339 = math.tanh %334 : vector<2x32xf32>
    %340 = arith.mulf %338, %339 : vector<2x32xf32>
    %c0_196 = arith.constant 0 : index
    %c0_197 = arith.constant 0 : index
    %341 = vector.load %arg14[%c0_196, %c0_197] : memref<2x32xf32, #tpu.memory_space<vmem>>, vector<2x32xf32>
    tpu.vector_store %arg14[%c0_196, %c0_197], %328 {strides = array<i32>} : memref<2x32xf32, #tpu.memory_space<vmem>>, vector<2x32xf32>,
    %c0_198 = arith.constant 0 : index
    %c0_199 = arith.constant 0 : index
    %342 = vector.load %arg15[%c0_198, %c0_199] : memref<2x32xf32, #tpu.memory_space<vmem>>, vector<2x32xf32>
    tpu.vector_store %arg15[%c0_198, %c0_199], %334 {strides = array<i32>} : memref<2x32xf32, #tpu.memory_space<vmem>>, vector<2x32xf32>,
    %c0_200 = arith.constant 0 : index
    %c0_201 = arith.constant 0 : index
    %343 = vector.load %arg12[%c0_200, %c0_201] : memref<2x32xf32, #tpu.memory_space<vmem>>, vector<2x32xf32>
    tpu.vector_store %arg12[%c0_200, %c0_201], %337 {strides = array<i32>} : memref<2x32xf32, #tpu.memory_space<vmem>>, vector<2x32xf32>,
    %c0_202 = arith.constant 0 : index
    %c0_203 = arith.constant 0 : index
    %344 = vector.load %arg13[%c0_202, %c0_203] : memref<2x32xf32, #tpu.memory_space<vmem>>, vector<2x32xf32>
    tpu.vector_store %arg13[%c0_202, %c0_203], %340 {strides = array<i32>} : memref<2x32xf32, #tpu.memory_space<vmem>>, vector<2x32xf32>,
    %345 = vector.shape_cast %337 : vector<2x32xf32> to vector<2x1x32xf32>
    %c0_204 = arith.constant 0 : index
    %c5_205 = arith.constant 5 : index
    %c0_206 = arith.constant 0 : index
    %346 = vector.load %arg10[%c0_204, %c5_205, %c0_206] : memref<2x8x32xf32, #tpu.memory_space<vmem>>, vector<2x1x32xf32>
    tpu.vector_store %arg10[%c0_204, %c5_205, %c0_206], %345 {strides = array<i32>} : memref<2x8x32xf32, #tpu.memory_space<vmem>>, vector<2x1x32xf32>,
    %347 = vector.shape_cast %340 : vector<2x32xf32> to vector<2x1x32xf32>
    %c0_207 = arith.constant 0 : index
    %c2_208 = arith.constant 2 : index
    %c0_209 = arith.constant 0 : index
    %348 = vector.load %arg11[%c0_207, %c2_208, %c0_209] : memref<2x8x32xf32, #tpu.memory_space<vmem>>, vector<2x1x32xf32>
    tpu.vector_store %arg11[%c0_207, %c2_208, %c0_209], %347 {strides = array<i32>} : memref<2x8x32xf32, #tpu.memory_space<vmem>>, vector<2x1x32xf32>,
    %c0_210 = arith.constant 0 : index
    %c0_211 = arith.constant 0 : index
    %349 = vector.load %arg12[%c0_210, %c0_211] : memref<2x32xf32, #tpu.memory_space<vmem>>, vector<2x32xf32>
    %350 = arith.truncf %349 : vector<2x32xf32> to vector<2x32xbf16>
    %cst_212 = arith.constant dense<0.000000e+00> : vector<2x128xf32>
    %351 = tpu.matmul %350, %23, %cst_212 {dimension_numbers = #tpu.dot_dimension_numbers<[1], [0], [0], [1], [0, 0, 1, 1], [], []>} : vector<2x32xbf16>, vector<32x128xbf16>, vector<2x128xf32> -> vector<2x128xf32>
    %c0_213 = arith.constant 0 : index
    %c0_214 = arith.constant 0 : index
    %352 = vector.load %arg13[%c0_213, %c0_214] : memref<2x32xf32, #tpu.memory_space<vmem>>, vector<2x32xf32>
    %353 = arith.truncf %352 : vector<2x32xf32> to vector<2x32xbf16>
    %cst_215 = arith.constant dense<0.000000e+00> : vector<2x128xf32>
    %354 = tpu.matmul %353, %24, %cst_215 {dimension_numbers = #tpu.dot_dimension_numbers<[1], [0], [0], [1], [0, 0, 1, 1], [], []>} : vector<2x32xbf16>, vector<32x128xbf16>, vector<2x128xf32> -> vector<2x128xf32>
    %c0_216 = arith.constant 0 : index
    %c6_217 = arith.constant 6 : index
    %c0_218 = arith.constant 0 : index
    %355 = vector.load %arg16[%c0_216, %c6_217, %c0_218] : memref<2x8x128xf32, #tpu.memory_space<vmem>>, vector<2x1x128xf32>
    %356 = vector.shape_cast %355 : vector<2x1x128xf32> to vector<2x128xf32>
    %357 = arith.addf %356, %351 : vector<2x128xf32>
    %c0_219 = arith.constant 0 : index
    %c1_220 = arith.constant 1 : index
    %c0_221 = arith.constant 0 : index
    %358 = vector.load %arg17[%c0_219, %c1_220, %c0_221] : memref<2x8x128xf32, #tpu.memory_space<vmem>>, vector<2x1x128xf32>
    %359 = vector.shape_cast %358 : vector<2x1x128xf32> to vector<2x128xf32>
    %360 = arith.addf %359, %354 : vector<2x128xf32>
    %361 = vector.extract_strided_slice %357 {offsets = [0, 0], sizes = [2, 96], strides = [1, 1]} : vector<2x128xf32> to vector<2x96xf32>
    %362 = arith.negf %361 : vector<2x96xf32>
    %363 = math.exp %362 : vector<2x96xf32>
    %cst_222 = arith.constant 1.000000e+00 : f32
    %364 = vector.broadcast %cst_222 : f32 to vector<2x96xf32>
    %365 = arith.addf %364, %363 : vector<2x96xf32>
    %366 = arith.divf %364, %365 : vector<2x96xf32>
    %367 = vector.extract_strided_slice %360 {offsets = [0, 0], sizes = [2, 96], strides = [1, 1]} : vector<2x128xf32> to vector<2x96xf32>
    %368 = arith.negf %367 : vector<2x96xf32>
    %369 = math.exp %368 : vector<2x96xf32>
    %cst_223 = arith.constant 1.000000e+00 : f32
    %370 = vector.broadcast %cst_223 : f32 to vector<2x96xf32>
    %371 = arith.addf %370, %369 : vector<2x96xf32>
    %372 = arith.divf %370, %371 : vector<2x96xf32>
    %373 = vector.extract_strided_slice %357 {offsets = [0, 96], sizes = [2, 32], strides = [1, 1]} : vector<2x128xf32> to vector<2x32xf32>
    %374 = math.tanh %373 : vector<2x32xf32>
    %375 = vector.extract_strided_slice %360 {offsets = [0, 96], sizes = [2, 32], strides = [1, 1]} : vector<2x128xf32> to vector<2x32xf32>
    %376 = math.tanh %375 : vector<2x32xf32>
    %377 = vector.extract_strided_slice %366 {offsets = [0, 32], sizes = [2, 32], strides = [1, 1]} : vector<2x96xf32> to vector<2x32xf32>
    %c0_224 = arith.constant 0 : index
    %c0_225 = arith.constant 0 : index
    %378 = vector.load %arg14[%c0_224, %c0_225] : memref<2x32xf32, #tpu.memory_space<vmem>>, vector<2x32xf32>
    %379 = arith.mulf %377, %378 : vector<2x32xf32>
    %380 = vector.extract_strided_slice %366 {offsets = [0, 0], sizes = [2, 32], strides = [1, 1]} : vector<2x96xf32> to vector<2x32xf32>
    %381 = arith.mulf %380, %374 : vector<2x32xf32>
    %382 = arith.addf %379, %381 : vector<2x32xf32>
    %383 = vector.extract_strided_slice %372 {offsets = [0, 32], sizes = [2, 32], strides = [1, 1]} : vector<2x96xf32> to vector<2x32xf32>
    %c0_226 = arith.constant 0 : index
    %c0_227 = arith.constant 0 : index
    %384 = vector.load %arg15[%c0_226, %c0_227] : memref<2x32xf32, #tpu.memory_space<vmem>>, vector<2x32xf32>
    %385 = arith.mulf %383, %384 : vector<2x32xf32>
    %386 = vector.extract_strided_slice %372 {offsets = [0, 0], sizes = [2, 32], strides = [1, 1]} : vector<2x96xf32> to vector<2x32xf32>
    %387 = arith.mulf %386, %376 : vector<2x32xf32>
    %388 = arith.addf %385, %387 : vector<2x32xf32>
    %389 = vector.extract_strided_slice %366 {offsets = [0, 64], sizes = [2, 32], strides = [1, 1]} : vector<2x96xf32> to vector<2x32xf32>
    %390 = math.tanh %382 : vector<2x32xf32>
    %391 = arith.mulf %389, %390 : vector<2x32xf32>
    %392 = vector.extract_strided_slice %372 {offsets = [0, 64], sizes = [2, 32], strides = [1, 1]} : vector<2x96xf32> to vector<2x32xf32>
    %393 = math.tanh %388 : vector<2x32xf32>
    %394 = arith.mulf %392, %393 : vector<2x32xf32>
    %c0_228 = arith.constant 0 : index
    %c0_229 = arith.constant 0 : index
    %395 = vector.load %arg14[%c0_228, %c0_229] : memref<2x32xf32, #tpu.memory_space<vmem>>, vector<2x32xf32>
    tpu.vector_store %arg14[%c0_228, %c0_229], %382 {strides = array<i32>} : memref<2x32xf32, #tpu.memory_space<vmem>>, vector<2x32xf32>,
    %c0_230 = arith.constant 0 : index
    %c0_231 = arith.constant 0 : index
    %396 = vector.load %arg15[%c0_230, %c0_231] : memref<2x32xf32, #tpu.memory_space<vmem>>, vector<2x32xf32>
    tpu.vector_store %arg15[%c0_230, %c0_231], %388 {strides = array<i32>} : memref<2x32xf32, #tpu.memory_space<vmem>>, vector<2x32xf32>,
    %c0_232 = arith.constant 0 : index
    %c0_233 = arith.constant 0 : index
    %397 = vector.load %arg12[%c0_232, %c0_233] : memref<2x32xf32, #tpu.memory_space<vmem>>, vector<2x32xf32>
    tpu.vector_store %arg12[%c0_232, %c0_233], %391 {strides = array<i32>} : memref<2x32xf32, #tpu.memory_space<vmem>>, vector<2x32xf32>,
    %c0_234 = arith.constant 0 : index
    %c0_235 = arith.constant 0 : index
    %398 = vector.load %arg13[%c0_234, %c0_235] : memref<2x32xf32, #tpu.memory_space<vmem>>, vector<2x32xf32>
    tpu.vector_store %arg13[%c0_234, %c0_235], %394 {strides = array<i32>} : memref<2x32xf32, #tpu.memory_space<vmem>>, vector<2x32xf32>,
    %399 = vector.shape_cast %391 : vector<2x32xf32> to vector<2x1x32xf32>
    %c0_236 = arith.constant 0 : index
    %c6_237 = arith.constant 6 : index
    %c0_238 = arith.constant 0 : index
    %400 = vector.load %arg10[%c0_236, %c6_237, %c0_238] : memref<2x8x32xf32, #tpu.memory_space<vmem>>, vector<2x1x32xf32>
    tpu.vector_store %arg10[%c0_236, %c6_237, %c0_238], %399 {strides = array<i32>} : memref<2x8x32xf32, #tpu.memory_space<vmem>>, vector<2x1x32xf32>,
    %401 = vector.shape_cast %394 : vector<2x32xf32> to vector<2x1x32xf32>
    %c0_239 = arith.constant 0 : index
    %c1_240 = arith.constant 1 : index
    %c0_241 = arith.constant 0 : index
    %402 = vector.load %arg11[%c0_239, %c1_240, %c0_241] : memref<2x8x32xf32, #tpu.memory_space<vmem>>, vector<2x1x32xf32>
    tpu.vector_store %arg11[%c0_239, %c1_240, %c0_241], %401 {strides = array<i32>} : memref<2x8x32xf32, #tpu.memory_space<vmem>>, vector<2x1x32xf32>,
    %c0_242 = arith.constant 0 : index
    %c0_243 = arith.constant 0 : index
    %403 = vector.load %arg12[%c0_242, %c0_243] : memref<2x32xf32, #tpu.memory_space<vmem>>, vector<2x32xf32>
    %404 = arith.truncf %403 : vector<2x32xf32> to vector<2x32xbf16>
    %cst_244 = arith.constant dense<0.000000e+00> : vector<2x128xf32>
    %405 = tpu.matmul %404, %23, %cst_244 {dimension_numbers = #tpu.dot_dimension_numbers<[1], [0], [0], [1], [0, 0, 1, 1], [], []>} : vector<2x32xbf16>, vector<32x128xbf16>, vector<2x128xf32> -> vector<2x128xf32>
    %c0_245 = arith.constant 0 : index
    %c0_246 = arith.constant 0 : index
    %406 = vector.load %arg13[%c0_245, %c0_246] : memref<2x32xf32, #tpu.memory_space<vmem>>, vector<2x32xf32>
    %407 = arith.truncf %406 : vector<2x32xf32> to vector<2x32xbf16>
    %cst_247 = arith.constant dense<0.000000e+00> : vector<2x128xf32>
    %408 = tpu.matmul %407, %24, %cst_247 {dimension_numbers = #tpu.dot_dimension_numbers<[1], [0], [0], [1], [0, 0, 1, 1], [], []>} : vector<2x32xbf16>, vector<32x128xbf16>, vector<2x128xf32> -> vector<2x128xf32>
    %c0_248 = arith.constant 0 : index
    %c7_249 = arith.constant 7 : index
    %c0_250 = arith.constant 0 : index
    %409 = vector.load %arg16[%c0_248, %c7_249, %c0_250] : memref<2x8x128xf32, #tpu.memory_space<vmem>>, vector<2x1x128xf32>
    %410 = vector.shape_cast %409 : vector<2x1x128xf32> to vector<2x128xf32>
    %411 = arith.addf %410, %405 : vector<2x128xf32>
    %c0_251 = arith.constant 0 : index
    %c0_252 = arith.constant 0 : index
    %c0_253 = arith.constant 0 : index
    %412 = vector.load %arg17[%c0_251, %c0_252, %c0_253] : memref<2x8x128xf32, #tpu.memory_space<vmem>>, vector<2x1x128xf32>
    %413 = vector.shape_cast %412 : vector<2x1x128xf32> to vector<2x128xf32>
    %414 = arith.addf %413, %408 : vector<2x128xf32>
    %415 = vector.extract_strided_slice %411 {offsets = [0, 0], sizes = [2, 96], strides = [1, 1]} : vector<2x128xf32> to vector<2x96xf32>
    %416 = arith.negf %415 : vector<2x96xf32>
    %417 = math.exp %416 : vector<2x96xf32>
    %cst_254 = arith.constant 1.000000e+00 : f32
    %418 = vector.broadcast %cst_254 : f32 to vector<2x96xf32>
    %419 = arith.addf %418, %417 : vector<2x96xf32>
    %420 = arith.divf %418, %419 : vector<2x96xf32>
    %421 = vector.extract_strided_slice %414 {offsets = [0, 0], sizes = [2, 96], strides = [1, 1]} : vector<2x128xf32> to vector<2x96xf32>
    %422 = arith.negf %421 : vector<2x96xf32>
    %423 = math.exp %422 : vector<2x96xf32>
    %cst_255 = arith.constant 1.000000e+00 : f32
    %424 = vector.broadcast %cst_255 : f32 to vector<2x96xf32>
    %425 = arith.addf %424, %423 : vector<2x96xf32>
    %426 = arith.divf %424, %425 : vector<2x96xf32>
    %427 = vector.extract_strided_slice %411 {offsets = [0, 96], sizes = [2, 32], strides = [1, 1]} : vector<2x128xf32> to vector<2x32xf32>
    %428 = math.tanh %427 : vector<2x32xf32>
    %429 = vector.extract_strided_slice %414 {offsets = [0, 96], sizes = [2, 32], strides = [1, 1]} : vector<2x128xf32> to vector<2x32xf32>
    %430 = math.tanh %429 : vector<2x32xf32>
    %431 = vector.extract_strided_slice %420 {offsets = [0, 32], sizes = [2, 32], strides = [1, 1]} : vector<2x96xf32> to vector<2x32xf32>
    %c0_256 = arith.constant 0 : index
    %c0_257 = arith.constant 0 : index
    %432 = vector.load %arg14[%c0_256, %c0_257] : memref<2x32xf32, #tpu.memory_space<vmem>>, vector<2x32xf32>
    %433 = arith.mulf %431, %432 : vector<2x32xf32>
    %434 = vector.extract_strided_slice %420 {offsets = [0, 0], sizes = [2, 32], strides = [1, 1]} : vector<2x96xf32> to vector<2x32xf32>
    %435 = arith.mulf %434, %428 : vector<2x32xf32>
    %436 = arith.addf %433, %435 : vector<2x32xf32>
    %437 = vector.extract_strided_slice %426 {offsets = [0, 32], sizes = [2, 32], strides = [1, 1]} : vector<2x96xf32> to vector<2x32xf32>
    %c0_258 = arith.constant 0 : index
    %c0_259 = arith.constant 0 : index
    %438 = vector.load %arg15[%c0_258, %c0_259] : memref<2x32xf32, #tpu.memory_space<vmem>>, vector<2x32xf32>
    %439 = arith.mulf %437, %438 : vector<2x32xf32>
    %440 = vector.extract_strided_slice %426 {offsets = [0, 0], sizes = [2, 32], strides = [1, 1]} : vector<2x96xf32> to vector<2x32xf32>
    %441 = arith.mulf %440, %430 : vector<2x32xf32>
    %442 = arith.addf %439, %441 : vector<2x32xf32>
    %443 = vector.extract_strided_slice %420 {offsets = [0, 64], sizes = [2, 32], strides = [1, 1]} : vector<2x96xf32> to vector<2x32xf32>
    %444 = math.tanh %436 : vector<2x32xf32>
    %445 = arith.mulf %443, %444 : vector<2x32xf32>
    %446 = vector.extract_strided_slice %426 {offsets = [0, 64], sizes = [2, 32], strides = [1, 1]} : vector<2x96xf32> to vector<2x32xf32>
    %447 = math.tanh %442 : vector<2x32xf32>
    %448 = arith.mulf %446, %447 : vector<2x32xf32>
    %c0_260 = arith.constant 0 : index
    %c0_261 = arith.constant 0 : index
    %449 = vector.load %arg14[%c0_260, %c0_261] : memref<2x32xf32, #tpu.memory_space<vmem>>, vector<2x32xf32>
    tpu.vector_store %arg14[%c0_260, %c0_261], %436 {strides = array<i32>} : memref<2x32xf32, #tpu.memory_space<vmem>>, vector<2x32xf32>,
    %c0_262 = arith.constant 0 : index
    %c0_263 = arith.constant 0 : index
    %450 = vector.load %arg15[%c0_262, %c0_263] : memref<2x32xf32, #tpu.memory_space<vmem>>, vector<2x32xf32>
    tpu.vector_store %arg15[%c0_262, %c0_263], %442 {strides = array<i32>} : memref<2x32xf32, #tpu.memory_space<vmem>>, vector<2x32xf32>,
    %c0_264 = arith.constant 0 : index
    %c0_265 = arith.constant 0 : index
    %451 = vector.load %arg12[%c0_264, %c0_265] : memref<2x32xf32, #tpu.memory_space<vmem>>, vector<2x32xf32>
    tpu.vector_store %arg12[%c0_264, %c0_265], %445 {strides = array<i32>} : memref<2x32xf32, #tpu.memory_space<vmem>>, vector<2x32xf32>,
    %c0_266 = arith.constant 0 : index
    %c0_267 = arith.constant 0 : index
    %452 = vector.load %arg13[%c0_266, %c0_267] : memref<2x32xf32, #tpu.memory_space<vmem>>, vector<2x32xf32>
    tpu.vector_store %arg13[%c0_266, %c0_267], %448 {strides = array<i32>} : memref<2x32xf32, #tpu.memory_space<vmem>>, vector<2x32xf32>,
    %453 = vector.shape_cast %445 : vector<2x32xf32> to vector<2x1x32xf32>
    %c0_268 = arith.constant 0 : index
    %c7_269 = arith.constant 7 : index
    %c0_270 = arith.constant 0 : index
    %454 = vector.load %arg10[%c0_268, %c7_269, %c0_270] : memref<2x8x32xf32, #tpu.memory_space<vmem>>, vector<2x1x32xf32>
    tpu.vector_store %arg10[%c0_268, %c7_269, %c0_270], %453 {strides = array<i32>} : memref<2x8x32xf32, #tpu.memory_space<vmem>>, vector<2x1x32xf32>,
    %455 = vector.shape_cast %448 : vector<2x32xf32> to vector<2x1x32xf32>
    %c0_271 = arith.constant 0 : index
    %c0_272 = arith.constant 0 : index
    %c0_273 = arith.constant 0 : index
    %456 = vector.load %arg11[%c0_271, %c0_272, %c0_273] : memref<2x8x32xf32, #tpu.memory_space<vmem>>, vector<2x1x32xf32>
    tpu.vector_store %arg11[%c0_271, %c0_272, %c0_273], %455 {strides = array<i32>} : memref<2x8x32xf32, #tpu.memory_space<vmem>>, vector<2x1x32xf32>,
    return
  }
  func.func @transform_0(%arg0: i32, %arg1: i32) -> (i32, i32, i32) {
    %c0_i32 = arith.constant 0 : i32
    %c0_i32_0 = arith.constant 0 : i32
    return %arg0, %arg1, %c0_i32 : i32, i32, i32
  }
  func.func @transform_1(%arg0: i32, %arg1: i32) -> (i32, i32, i32) {
    %c0_i32 = arith.constant 0 : i32
    %0 = arith.subi %c0_i32, %arg1 : i32
    %c0_i32_0 = arith.constant 0 : i32
    %c0_i32_1 = arith.constant 0 : i32
    return %arg0, %0, %c0_i32_0 : i32, i32, i32
  }
  func.func @transform_2(%arg0: i32, %arg1: i32) -> (i32, i32) {
    %c0_i32 = arith.constant 0 : i32
    %c0_i32_0 = arith.constant 0 : i32
    %c0_i32_1 = arith.constant 0 : i32
    return %c0_i32, %c0_i32_0 : i32, i32
  }
  func.func @transform_3(%arg0: i32, %arg1: i32) -> (i32, i32) {
    %c0_i32 = arith.constant 0 : i32
    %c0_i32_0 = arith.constant 0 : i32
    %c0_i32_1 = arith.constant 0 : i32
    return %c0_i32, %c0_i32_0 : i32, i32
  }
  func.func @transform_4(%arg0: i32, %arg1: i32) -> (i32, i32) {
    %c0_i32 = arith.constant 0 : i32
    %c0_i32_0 = arith.constant 0 : i32
    %c0_i32_1 = arith.constant 0 : i32
    return %c0_i32, %c0_i32_0 : i32, i32
  }
  func.func @transform_5(%arg0: i32, %arg1: i32) -> (i32, i32) {
    %c0_i32 = arith.constant 0 : i32
    %c0_i32_0 = arith.constant 0 : i32
    %c0_i32_1 = arith.constant 0 : i32
    return %c0_i32, %c0_i32_0 : i32, i32
  }
  func.func @transform_6(%arg0: i32, %arg1: i32) -> (i32, i32) {
    %c0_i32 = arith.constant 0 : i32
    %c0_i32_0 = arith.constant 0 : i32
    %c0_i32_1 = arith.constant 0 : i32
    return %c0_i32, %c0_i32_0 : i32, i32
  }
  func.func @transform_7(%arg0: i32, %arg1: i32) -> (i32, i32) {
    %c0_i32 = arith.constant 0 : i32
    %c0_i32_0 = arith.constant 0 : i32
    %c0_i32_1 = arith.constant 0 : i32
    return %c0_i32, %c0_i32_0 : i32, i32
  }
  func.func @transform_8(%arg0: i32, %arg1: i32) -> (i32, i32, i32) {
    %c0_i32 = arith.constant 0 : i32
    %c0_i32_0 = arith.constant 0 : i32
    return %arg0, %arg1, %c0_i32 : i32, i32, i32
  }
  func.func @transform_9(%arg0: i32, %arg1: i32) -> (i32, i32, i32) {
    %c0_i32 = arith.constant 0 : i32
    %0 = arith.subi %c0_i32, %arg1 : i32
    %c0_i32_0 = arith.constant 0 : i32
    %c0_i32_1 = arith.constant 0 : i32
    return %arg0, %0, %c0_i32_0 : i32, i32, i32
  }
}

</mosaic_0001>

<llo_original>
// kernel: composition_layer.1
$region0: #{composition_layer.1}
  #allocation0 [shape = 'u32[]', space=smem, size = 0x4, offset = 0x4, fixed_abs, tag = 'smem constant byte address 0x4 - core index']
  #allocation1 [shape = 'u32[72,128]{1,0:T(1,128)}', space=vmem, size = 0x9000, scoped, tag = 'internal scratch']
  #allocation2 [shape = 'f32[2,32]{1,0:T(2,128)}', space=vmem, size = 0x400, scoped, tag = 'scratch operand']
  #allocation3 [shape = 'f32[2,32]{1,0:T(2,128)}', space=vmem, size = 0x400, scoped, tag = 'scratch operand']
  #allocation4 [shape = 'f32[2,32]{1,0:T(2,128)}', space=vmem, size = 0x400, scoped, tag = 'scratch operand']
  #allocation5 [shape = 'f32[2,32]{1,0:T(2,128)}', space=vmem, size = 0x400, scoped, tag = 'scratch operand']
  #allocation6 [shape = 'f32[2,8,128]{2,1,0:T(8,128)}', space=vmem, size = 0x2000, scoped, tag = 'scratch operand']
  #allocation7 [shape = 'f32[2,8,128]{2,1,0:T(8,128)}', space=vmem, size = 0x2000, scoped, tag = 'scratch operand']
  %s0 = inlined_call_operand.hbm [shape: f32[2,8,16], index: 0, kind: input, shape index: {}, may-alias: {0,1}]
  %s1 = inlined_call_operand.hbm [shape: f32[2,8,16], index: 1, kind: input, shape index: {}, may-alias: {0,1}]
  %s2 = inlined_call_operand.hbm [shape: bf16[16,128], index: 2, kind: input, shape index: {}]
  %s3 = inlined_call_operand.hbm [shape: bf16[16,128], index: 3, kind: input, shape index: {}]
  %s4 = inlined_call_operand.vmem [shape: f32[1,128], index: 4, kind: input, shape index: {}]
  %s5 = inlined_call_operand.hbm [shape: f32[1,128], index: 5, kind: input, shape index: {}]
  %s6 = inlined_call_operand.hbm [shape: bf16[32,128], index: 6, kind: input, shape index: {}]
  %s7 = inlined_call_operand.hbm [shape: bf16[32,128], index: 7, kind: input, shape index: {}]
  %s8 = inlined_call_operand.vmem [shape: f32[2,8,32], index: 8, kind: output, shape index: {0}]
  %s9 = inlined_call_operand.vmem [shape: f32[2,8,32], index: 9, kind: output, shape index: {1}]
  %10 = xla_tuple %s8, %s9
  %s11 = sld [smem:[#allocation0]]
  $region82: #{composition_layer.1} parent=0
    _
  %s13 = ssub.s32 1, %s11
  %s14 = scalar_select 0, %s13, %s11
  $region1: #{composition_layer.1} parent=0
    #allocation8 [shape = 'u8[8192]{0}', space=vmem, size = 0x2000, scoped, tag = 'input window, operand 0, single buffered']
    #allocation9 [shape = 's32[1]{0}', space=sflag, size = 0x4, scoped, tag = 'scoped memory for composition_layer.1']
    #allocation10 [shape = 'u8[8192]{0}', space=vmem, size = 0x2000, scoped, tag = 'input window, operand 1, single buffered']
    #allocation11 [shape = 's32[1]{0}', space=sflag, size = 0x4, scoped, tag = 'scoped memory for composition_layer.1']
    #allocation12 [shape = 'u8[4096]{0}', space=vmem, size = 0x1000, scoped, tag = 'input window, operand 2, single buffered']
    #allocation13 [shape = 'u8[4096]{0}', space=vmem, size = 0x1000, scoped, tag = 'input window, operand 3, single buffered']
    #allocation14 [shape = 's32[1]{0}', space=sflag, size = 0x4, scoped, tag = 'scoped memory for composition_layer.1']
    #allocation15 [shape = 'u8[512]{0}', space=vmem, size = 0x400, scoped, tag = 'input window, operand 5, single buffered']
    #allocation16 [shape = 'u8[8192]{0}', space=vmem, size = 0x2000, scoped, tag = 'input window, operand 6, single buffered']
    #allocation17 [shape = 's32[1]{0}', space=sflag, size = 0x4, scoped, tag = 'scoped memory for composition_layer.1']
    #allocation18 [shape = 'u8[8192]{0}', space=vmem, size = 0x2000, scoped, tag = 'input window, operand 7, single buffered']
    %15 = vsyncpa [#allocation9], 0
    %16 = vsyncpa [#allocation11], 0
    %17 = vsyncpa [#allocation14], 0
    %18 = vsyncpa [#allocation17], 0
    // Predicated region
    $region2: #{composition_layer.1} parent=1 // pred_check
      _
    $region3: #{composition_layer.1} parent=1 // pred_check_branch
      %20 = sbr.rel (0) target = $region5
    $region4: #{composition_layer.1} parent=1 // pred_region
      %22 = vsyncadd [#allocation9], 0
      %s23 = sshll.u32 %s0, 4
      %s24 = int_to_ptr.hbm [resolvable:$true] %s23
      %s25 = sshll.u32 [#allocation8], 4
      %s26 = int_to_ptr.vmem [resolvable:$true] %s25
      %31 = dma.hbm_to_vmem [thread:$0]  %s24, 256, %s26, [#allocation9], 128, 128, 8
    $region5: #{composition_layer.1} parent=1 // pred_fallthru
      _
    // Predicated region
    $region6: #{composition_layer.1} parent=1 // pred_check
      _
    $region7: #{composition_layer.1} parent=1 // pred_check_branch
      %33 = sbr.rel (0) target = $region9
    $region8: #{composition_layer.1} parent=1 // pred_region
      %s34 = ssub.s32 0, 0
      %36 = vsyncadd [#allocation11], 0
      %s37 = smul.addr %s34, 8
      %s38 = scalar_lea.hbm %s1, %s37
      %s39 = sshll.u32 %s38, 4
      %s40 = int_to_ptr.hbm [resolvable:$true] %s39
      %s41 = sshll.u32 [#allocation10], 4
      %s42 = int_to_ptr.vmem [resolvable:$true] %s41
      %47 = dma.hbm_to_vmem [thread:$0]  %s40, 256, %s42, [#allocation11], 128, 128, 8
    $region9: #{composition_layer.1} parent=1 // pred_fallthru
      _
    // Predicated region
    $region10: #{composition_layer.1} parent=1 // pred_check
      _
    $region11: #{composition_layer.1} parent=1 // pred_check_branch
      %49 = sbr.rel (0) target = $region13
    $region12: #{composition_layer.1} parent=1 // pred_region
      %51 = vsyncadd [#allocation11], 0
      %s52 = sshll.u32 %s2, 4
      %s53 = int_to_ptr.hbm [resolvable:$true] %s52
      %s54 = sshll.u32 [#allocation12], 4
      %s55 = int_to_ptr.vmem [resolvable:$true] %s54
      %60 = dma.hbm_to_vmem [thread:$0]  %s53, 128, %s55, [#allocation11], 64, 64, 4
    $region13: #{composition_layer.1} parent=1 // pred_fallthru
      _
    // Predicated region
    $region14: #{composition_layer.1} parent=1 // pred_check
      _
    $region15: #{composition_layer.1} parent=1 // pred_check_branch
      %62 = sbr.rel (0) target = $region17
    $region16: #{composition_layer.1} parent=1 // pred_region
      %64 = vsyncadd [#allocation14], 0
      %s65 = sshll.u32 %s3, 4
      %s66 = int_to_ptr.hbm [resolvable:$true] %s65
      %s67 = sshll.u32 [#allocation13], 4
      %s68 = int_to_ptr.vmem [resolvable:$true] %s67
      %73 = dma.hbm_to_vmem [thread:$0]  %s66, 128, %s68, [#allocation14], 64, 64, 4
    $region17: #{composition_layer.1} parent=1 // pred_fallthru
      _
    // Predicated region
    $region18: #{composition_layer.1} parent=1 // pred_check
      _
    $region19: #{composition_layer.1} parent=1 // pred_check_branch
      %75 = sbr.rel (0) target = $region21
    $region20: #{composition_layer.1} parent=1 // pred_region
      _
    $region21: #{composition_layer.1} parent=1 // pred_fallthru
      _
    // Predicated region
    $region22: #{composition_layer.1} parent=1 // pred_check
      _
    $region23: #{composition_layer.1} parent=1 // pred_check_branch
      %77 = sbr.rel (0) target = $region25
    $region24: #{composition_layer.1} parent=1 // pred_region
      %79 = vsyncadd [#allocation14], 0
      %s81 = sshll.u32 %s5, 4
      %s82 = int_to_ptr.hbm [resolvable:$true] %s81
      %s83 = sshll.u32 [#allocation15], 4
      %s84 = int_to_ptr.vmem [resolvable:$true] %s83
      %86 = dma.hbm_to_vmem [thread:$0]  %s82, 16, %s84, [#allocation14]
    $region25: #{composition_layer.1} parent=1 // pred_fallthru
      _
    // Predicated region
    $region26: #{composition_layer.1} parent=1 // pred_check
      _
    $region27: #{composition_layer.1} parent=1 // pred_check_branch
      %88 = sbr.rel (0) target = $region29
    $region28: #{composition_layer.1} parent=1 // pred_region
      %90 = vsyncadd [#allocation17], 0
      %s91 = sshll.u32 %s6, 4
      %s92 = int_to_ptr.hbm [resolvable:$true] %s91
      %s93 = sshll.u32 [#allocation16], 4
      %s94 = int_to_ptr.vmem [resolvable:$true] %s93
      %99 = dma.hbm_to_vmem [thread:$0]  %s92, 256, %s94, [#allocation17], 64, 64, 4
    $region29: #{composition_layer.1} parent=1 // pred_fallthru
      _
    // Predicated region
    $region30: #{composition_layer.1} parent=1 // pred_check
      _
    $region31: #{composition_layer.1} parent=1 // pred_check_branch
      %101 = sbr.rel (0) target = $region33
    $region32: #{composition_layer.1} parent=1 // pred_region
      %103 = vsyncadd [#allocation17], 0
      %s104 = sshll.u32 %s7, 4
      %s105 = int_to_ptr.hbm [resolvable:$true] %s104
      %s106 = sshll.u32 [#allocation18], 4
      %s107 = int_to_ptr.vmem [resolvable:$true] %s106
      %112 = dma.hbm_to_vmem [thread:$0]  %s105, 256, %s107, [#allocation17], 64, 64, 4
    $region33: #{composition_layer.1} parent=1 // pred_fallthru
      _
    // Predicated region
    $region34: #{composition_layer.1} parent=1 // pred_check
      _
    $region35: #{composition_layer.1} parent=1 // pred_check_branch
      %114 = sbr.rel (0) target = $region37
    $region36: #{composition_layer.1} parent=1 // pred_region
      %116 = dma.done [#allocation9], 256
    $region37: #{composition_layer.1} parent=1 // pred_fallthru
      _
    // Predicated region
    $region38: #{composition_layer.1} parent=1 // pred_check
      _
    $region39: #{composition_layer.1} parent=1 // pred_check_branch
      %118 = sbr.rel (0) target = $region41
    $region40: #{composition_layer.1} parent=1 // pred_region
      %120 = dma.done [#allocation11], 256
    $region41: #{composition_layer.1} parent=1 // pred_fallthru
      _
    // Predicated region
    $region42: #{composition_layer.1} parent=1 // pred_check
      _
    $region43: #{composition_layer.1} parent=1 // pred_check_branch
      %122 = sbr.rel (0) target = $region45
    $region44: #{composition_layer.1} parent=1 // pred_region
      %124 = dma.done [#allocation11], 128
    $region45: #{composition_layer.1} parent=1 // pred_fallthru
      _
    // Predicated region
    $region46: #{composition_layer.1} parent=1 // pred_check
      _
    $region47: #{composition_layer.1} parent=1 // pred_check_branch
      %126 = sbr.rel (0) target = $region49
    $region48: #{composition_layer.1} parent=1 // pred_region
      %128 = dma.done [#allocation14], 128
    $region49: #{composition_layer.1} parent=1 // pred_fallthru
      _
    // Predicated region
    $region50: #{composition_layer.1} parent=1 // pred_check
      _
    $region51: #{composition_layer.1} parent=1 // pred_check_branch
      %130 = sbr.rel (0) target = $region53
    $region52: #{composition_layer.1} parent=1 // pred_region
      %132 = dma.done [#allocation14], 16
    $region53: #{composition_layer.1} parent=1 // pred_fallthru
      _
    // Predicated region
    $region54: #{composition_layer.1} parent=1 // pred_check
      _
    $region55: #{composition_layer.1} parent=1 // pred_check_branch
      %134 = sbr.rel (0) target = $region57
    $region56: #{composition_layer.1} parent=1 // pred_region
      %136 = dma.done [#allocation17], 256
    $region57: #{composition_layer.1} parent=1 // pred_fallthru
      _
    // Predicated region
    $region58: #{composition_layer.1} parent=1 // pred_check
      _
    $region59: #{composition_layer.1} parent=1 // pred_check_branch
      %138 = sbr.rel (0) target = $region61
    $region60: #{composition_layer.1} parent=1 // pred_region
      %140 = dma.done [#allocation17], 256
    $region61: #{composition_layer.1} parent=1 // pred_fallthru
      _
    %s141 = ssub.s32 0, 0
    %p142 = scmp.lt.s32.totalorder %s141, 0
    %s143 = scalar_select %p142, %s141, 0
    %s144 = smul.addr %s143, 8
    %s145 = scalar_lea.vmem %s9, %s144
    %s146 = ssub.s32 0, 0
    %s147 = ssub.s32 0, 0
    %p148 = scmp.lt.s32.totalorder %s147, 0
    %s149 = scalar_select %p148, %s147, 0
    %s150 = smul.addr %s149, 8
    %s151 = scalar_lea.vmem %s9, %s150
    %s152 = ssub.s32 0, 0
    %p154 = scmp.eq.s32.totalorder 0, 0
    // Predicated region
    $region62: #{composition_layer.1} parent=1 // pred_check
      %p155 = pneg %p154
    $region63: #{composition_layer.1} parent=1 // pred_check_branch
      %157 = sbr.rel (%p155) target = $region65
    $region64: #{composition_layer.1} parent=1 // pred_region
      %vm158 = vcmask 254976
      %159 = vst.msk [vmem:[#allocation2] sm:$0x3] %vm158, 0.0
      %160 = vst.msk [vmem:[#allocation3] sm:$0x3] %vm158, 0.0
      %161 = vst.msk [vmem:[#allocation4] sm:$0x3] %vm158, 0.0
      %162 = vst.msk [vmem:[#allocation5] sm:$0x3] %vm158, 0.0
    $region65: #{composition_layer.1} parent=1 // pred_fallthru
      _
    %v163 = vld [vmem:[#allocation8] sm:$0xff]
    %v164 = vld [vmem:[#allocation8 + $0x8] sm:$0xff]
    %v165 = vpack.c.bf16 %v164, %v163
    %v166 = vld [vmem:[#allocation10] sm:$0xff]
    %v167 = vld [vmem:[#allocation10 + $0x8] sm:$0xff]
    %v168 = vpack.c.bf16 %v167, %v166
    %v169 = vld [vmem:[#allocation12] sm:$0xf]
    %v170 = vld [vmem:[#allocation12 + $0x4] sm:$0xf]
    %v171 = vld [vmem:[%s4] sm:$0x1]
    %v173 = vperm.slane %v171, 0
    %v177 = vunpack.c.l.b16 %v169
    %v178 = vunpack.c.l.b16 %v170
    %v179 = vpack.c.b16 %v178, %v177
    %vm181 = vcmask 130048
    %v183 = vsel %vm181, %v165, 0
    %185 = vmatpush.bf16.msra.mxu0 0
    %186 = vmatpush.bf16.msra.mxu0 0
    %187 = vmatpush.bf16.msra.mxu0 0
    %188 = vmatpush.bf16.msra.mxu0 0
    %189 = vmatpush.bf16.msra.mxu0 0
    %190 = vmatpush.bf16.msra.mxu0 0
    %191 = vmatpush.bf16.msra.mxu0 0
    %192 = vmatpush.bf16.msra.mxu0 %v179
    %193 = vmatmul.bf16.gmra.mxu0 %v183
    %v194 = vpop.f32.mrf.mxu0
    %v195 = vadd.f32 %v173, %v194
    %v196 = vpop.f32.mrf.mxu0
    %v197 = vadd.f32 %v173, %v196
    %198 = vdwg.mxu0
    %199 = vst [vmem:[#allocation6] sm:$0xff] %v195
    %200 = vst [vmem:[#allocation6 + $0x8] sm:$0xff] %v197
    %v201 = vld [vmem:[#allocation13] sm:$0xf]
    %v202 = vld [vmem:[#allocation13 + $0x4] sm:$0xf]
    %v203 = vld [vmem:[#allocation15] sm:$0x1]
    %v205 = vperm.slane %v203, 0
    %v209 = vunpack.c.l.b16 %v201
    %v210 = vunpack.c.l.b16 %v202
    %v211 = vpack.c.b16 %v210, %v209
    %v214 = vsel %vm181, %v168, 0
    %216 = vmatpush.bf16.msra.mxu0 0
    %217 = vmatpush.bf16.msra.mxu0 0
    %218 = vmatpush.bf16.msra.mxu0 0
    %219 = vmatpush.bf16.msra.mxu0 0
    %220 = vmatpush.bf16.msra.mxu0 0
    %221 = vmatpush.bf16.msra.mxu0 0
    %222 = vmatpush.bf16.msra.mxu0 0
    %223 = vmatpush.bf16.msra.mxu0 %v211
    %224 = vmatmul.bf16.gmra.mxu0 %v214
    %v225 = vpop.f32.mrf.mxu0
    %v226 = vadd.f32 %v205, %v225
    %v227 = vpop.f32.mrf.mxu0
    %v228 = vadd.f32 %v205, %v227
    %229 = vdwg.mxu0
    %230 = vst [vmem:[#allocation7] sm:$0xff] %v226
    %231 = vst [vmem:[#allocation7 + $0x8] sm:$0xff] %v228
    %v232 = vld [vmem:[#allocation16] sm:$0xf]
    %v233 = vld [vmem:[#allocation16 + $0x4] sm:$0xf]
    %v234 = vld [vmem:[#allocation16 + $0x8] sm:$0xf]
    %v235 = vld [vmem:[#allocation16 + $0xc] sm:$0xf]
    %v236 = vld [vmem:[#allocation18] sm:$0xf]
    %v237 = vld [vmem:[#allocation18 + $0x4] sm:$0xf]
    %v238 = vld [vmem:[#allocation18 + $0x8] sm:$0xf]
    %v239 = vld [vmem:[#allocation18 + $0xc] sm:$0xf]
    %v240 = vld [vmem:[#allocation2] sm:$0x3]
    %v241 = vpack.c.bf16 %v240, %v240
    %v246 = vunpack.c.l.b16 %v232
    %v247 = vunpack.c.l.b16 %v233
    %v248 = vunpack.c.l.b16 %v234
    %v249 = vunpack.c.l.b16 %v235
    %v250 = vpack.c.b16 %v247, %v246
    %v251 = vpack.c.b16 %v249, %v248
    %vm254 = vcmask 261120
    %v256 = vsel %vm254, %v241, 0
    %258 = vmatpush.bf16.msra.mxu0 0
    %259 = vmatpush.bf16.msra.mxu0 0
    %260 = vmatpush.bf16.msra.mxu0 0
    %261 = vmatpush.bf16.msra.mxu0 0
    %262 = vmatpush.bf16.msra.mxu0 0
    %263 = vmatpush.bf16.msra.mxu0 0
    %264 = vmatpush.bf16.msra.mxu0 %v251
    %265 = vmatpush.bf16.msra.mxu0 %v250
    %266 = vmatmul.bf16.gmra.mxu0 %v256
    %v267 = vpop.f32.mrf.mxu0
    %v268 = vadd.f32 0.0, %v267
    %v269 = vpop.f32.mrf.mxu0
    %270 = vdwg.mxu0
    %v271 = vld [vmem:[#allocation3] sm:$0x3]
    %v272 = vpack.c.bf16 %v271, %v271
    %v277 = vunpack.c.l.b16 %v236
    %v278 = vunpack.c.l.b16 %v237
    %v279 = vunpack.c.l.b16 %v238
    %v280 = vunpack.c.l.b16 %v239
    %v281 = vpack.c.b16 %v278, %v277
    %v282 = vpack.c.b16 %v280, %v279
    %v286 = vsel %vm254, %v272, 0
    %288 = vmatpush.bf16.msra.mxu0 0
    %289 = vmatpush.bf16.msra.mxu0 0
    %290 = vmatpush.bf16.msra.mxu0 0
    %291 = vmatpush.bf16.msra.mxu0 0
    %292 = vmatpush.bf16.msra.mxu0 0
    %293 = vmatpush.bf16.msra.mxu0 0
    %294 = vmatpush.bf16.msra.mxu0 %v282
    %295 = vmatpush.bf16.msra.mxu0 %v281
    %296 = vmatmul.bf16.gmra.mxu0 %v286
    %v297 = vpop.f32.mrf.mxu0
    %v298 = vadd.f32 0.0, %v297
    %v299 = vpop.f32.mrf.mxu0
    %300 = vdwg.mxu0
    %v301 = vld [vmem:[#allocation6] sm:$0x1]
    %v302 = vld [vmem:[#allocation6 + $0x8] sm:$0x1]
    %v304 = vrot.slane %v268, 1
    %v307 = vadd.f32 %v301, %v268
    %v308 = vadd.f32 %v302, %v304
    %v309 = vld [vmem:[#allocation7 + $0x7] sm:$0x1]
    %v310 = vld [vmem:[#allocation7 + $0xf] sm:$0x1]
    %v312 = vrot.slane %v298, 1
    %v315 = vadd.f32 %v309, %v298
    %v316 = vadd.f32 %v310, %v312
    %v317 = vxor.u32 %v307, 2147483648
    %v318 = vxor.u32 %v308, 2147483648
    %v319 = vmul.f32 %v317, 1.442695
    %v320 = vpow.pop %v319
    %v321 = vmul.f32 %v318, 1.442695
    %v322 = vpow.pop %v321
    %v323 = vadd.f32 %v320, 1.0
    %v324 = vadd.f32 %v322, 1.0
    %v325 = vrcp.pop %v323
    %v326 = vmul.f32 %v323, %v325
    %v327 = vsub.f32 1.0, %v326
    %v328 = vmul.f32 %v325, %v327
    %v329 = vadd.f32 %v325, %v328
    %vm330 = vweird.f32 %v323
    %vm331 = vweird.f32 %v325
    %vm332 = vmor %vm330, %vm331
    %v333 = vsel %vm332, %v325, %v329
    %v334 = vand.u32 2147483647, %v323
    %vm335 = vcmp.eq.f32.partialorder %v334, 8.507059e+37
    %v336 = vand.u32 %v323, 2147483648
    %v337 = vor.u32 1.1754944e-38, %v336
    %v338 = vsel %vm335, %v337, %v333
    %v339 = vmul.f32 1.0, %v338
    %v340 = vrcp.pop %v324
    %v341 = vmul.f32 %v324, %v340
    %v342 = vsub.f32 1.0, %v341
    %v343 = vmul.f32 %v340, %v342
    %v344 = vadd.f32 %v340, %v343
    %vm345 = vweird.f32 %v324
    %vm346 = vweird.f32 %v340
    %vm347 = vmor %vm345, %vm346
    %v348 = vsel %vm347, %v340, %v344
    %v349 = vand.u32 2147483647, %v324
    %vm350 = vcmp.eq.f32.partialorder %v349, 8.507059e+37
    %v351 = vand.u32 %v324, 2147483648
    %v352 = vor.u32 1.1754944e-38, %v351
    %v353 = vsel %vm350, %v352, %v348
    %v354 = vmul.f32 1.0, %v353
    %v355 = vxor.u32 %v315, 2147483648
    %v356 = vxor.u32 %v316, 2147483648
    %v357 = vmul.f32 %v355, 1.442695
    %v358 = vpow.pop %v357
    %v359 = vmul.f32 %v356, 1.442695
    %v360 = vpow.pop %v359
    %v361 = vadd.f32 %v358, 1.0
    %v362 = vadd.f32 %v360, 1.0
    %v363 = vrcp.pop %v361
    %v364 = vmul.f32 %v361, %v363
    %v365 = vsub.f32 1.0, %v364
    %v366 = vmul.f32 %v363, %v365
    %v367 = vadd.f32 %v363, %v366
    %vm368 = vweird.f32 %v361
    %vm369 = vweird.f32 %v363
    %vm370 = vmor %vm368, %vm369
    %v371 = vsel %vm370, %v363, %v367
    %v372 = vand.u32 2147483647, %v361
    %vm373 = vcmp.eq.f32.partialorder %v372, 8.507059e+37
    %v374 = vand.u32 %v361, 2147483648
    %v375 = vor.u32 1.1754944e-38, %v374
    %v376 = vsel %vm373, %v375, %v371
    %v377 = vmul.f32 1.0, %v376
    %v378 = vrcp.pop %v362
    %v379 = vmul.f32 %v362, %v378
    %v380 = vsub.f32 1.0, %v379
    %v381 = vmul.f32 %v378, %v380
    %v382 = vadd.f32 %v378, %v381
    %vm383 = vweird.f32 %v362
    %vm384 = vweird.f32 %v378
    %vm385 = vmor %vm383, %vm384
    %v386 = vsel %vm385, %v378, %v382
    %v387 = vand.u32 2147483647, %v362
    %vm388 = vcmp.eq.f32.partialorder %v387, 8.507059e+37
    %v389 = vand.u32 %v362, 2147483648
    %v390 = vor.u32 1.1754944e-38, %v389
    %v391 = vsel %vm388, %v390, %v386
    %v392 = vmul.f32 1.0, %v391
    %v393 = vtanh.pop %v307
    %v394 = vtanh.pop %v308
    %v395 = vtanh.pop %v315
    %v396 = vtanh.pop %v316
    %v397 = vld [vmem:[#allocation4] sm:$0x3]
    %v399 = vrot.slane %v397, 1
    %400 = vrot.lane.b32.xlu0 %v397, 32
    %v401 = vpop.permute.xlu0 %400
    %402 = vrot.lane.b32.xlu0 %v399, 32
    %v403 = vpop.permute.xlu0 %402
    %v406 = vmul.f32 %v339, %v401
    %v407 = vmul.f32 %v354, %v403
    %410 = vrot.lane.b32.xlu0 %v393, 32
    %v411 = vpop.permute.xlu0 %410
    %412 = vrot.lane.b32.xlu0 %v394, 32
    %v413 = vpop.permute.xlu0 %412
    %v416 = vmul.f32 %v339, %v411
    %v417 = vmul.f32 %v354, %v413
    %420 = vrot.lane.b32.xlu0 %v416, 32
    %v421 = vpop.permute.xlu0 %420
    %422 = vrot.lane.b32.xlu0 %v417, 32
    %v423 = vpop.permute.xlu0 %422
    %v426 = vadd.f32 %v406, %v421
    %v427 = vadd.f32 %v407, %v423
    %v428 = vld [vmem:[#allocation5] sm:$0x3]
    %v430 = vrot.slane %v428, 1
    %431 = vrot.lane.b32.xlu0 %v428, 32
    %v432 = vpop.permute.xlu0 %431
    %433 = vrot.lane.b32.xlu0 %v430, 32
    %v434 = vpop.permute.xlu0 %433
    %v437 = vmul.f32 %v377, %v432
    %v438 = vmul.f32 %v392, %v434
    %441 = vrot.lane.b32.xlu0 %v395, 32
    %v442 = vpop.permute.xlu0 %441
    %443 = vrot.lane.b32.xlu0 %v396, 32
    %v444 = vpop.permute.xlu0 %443
    %v447 = vmul.f32 %v377, %v442
    %v448 = vmul.f32 %v392, %v444
    %451 = vrot.lane.b32.xlu0 %v447, 32
    %v452 = vpop.permute.xlu0 %451
    %453 = vrot.lane.b32.xlu0 %v448, 32
    %v454 = vpop.permute.xlu0 %453
    %v457 = vadd.f32 %v437, %v452
    %v458 = vadd.f32 %v438, %v454
    %v459 = vtanh.pop %v426
    %v460 = vtanh.pop %v427
    %463 = vrot.lane.b32.xlu0 %v459, 32
    %v464 = vpop.permute.xlu0 %463
    %465 = vrot.lane.b32.xlu0 %v460, 32
    %v466 = vpop.permute.xlu0 %465
    %v469 = vmul.f32 %v339, %v464
    %v470 = vmul.f32 %v354, %v466
    %v471 = vtanh.pop %v457
    %v472 = vtanh.pop %v458
    %475 = vrot.lane.b32.xlu0 %v471, 32
    %v476 = vpop.permute.xlu0 %475
    %477 = vrot.lane.b32.xlu0 %v472, 32
    %v478 = vpop.permute.xlu0 %477
    %v481 = vmul.f32 %v377, %v476
    %v482 = vmul.f32 %v392, %v478
    %v485 = vrot.slane %v427, 7
    %vm486 = vcmask 1041409
    %v487 = vsel %vm486, %v485, %v426
    %488 = vrot.lane.b32.xlu0 %v487, 96
    %v489 = vpop.permute.xlu0 %488
    %vm491 = vcmask 254976
    %492 = vst.msk [vmem:[#allocation4] sm:$0x3] %vm491, %v489
    %v495 = vrot.slane %v458, 7
    %v496 = vsel %vm486, %v495, %v457
    %497 = vrot.lane.b32.xlu0 %v496, 96
    %v498 = vpop.permute.xlu0 %497
    %500 = vst.msk [vmem:[#allocation5] sm:$0x3] %vm491, %v498
    %v503 = vrot.slane %v470, 7
    %v504 = vsel %vm486, %v503, %v469
    %505 = vrot.lane.b32.xlu0 %v504, 64
    %v506 = vpop.permute.xlu0 %505
    %508 = vst.msk [vmem:[#allocation2] sm:$0x3] %vm491, %v506
    %v511 = vrot.slane %v482, 7
    %v512 = vsel %vm486, %v511, %v481
    %513 = vrot.lane.b32.xlu0 %v512, 64
    %v514 = vpop.permute.xlu0 %513
    %516 = vst.msk [vmem:[#allocation3] sm:$0x3] %vm491, %v514
    %517 = vrot.lane.b32.xlu0 %v469, 64
    %v518 = vpop.permute.xlu0 %517
    %519 = vrot.lane.b32.xlu0 %v470, 64
    %v520 = vpop.permute.xlu0 %519
    %vm523 = vcmask 253952
    %524 = vst.msk [vmem:[%s8] sm:$0x1] %vm523, %v518
    %525 = vst.msk [vmem:[%s8 + $0x8] sm:$0x1] %vm523, %v520
    %526 = vrot.lane.b32.xlu0 %v481, 64
    %v527 = vpop.permute.xlu0 %526
    %528 = vrot.lane.b32.xlu0 %v482, 64
    %v529 = vpop.permute.xlu0 %528
    %532 = vst.msk [vmem:[%s151 + $0x7] sm:$0x1] %vm523, %v527
    %533 = vst.msk [vmem:[%s151 + $0xf] sm:$0x1] %vm523, %v529
    %v534 = vld [vmem:[#allocation2] sm:$0x3]
    %v535 = vpack.c.bf16 %v534, %v534
    %v537 = vsel %vm254, %v535, 0
    %539 = vmatpush.bf16.msra.mxu0 0
    %540 = vmatpush.bf16.msra.mxu0 0
    %541 = vmatpush.bf16.msra.mxu0 0
    %542 = vmatpush.bf16.msra.mxu0 0
    %543 = vmatpush.bf16.msra.mxu0 0
    %544 = vmatpush.bf16.msra.mxu0 0
    %545 = vmatpush.bf16.msra.mxu0 %v251
    %546 = vmatpush.bf16.msra.mxu0 %v250
    %547 = vmatmul.bf16.gmra.mxu0 %v537
    %v548 = vpop.f32.mrf.mxu0
    %v549 = vadd.f32 0.0, %v548
    %v550 = vpop.f32.mrf.mxu0
    %551 = vdwg.mxu0
    %v552 = vld [vmem:[#allocation3] sm:$0x3]
    %v553 = vpack.c.bf16 %v552, %v552
    %v555 = vsel %vm254, %v553, 0
    %557 = vmatpush.bf16.msra.mxu0 0
    %558 = vmatpush.bf16.msra.mxu0 0
    %559 = vmatpush.bf16.msra.mxu0 0
    %560 = vmatpush.bf16.msra.mxu0 0
    %561 = vmatpush.bf16.msra.mxu0 0
    %562 = vmatpush.bf16.msra.mxu0 0
    %563 = vmatpush.bf16.msra.mxu0 %v282
    %564 = vmatpush.bf16.msra.mxu0 %v281
    %565 = vmatmul.bf16.gmra.mxu0 %v555
    %v566 = vpop.f32.mrf.mxu0
    %v567 = vadd.f32 0.0, %v566
    %v568 = vpop.f32.mrf.mxu0
    %569 = vdwg.mxu0
    %v570 = vld [vmem:[#allocation6 + $0x1] sm:$0x1]
    %v571 = vld [vmem:[#allocation6 + $0x9] sm:$0x1]
    %v573 = vrot.slane %v549, 1
    %v576 = vadd.f32 %v570, %v549
    %v577 = vadd.f32 %v571, %v573
    %v578 = vld [vmem:[#allocation7 + $0x6] sm:$0x1]
    %v579 = vld [vmem:[#allocation7 + $0xe] sm:$0x1]
    %v581 = vrot.slane %v567, 1
    %v584 = vadd.f32 %v578, %v567
    %v585 = vadd.f32 %v579, %v581
    %v586 = vxor.u32 %v576, 2147483648
    %v587 = vxor.u32 %v577, 2147483648
    %v588 = vmul.f32 %v586, 1.442695
    %v589 = vpow.pop %v588
    %v590 = vmul.f32 %v587, 1.442695
    %v591 = vpow.pop %v590
    %v592 = vadd.f32 %v589, 1.0
    %v593 = vadd.f32 %v591, 1.0
    %v594 = vrcp.pop %v592
    %v595 = vmul.f32 %v592, %v594
    %v596 = vsub.f32 1.0, %v595
    %v597 = vmul.f32 %v594, %v596
    %v598 = vadd.f32 %v594, %v597
    %vm599 = vweird.f32 %v592
    %vm600 = vweird.f32 %v594
    %vm601 = vmor %vm599, %vm600
    %v602 = vsel %vm601, %v594, %v598
    %v603 = vand.u32 2147483647, %v592
    %vm604 = vcmp.eq.f32.partialorder %v603, 8.507059e+37
    %v605 = vand.u32 %v592, 2147483648
    %v606 = vor.u32 1.1754944e-38, %v605
    %v607 = vsel %vm604, %v606, %v602
    %v608 = vmul.f32 1.0, %v607
    %v609 = vrcp.pop %v593
    %v610 = vmul.f32 %v593, %v609
    %v611 = vsub.f32 1.0, %v610
    %v612 = vmul.f32 %v609, %v611
    %v613 = vadd.f32 %v609, %v612
    %vm614 = vweird.f32 %v593
    %vm615 = vweird.f32 %v609
    %vm616 = vmor %vm614, %vm615
    %v617 = vsel %vm616, %v609, %v613
    %v618 = vand.u32 2147483647, %v593
    %vm619 = vcmp.eq.f32.partialorder %v618, 8.507059e+37
    %v620 = vand.u32 %v593, 2147483648
    %v621 = vor.u32 1.1754944e-38, %v620
    %v622 = vsel %vm619, %v621, %v617
    %v623 = vmul.f32 1.0, %v622
    %v624 = vxor.u32 %v584, 2147483648
    %v625 = vxor.u32 %v585, 2147483648
    %v626 = vmul.f32 %v624, 1.442695
    %v627 = vpow.pop %v626
    %v628 = vmul.f32 %v625, 1.442695
    %v629 = vpow.pop %v628
    %v630 = vadd.f32 %v627, 1.0
    %v631 = vadd.f32 %v629, 1.0
    %v632 = vrcp.pop %v630
    %v633 = vmul.f32 %v630, %v632
    %v634 = vsub.f32 1.0, %v633
    %v635 = vmul.f32 %v632, %v634
    %v636 = vadd.f32 %v632, %v635
    %vm637 = vweird.f32 %v630
    %vm638 = vweird.f32 %v632
    %vm639 = vmor %vm637, %vm638
    %v640 = vsel %vm639, %v632, %v636
    %v641 = vand.u32 2147483647, %v630
    %vm642 = vcmp.eq.f32.partialorder %v641, 8.507059e+37
    %v643 = vand.u32 %v630, 2147483648
    %v644 = vor.u32 1.1754944e-38, %v643
    %v645 = vsel %vm642, %v644, %v640
    %v646 = vmul.f32 1.0, %v645
    %v647 = vrcp.pop %v631
    %v648 = vmul.f32 %v631, %v647
    %v649 = vsub.f32 1.0, %v648
    %v650 = vmul.f32 %v647, %v649
    %v651 = vadd.f32 %v647, %v650
    %vm652 = vweird.f32 %v631
    %vm653 = vweird.f32 %v647
    %vm654 = vmor %vm652, %vm653
    %v655 = vsel %vm654, %v647, %v651
    %v656 = vand.u32 2147483647, %v631
    %vm657 = vcmp.eq.f32.partialorder %v656, 8.507059e+37
    %v658 = vand.u32 %v631, 2147483648
    %v659 = vor.u32 1.1754944e-38, %v658
    %v660 = vsel %vm657, %v659, %v655
    %v661 = vmul.f32 1.0, %v660
    %v662 = vtanh.pop %v576
    %v663 = vtanh.pop %v577
    %v664 = vtanh.pop %v584
    %v665 = vtanh.pop %v585
    %v666 = vld [vmem:[#allocation4] sm:$0x3]
    %v668 = vrot.slane %v666, 1
    %669 = vrot.lane.b32.xlu0 %v666, 32
    %v670 = vpop.permute.xlu0 %669
    %671 = vrot.lane.b32.xlu0 %v668, 32
    %v672 = vpop.permute.xlu0 %671
    %v675 = vmul.f32 %v608, %v670
    %v676 = vmul.f32 %v623, %v672
    %679 = vrot.lane.b32.xlu0 %v662, 32
    %v680 = vpop.permute.xlu0 %679
    %681 = vrot.lane.b32.xlu0 %v663, 32
    %v682 = vpop.permute.xlu0 %681
    %v685 = vmul.f32 %v608, %v680
    %v686 = vmul.f32 %v623, %v682
    %689 = vrot.lane.b32.xlu0 %v685, 32
    %v690 = vpop.permute.xlu0 %689
    %691 = vrot.lane.b32.xlu0 %v686, 32
    %v692 = vpop.permute.xlu0 %691
    %v695 = vadd.f32 %v675, %v690
    %v696 = vadd.f32 %v676, %v692
    %v697 = vld [vmem:[#allocation5] sm:$0x3]
    %v699 = vrot.slane %v697, 1
    %700 = vrot.lane.b32.xlu0 %v697, 32
    %v701 = vpop.permute.xlu0 %700
    %702 = vrot.lane.b32.xlu0 %v699, 32
    %v703 = vpop.permute.xlu0 %702
    %v706 = vmul.f32 %v646, %v701
    %v707 = vmul.f32 %v661, %v703
    %710 = vrot.lane.b32.xlu0 %v664, 32
    %v711 = vpop.permute.xlu0 %710
    %712 = vrot.lane.b32.xlu0 %v665, 32
    %v713 = vpop.permute.xlu0 %712
    %v716 = vmul.f32 %v646, %v711
    %v717 = vmul.f32 %v661, %v713
    %720 = vrot.lane.b32.xlu0 %v716, 32
    %v721 = vpop.permute.xlu0 %720
    %722 = vrot.lane.b32.xlu0 %v717, 32
    %v723 = vpop.permute.xlu0 %722
    %v726 = vadd.f32 %v706, %v721
    %v727 = vadd.f32 %v707, %v723
    %v728 = vtanh.pop %v695
    %v729 = vtanh.pop %v696
    %732 = vrot.lane.b32.xlu0 %v728, 32
    %v733 = vpop.permute.xlu0 %732
    %734 = vrot.lane.b32.xlu0 %v729, 32
    %v735 = vpop.permute.xlu0 %734
    %v738 = vmul.f32 %v608, %v733
    %v739 = vmul.f32 %v623, %v735
    %v740 = vtanh.pop %v726
    %v741 = vtanh.pop %v727
    %744 = vrot.lane.b32.xlu0 %v740, 32
    %v745 = vpop.permute.xlu0 %744
    %746 = vrot.lane.b32.xlu0 %v741, 32
    %v747 = vpop.permute.xlu0 %746
    %v750 = vmul.f32 %v646, %v745
    %v751 = vmul.f32 %v661, %v747
    %v754 = vrot.slane %v696, 7
    %v755 = vsel %vm486, %v754, %v695
    %756 = vrot.lane.b32.xlu0 %v755, 96
    %v757 = vpop.permute.xlu0 %756
    %759 = vst.msk [vmem:[#allocation4] sm:$0x3] %vm491, %v757
    %v762 = vrot.slane %v727, 7
    %v763 = vsel %vm486, %v762, %v726
    %764 = vrot.lane.b32.xlu0 %v763, 96
    %v765 = vpop.permute.xlu0 %764
    %767 = vst.msk [vmem:[#allocation5] sm:$0x3] %vm491, %v765
    %v770 = vrot.slane %v739, 7
    %v771 = vsel %vm486, %v770, %v738
    %772 = vrot.lane.b32.xlu0 %v771, 64
    %v773 = vpop.permute.xlu0 %772
    %775 = vst.msk [vmem:[#allocation2] sm:$0x3] %vm491, %v773
    %v778 = vrot.slane %v751, 7
    %v779 = vsel %vm486, %v778, %v750
    %780 = vrot.lane.b32.xlu0 %v779, 64
    %v781 = vpop.permute.xlu0 %780
    %783 = vst.msk [vmem:[#allocation3] sm:$0x3] %vm491, %v781
    %784 = vrot.lane.b32.xlu0 %v738, 64
    %v785 = vpop.permute.xlu0 %784
    %786 = vrot.lane.b32.xlu0 %v739, 64
    %v787 = vpop.permute.xlu0 %786
    %790 = vst.msk [vmem:[%s8 + $0x1] sm:$0x1] %vm523, %v785
    %791 = vst.msk [vmem:[%s8 + $0x9] sm:$0x1] %vm523, %v787
    %792 = vrot.lane.b32.xlu0 %v750, 64
    %v793 = vpop.permute.xlu0 %792
    %794 = vrot.lane.b32.xlu0 %v751, 64
    %v795 = vpop.permute.xlu0 %794
    %798 = vst.msk [vmem:[%s151 + $0x6] sm:$0x1] %vm523, %v793
    %799 = vst.msk [vmem:[%s151 + $0xe] sm:$0x1] %vm523, %v795
    %v800 = vld [vmem:[#allocation2] sm:$0x3]
    %v801 = vpack.c.bf16 %v800, %v800
    %v803 = vsel %vm254, %v801, 0
    %805 = vmatpush.bf16.msra.mxu0 0
    %806 = vmatpush.bf16.msra.mxu0 0
    %807 = vmatpush.bf16.msra.mxu0 0
    %808 = vmatpush.bf16.msra.mxu0 0
    %809 = vmatpush.bf16.msra.mxu0 0
    %810 = vmatpush.bf16.msra.mxu0 0
    %811 = vmatpush.bf16.msra.mxu0 %v251
    %812 = vmatpush.bf16.msra.mxu0 %v250
    %813 = vmatmul.bf16.gmra.mxu0 %v803
    %v814 = vpop.f32.mrf.mxu0
    %v815 = vadd.f32 0.0, %v814
    %v816 = vpop.f32.mrf.mxu0
    %817 = vdwg.mxu0
    %v818 = vld [vmem:[#allocation3] sm:$0x3]
    %v819 = vpack.c.bf16 %v818, %v818
    %v821 = vsel %vm254, %v819, 0
    %823 = vmatpush.bf16.msra.mxu0 0
    %824 = vmatpush.bf16.msra.mxu0 0
    %825 = vmatpush.bf16.msra.mxu0 0
    %826 = vmatpush.bf16.msra.mxu0 0
    %827 = vmatpush.bf16.msra.mxu0 0
    %828 = vmatpush.bf16.msra.mxu0 0
    %829 = vmatpush.bf16.msra.mxu0 %v282
    %830 = vmatpush.bf16.msra.mxu0 %v281
    %831 = vmatmul.bf16.gmra.mxu0 %v821
    %v832 = vpop.f32.mrf.mxu0
    %v833 = vadd.f32 0.0, %v832
    %v834 = vpop.f32.mrf.mxu0
    %835 = vdwg.mxu0
    %v836 = vld [vmem:[#allocation6 + $0x2] sm:$0x1]
    %v837 = vld [vmem:[#allocation6 + $0xa] sm:$0x1]
    %v839 = vrot.slane %v815, 1
    %v842 = vadd.f32 %v836, %v815
    %v843 = vadd.f32 %v837, %v839
    %v844 = vld [vmem:[#allocation7 + $0x5] sm:$0x1]
    %v845 = vld [vmem:[#allocation7 + $0xd] sm:$0x1]
    %v847 = vrot.slane %v833, 1
    %v850 = vadd.f32 %v844, %v833
    %v851 = vadd.f32 %v845, %v847
    %v852 = vxor.u32 %v842, 2147483648
    %v853 = vxor.u32 %v843, 2147483648
    %v854 = vmul.f32 %v852, 1.442695
    %v855 = vpow.pop %v854
    %v856 = vmul.f32 %v853, 1.442695
    %v857 = vpow.pop %v856
    %v858 = vadd.f32 %v855, 1.0
    %v859 = vadd.f32 %v857, 1.0
    %v860 = vrcp.pop %v858
    %v861 = vmul.f32 %v858, %v860
    %v862 = vsub.f32 1.0, %v861
    %v863 = vmul.f32 %v860, %v862
    %v864 = vadd.f32 %v860, %v863
    %vm865 = vweird.f32 %v858
    %vm866 = vweird.f32 %v860
    %vm867 = vmor %vm865, %vm866
    %v868 = vsel %vm867, %v860, %v864
    %v869 = vand.u32 2147483647, %v858
    %vm870 = vcmp.eq.f32.partialorder %v869, 8.507059e+37
    %v871 = vand.u32 %v858, 2147483648
    %v872 = vor.u32 1.1754944e-38, %v871
    %v873 = vsel %vm870, %v872, %v868
    %v874 = vmul.f32 1.0, %v873
    %v875 = vrcp.pop %v859
    %v876 = vmul.f32 %v859, %v875
    %v877 = vsub.f32 1.0, %v876
    %v878 = vmul.f32 %v875, %v877
    %v879 = vadd.f32 %v875, %v878
    %vm880 = vweird.f32 %v859
    %vm881 = vweird.f32 %v875
    %vm882 = vmor %vm880, %vm881
    %v883 = vsel %vm882, %v875, %v879
    %v884 = vand.u32 2147483647, %v859
    %vm885 = vcmp.eq.f32.partialorder %v884, 8.507059e+37
    %v886 = vand.u32 %v859, 2147483648
    %v887 = vor.u32 1.1754944e-38, %v886
    %v888 = vsel %vm885, %v887, %v883
    %v889 = vmul.f32 1.0, %v888
    %v890 = vxor.u32 %v850, 2147483648
    %v891 = vxor.u32 %v851, 2147483648
    %v892 = vmul.f32 %v890, 1.442695
    %v893 = vpow.pop %v892
    %v894 = vmul.f32 %v891, 1.442695
    %v895 = vpow.pop %v894
    %v896 = vadd.f32 %v893, 1.0
    %v897 = vadd.f32 %v895, 1.0
    %v898 = vrcp.pop %v896
    %v899 = vmul.f32 %v896, %v898
    %v900 = vsub.f32 1.0, %v899
    %v901 = vmul.f32 %v898, %v900
    %v902 = vadd.f32 %v898, %v901
    %vm903 = vweird.f32 %v896
    %vm904 = vweird.f32 %v898
    %vm905 = vmor %vm903, %vm904
    %v906 = vsel %vm905, %v898, %v902
    %v907 = vand.u32 2147483647, %v896
    %vm908 = vcmp.eq.f32.partialorder %v907, 8.507059e+37
    %v909 = vand.u32 %v896, 2147483648
    %v910 = vor.u32 1.1754944e-38, %v909
    %v911 = vsel %vm908, %v910, %v906
    %v912 = vmul.f32 1.0, %v911
    %v913 = vrcp.pop %v897
    %v914 = vmul.f32 %v897, %v913
    %v915 = vsub.f32 1.0, %v914
    %v916 = vmul.f32 %v913, %v915
    %v917 = vadd.f32 %v913, %v916
    %vm918 = vweird.f32 %v897
    %vm919 = vweird.f32 %v913
    %vm920 = vmor %vm918, %vm919
    %v921 = vsel %vm920, %v913, %v917
    %v922 = vand.u32 2147483647, %v897
    %vm923 = vcmp.eq.f32.partialorder %v922, 8.507059e+37
    %v924 = vand.u32 %v897, 2147483648
    %v925 = vor.u32 1.1754944e-38, %v924
    %v926 = vsel %vm923, %v925, %v921
    %v927 = vmul.f32 1.0, %v926
    %v928 = vtanh.pop %v842
    %v929 = vtanh.pop %v843
    %v930 = vtanh.pop %v850
    %v931 = vtanh.pop %v851
    %v932 = vld [vmem:[#allocation4] sm:$0x3]
    %v934 = vrot.slane %v932, 1
    %935 = vrot.lane.b32.xlu0 %v932, 32
    %v936 = vpop.permute.xlu0 %935
    %937 = vrot.lane.b32.xlu0 %v934, 32
    %v938 = vpop.permute.xlu0 %937
    %v941 = vmul.f32 %v874, %v936
    %v942 = vmul.f32 %v889, %v938
    %945 = vrot.lane.b32.xlu0 %v928, 32
    %v946 = vpop.permute.xlu0 %945
    %947 = vrot.lane.b32.xlu0 %v929, 32
    %v948 = vpop.permute.xlu0 %947
    %v951 = vmul.f32 %v874, %v946
    %v952 = vmul.f32 %v889, %v948
    %955 = vrot.lane.b32.xlu0 %v951, 32
    %v956 = vpop.permute.xlu0 %955
    %957 = vrot.lane.b32.xlu0 %v952, 32
    %v958 = vpop.permute.xlu0 %957
    %v961 = vadd.f32 %v941, %v956
    %v962 = vadd.f32 %v942, %v958
    %v963 = vld [vmem:[#allocation5] sm:$0x3]
    %v965 = vrot.slane %v963, 1
    %966 = vrot.lane.b32.xlu0 %v963, 32
    %v967 = vpop.permute.xlu0 %966
    %968 = vrot.lane.b32.xlu0 %v965, 32
    %v969 = vpop.permute.xlu0 %968
    %v972 = vmul.f32 %v912, %v967
    %v973 = vmul.f32 %v927, %v969
    %976 = vrot.lane.b32.xlu0 %v930, 32
    %v977 = vpop.permute.xlu0 %976
    %978 = vrot.lane.b32.xlu0 %v931, 32
    %v979 = vpop.permute.xlu0 %978
    %v982 = vmul.f32 %v912, %v977
    %v983 = vmul.f32 %v927, %v979
    %986 = vrot.lane.b32.xlu0 %v982, 32
    %v987 = vpop.permute.xlu0 %986
    %988 = vrot.lane.b32.xlu0 %v983, 32
    %v989 = vpop.permute.xlu0 %988
    %v992 = vadd.f32 %v972, %v987
    %v993 = vadd.f32 %v973, %v989
    %v994 = vtanh.pop %v961
    %v995 = vtanh.pop %v962
    %998 = vrot.lane.b32.xlu0 %v994, 32
    %v999 = vpop.permute.xlu0 %998
    %1000 = vrot.lane.b32.xlu0 %v995, 32
    %v1001 = vpop.permute.xlu0 %1000
    %v1004 = vmul.f32 %v874, %v999
    %v1005 = vmul.f32 %v889, %v1001
    %v1006 = vtanh.pop %v992
    %v1007 = vtanh.pop %v993
    %1010 = vrot.lane.b32.xlu0 %v1006, 32
    %v1011 = vpop.permute.xlu0 %1010
    %1012 = vrot.lane.b32.xlu0 %v1007, 32
    %v1013 = vpop.permute.xlu0 %1012
    %v1016 = vmul.f32 %v912, %v1011
    %v1017 = vmul.f32 %v927, %v1013
    %v1020 = vrot.slane %v962, 7
    %v1021 = vsel %vm486, %v1020, %v961
    %1022 = vrot.lane.b32.xlu0 %v1021, 96
    %v1023 = vpop.permute.xlu0 %1022
    %1025 = vst.msk [vmem:[#allocation4] sm:$0x3] %vm491, %v1023
    %v1028 = vrot.slane %v993, 7
    %v1029 = vsel %vm486, %v1028, %v992
    %1030 = vrot.lane.b32.xlu0 %v1029, 96
    %v1031 = vpop.permute.xlu0 %1030
    %1033 = vst.msk [vmem:[#allocation5] sm:$0x3] %vm491, %v1031
    %v1036 = vrot.slane %v1005, 7
    %v1037 = vsel %vm486, %v1036, %v1004
    %1038 = vrot.lane.b32.xlu0 %v1037, 64
    %v1039 = vpop.permute.xlu0 %1038
    %1041 = vst.msk [vmem:[#allocation2] sm:$0x3] %vm491, %v1039
    %v1044 = vrot.slane %v1017, 7
    %v1045 = vsel %vm486, %v1044, %v1016
    %1046 = vrot.lane.b32.xlu0 %v1045, 64
    %v1047 = vpop.permute.xlu0 %1046
    %1049 = vst.msk [vmem:[#allocation3] sm:$0x3] %vm491, %v1047
    %1050 = vrot.lane.b32.xlu0 %v1004, 64
    %v1051 = vpop.permute.xlu0 %1050
    %1052 = vrot.lane.b32.xlu0 %v1005, 64
    %v1053 = vpop.permute.xlu0 %1052
    %1056 = vst.msk [vmem:[%s8 + $0x2] sm:$0x1] %vm523, %v1051
    %1057 = vst.msk [vmem:[%s8 + $0xa] sm:$0x1] %vm523, %v1053
    %1058 = vrot.lane.b32.xlu0 %v1016, 64
    %v1059 = vpop.permute.xlu0 %1058
    %1060 = vrot.lane.b32.xlu0 %v1017, 64
    %v1061 = vpop.permute.xlu0 %1060
    %1064 = vst.msk [vmem:[%s151 + $0x5] sm:$0x1] %vm523, %v1059
    %1065 = vst.msk [vmem:[%s151 + $0xd] sm:$0x1] %vm523, %v1061
    %v1066 = vld [vmem:[#allocation2] sm:$0x3]
    %v1067 = vpack.c.bf16 %v1066, %v1066
    %v1069 = vsel %vm254, %v1067, 0
    %1071 = vmatpush.bf16.msra.mxu0 0
    %1072 = vmatpush.bf16.msra.mxu0 0
    %1073 = vmatpush.bf16.msra.mxu0 0
    %1074 = vmatpush.bf16.msra.mxu0 0
    %1075 = vmatpush.bf16.msra.mxu0 0
    %1076 = vmatpush.bf16.msra.mxu0 0
    %1077 = vmatpush.bf16.msra.mxu0 %v251
    %1078 = vmatpush.bf16.msra.mxu0 %v250
    %1079 = vmatmul.bf16.gmra.mxu0 %v1069
    %v1080 = vpop.f32.mrf.mxu0
    %v1081 = vadd.f32 0.0, %v1080
    %v1082 = vpop.f32.mrf.mxu0
    %1083 = vdwg.mxu0
    %v1084 = vld [vmem:[#allocation3] sm:$0x3]
    %v1085 = vpack.c.bf16 %v1084, %v1084
    %v1087 = vsel %vm254, %v1085, 0
    %1089 = vmatpush.bf16.msra.mxu0 0
    %1090 = vmatpush.bf16.msra.mxu0 0
    %1091 = vmatpush.bf16.msra.mxu0 0
    %1092 = vmatpush.bf16.msra.mxu0 0
    %1093 = vmatpush.bf16.msra.mxu0 0
    %1094 = vmatpush.bf16.msra.mxu0 0
    %1095 = vmatpush.bf16.msra.mxu0 %v282
    %1096 = vmatpush.bf16.msra.mxu0 %v281
    %1097 = vmatmul.bf16.gmra.mxu0 %v1087
    %v1098 = vpop.f32.mrf.mxu0
    %v1099 = vadd.f32 0.0, %v1098
    %v1100 = vpop.f32.mrf.mxu0
    %1101 = vdwg.mxu0
    %v1102 = vld [vmem:[#allocation6 + $0x3] sm:$0x1]
    %v1103 = vld [vmem:[#allocation6 + $0xb] sm:$0x1]
    %v1105 = vrot.slane %v1081, 1
    %v1108 = vadd.f32 %v1102, %v1081
    %v1109 = vadd.f32 %v1103, %v1105
    %v1110 = vld [vmem:[#allocation7 + $0x4] sm:$0x1]
    %v1111 = vld [vmem:[#allocation7 + $0xc] sm:$0x1]
    %v1113 = vrot.slane %v1099, 1
    %v1116 = vadd.f32 %v1110, %v1099
    %v1117 = vadd.f32 %v1111, %v1113
    %v1118 = vxor.u32 %v1108, 2147483648
    %v1119 = vxor.u32 %v1109, 2147483648
    %v1120 = vmul.f32 %v1118, 1.442695
    %v1121 = vpow.pop %v1120
    %v1122 = vmul.f32 %v1119, 1.442695
    %v1123 = vpow.pop %v1122
    %v1124 = vadd.f32 %v1121, 1.0
    %v1125 = vadd.f32 %v1123, 1.0
    %v1126 = vrcp.pop %v1124
    %v1127 = vmul.f32 %v1124, %v1126
    %v1128 = vsub.f32 1.0, %v1127
    %v1129 = vmul.f32 %v1126, %v1128
    %v1130 = vadd.f32 %v1126, %v1129
    %vm1131 = vweird.f32 %v1124
    %vm1132 = vweird.f32 %v1126
    %vm1133 = vmor %vm1131, %vm1132
    %v1134 = vsel %vm1133, %v1126, %v1130
    %v1135 = vand.u32 2147483647, %v1124
    %vm1136 = vcmp.eq.f32.partialorder %v1135, 8.507059e+37
    %v1137 = vand.u32 %v1124, 2147483648
    %v1138 = vor.u32 1.1754944e-38, %v1137
    %v1139 = vsel %vm1136, %v1138, %v1134
    %v1140 = vmul.f32 1.0, %v1139
    %v1141 = vrcp.pop %v1125
    %v1142 = vmul.f32 %v1125, %v1141
    %v1143 = vsub.f32 1.0, %v1142
    %v1144 = vmul.f32 %v1141, %v1143
    %v1145 = vadd.f32 %v1141, %v1144
    %vm1146 = vweird.f32 %v1125
    %vm1147 = vweird.f32 %v1141
    %vm1148 = vmor %vm1146, %vm1147
    %v1149 = vsel %vm1148, %v1141, %v1145
    %v1150 = vand.u32 2147483647, %v1125
    %vm1151 = vcmp.eq.f32.partialorder %v1150, 8.507059e+37
    %v1152 = vand.u32 %v1125, 2147483648
    %v1153 = vor.u32 1.1754944e-38, %v1152
    %v1154 = vsel %vm1151, %v1153, %v1149
    %v1155 = vmul.f32 1.0, %v1154
    %v1156 = vxor.u32 %v1116, 2147483648
    %v1157 = vxor.u32 %v1117, 2147483648
    %v1158 = vmul.f32 %v1156, 1.442695
    %v1159 = vpow.pop %v1158
    %v1160 = vmul.f32 %v1157, 1.442695
    %v1161 = vpow.pop %v1160
    %v1162 = vadd.f32 %v1159, 1.0
    %v1163 = vadd.f32 %v1161, 1.0
    %v1164 = vrcp.pop %v1162
    %v1165 = vmul.f32 %v1162, %v1164
    %v1166 = vsub.f32 1.0, %v1165
    %v1167 = vmul.f32 %v1164, %v1166
    %v1168 = vadd.f32 %v1164, %v1167
    %vm1169 = vweird.f32 %v1162
    %vm1170 = vweird.f32 %v1164
    %vm1171 = vmor %vm1169, %vm1170
    %v1172 = vsel %vm1171, %v1164, %v1168
    %v1173 = vand.u32 2147483647, %v1162
    %vm1174 = vcmp.eq.f32.partialorder %v1173, 8.507059e+37
    %v1175 = vand.u32 %v1162, 2147483648
    %v1176 = vor.u32 1.1754944e-38, %v1175
    %v1177 = vsel %vm1174, %v1176, %v1172
    %v1178 = vmul.f32 1.0, %v1177
    %v1179 = vrcp.pop %v1163
    %v1180 = vmul.f32 %v1163, %v1179
    %v1181 = vsub.f32 1.0, %v1180
    %v1182 = vmul.f32 %v1179, %v1181
    %v1183 = vadd.f32 %v1179, %v1182
    %vm1184 = vweird.f32 %v1163
    %vm1185 = vweird.f32 %v1179
    %vm1186 = vmor %vm1184, %vm1185
    %v1187 = vsel %vm1186, %v1179, %v1183
    %v1188 = vand.u32 2147483647, %v1163
    %vm1189 = vcmp.eq.f32.partialorder %v1188, 8.507059e+37
    %v1190 = vand.u32 %v1163, 2147483648
    %v1191 = vor.u32 1.1754944e-38, %v1190
    %v1192 = vsel %vm1189, %v1191, %v1187
    %v1193 = vmul.f32 1.0, %v1192
    %v1194 = vtanh.pop %v1108
    %v1195 = vtanh.pop %v1109
    %v1196 = vtanh.pop %v1116
    %v1197 = vtanh.pop %v1117
    %v1198 = vld [vmem:[#allocation4] sm:$0x3]
    %v1200 = vrot.slane %v1198, 1
    %1201 = vrot.lane.b32.xlu0 %v1198, 32
    %v1202 = vpop.permute.xlu0 %1201
    %1203 = vrot.lane.b32.xlu0 %v1200, 32
    %v1204 = vpop.permute.xlu0 %1203
    %v1207 = vmul.f32 %v1140, %v1202
    %v1208 = vmul.f32 %v1155, %v1204
    %1211 = vrot.lane.b32.xlu0 %v1194, 32
    %v1212 = vpop.permute.xlu0 %1211
    %1213 = vrot.lane.b32.xlu0 %v1195, 32
    %v1214 = vpop.permute.xlu0 %1213
    %v1217 = vmul.f32 %v1140, %v1212
    %v1218 = vmul.f32 %v1155, %v1214
    %1221 = vrot.lane.b32.xlu0 %v1217, 32
    %v1222 = vpop.permute.xlu0 %1221
    %1223 = vrot.lane.b32.xlu0 %v1218, 32
    %v1224 = vpop.permute.xlu0 %1223
    %v1227 = vadd.f32 %v1207, %v1222
    %v1228 = vadd.f32 %v1208, %v1224
    %v1229 = vld [vmem:[#allocation5] sm:$0x3]
    %v1231 = vrot.slane %v1229, 1
    %1232 = vrot.lane.b32.xlu0 %v1229, 32
    %v1233 = vpop.permute.xlu0 %1232
    %1234 = vrot.lane.b32.xlu0 %v1231, 32
    %v1235 = vpop.permute.xlu0 %1234
    %v1238 = vmul.f32 %v1178, %v1233
    %v1239 = vmul.f32 %v1193, %v1235
    %1242 = vrot.lane.b32.xlu0 %v1196, 32
    %v1243 = vpop.permute.xlu0 %1242
    %1244 = vrot.lane.b32.xlu0 %v1197, 32
    %v1245 = vpop.permute.xlu0 %1244
    %v1248 = vmul.f32 %v1178, %v1243
    %v1249 = vmul.f32 %v1193, %v1245
    %1252 = vrot.lane.b32.xlu0 %v1248, 32
    %v1253 = vpop.permute.xlu0 %1252
    %1254 = vrot.lane.b32.xlu0 %v1249, 32
    %v1255 = vpop.permute.xlu0 %1254
    %v1258 = vadd.f32 %v1238, %v1253
    %v1259 = vadd.f32 %v1239, %v1255
    %v1260 = vtanh.pop %v1227
    %v1261 = vtanh.pop %v1228
    %1264 = vrot.lane.b32.xlu0 %v1260, 32
    %v1265 = vpop.permute.xlu0 %1264
    %1266 = vrot.lane.b32.xlu0 %v1261, 32
    %v1267 = vpop.permute.xlu0 %1266
    %v1270 = vmul.f32 %v1140, %v1265
    %v1271 = vmul.f32 %v1155, %v1267
    %v1272 = vtanh.pop %v1258
    %v1273 = vtanh.pop %v1259
    %1276 = vrot.lane.b32.xlu0 %v1272, 32
    %v1277 = vpop.permute.xlu0 %1276
    %1278 = vrot.lane.b32.xlu0 %v1273, 32
    %v1279 = vpop.permute.xlu0 %1278
    %v1282 = vmul.f32 %v1178, %v1277
    %v1283 = vmul.f32 %v1193, %v1279
    %v1286 = vrot.slane %v1228, 7
    %v1287 = vsel %vm486, %v1286, %v1227
    %1288 = vrot.lane.b32.xlu0 %v1287, 96
    %v1289 = vpop.permute.xlu0 %1288
    %1291 = vst.msk [vmem:[#allocation4] sm:$0x3] %vm491, %v1289
    %v1294 = vrot.slane %v1259, 7
    %v1295 = vsel %vm486, %v1294, %v1258
    %1296 = vrot.lane.b32.xlu0 %v1295, 96
    %v1297 = vpop.permute.xlu0 %1296
    %1299 = vst.msk [vmem:[#allocation5] sm:$0x3] %vm491, %v1297
    %v1302 = vrot.slane %v1271, 7
    %v1303 = vsel %vm486, %v1302, %v1270
    %1304 = vrot.lane.b32.xlu0 %v1303, 64
    %v1305 = vpop.permute.xlu0 %1304
    %1307 = vst.msk [vmem:[#allocation2] sm:$0x3] %vm491, %v1305
    %v1310 = vrot.slane %v1283, 7
    %v1311 = vsel %vm486, %v1310, %v1282
    %1312 = vrot.lane.b32.xlu0 %v1311, 64
    %v1313 = vpop.permute.xlu0 %1312
    %1315 = vst.msk [vmem:[#allocation3] sm:$0x3] %vm491, %v1313
    %1316 = vrot.lane.b32.xlu0 %v1270, 64
    %v1317 = vpop.permute.xlu0 %1316
    %1318 = vrot.lane.b32.xlu0 %v1271, 64
    %v1319 = vpop.permute.xlu0 %1318
    %1322 = vst.msk [vmem:[%s8 + $0x3] sm:$0x1] %vm523, %v1317
    %1323 = vst.msk [vmem:[%s8 + $0xb] sm:$0x1] %vm523, %v1319
    %1324 = vrot.lane.b32.xlu0 %v1282, 64
    %v1325 = vpop.permute.xlu0 %1324
    %1326 = vrot.lane.b32.xlu0 %v1283, 64
    %v1327 = vpop.permute.xlu0 %1326
    %1330 = vst.msk [vmem:[%s151 + $0x4] sm:$0x1] %vm523, %v1325
    %1331 = vst.msk [vmem:[%s151 + $0xc] sm:$0x1] %vm523, %v1327
    %v1332 = vld [vmem:[#allocation2] sm:$0x3]
    %v1333 = vpack.c.bf16 %v1332, %v1332
    %v1335 = vsel %vm254, %v1333, 0
    %1337 = vmatpush.bf16.msra.mxu0 0
    %1338 = vmatpush.bf16.msra.mxu0 0
    %1339 = vmatpush.bf16.msra.mxu0 0
    %1340 = vmatpush.bf16.msra.mxu0 0
    %1341 = vmatpush.bf16.msra.mxu0 0
    %1342 = vmatpush.bf16.msra.mxu0 0
    %1343 = vmatpush.bf16.msra.mxu0 %v251
    %1344 = vmatpush.bf16.msra.mxu0 %v250
    %1345 = vmatmul.bf16.gmra.mxu0 %v1335
    %v1346 = vpop.f32.mrf.mxu0
    %v1347 = vadd.f32 0.0, %v1346
    %v1348 = vpop.f32.mrf.mxu0
    %1349 = vdwg.mxu0
    %v1350 = vld [vmem:[#allocation3] sm:$0x3]
    %v1351 = vpack.c.bf16 %v1350, %v1350
    %v1353 = vsel %vm254, %v1351, 0
    %1355 = vmatpush.bf16.msra.mxu0 0
    %1356 = vmatpush.bf16.msra.mxu0 0
    %1357 = vmatpush.bf16.msra.mxu0 0
    %1358 = vmatpush.bf16.msra.mxu0 0
    %1359 = vmatpush.bf16.msra.mxu0 0
    %1360 = vmatpush.bf16.msra.mxu0 0
    %1361 = vmatpush.bf16.msra.mxu0 %v282
    %1362 = vmatpush.bf16.msra.mxu0 %v281
    %1363 = vmatmul.bf16.gmra.mxu0 %v1353
    %v1364 = vpop.f32.mrf.mxu0
    %v1365 = vadd.f32 0.0, %v1364
    %v1366 = vpop.f32.mrf.mxu0
    %1367 = vdwg.mxu0
    %v1368 = vld [vmem:[#allocation6 + $0x4] sm:$0x1]
    %v1369 = vld [vmem:[#allocation6 + $0xc] sm:$0x1]
    %v1371 = vrot.slane %v1347, 1
    %v1374 = vadd.f32 %v1368, %v1347
    %v1375 = vadd.f32 %v1369, %v1371
    %v1376 = vld [vmem:[#allocation7 + $0x3] sm:$0x1]
    %v1377 = vld [vmem:[#allocation7 + $0xb] sm:$0x1]
    %v1379 = vrot.slane %v1365, 1
    %v1382 = vadd.f32 %v1376, %v1365
    %v1383 = vadd.f32 %v1377, %v1379
    %v1384 = vxor.u32 %v1374, 2147483648
    %v1385 = vxor.u32 %v1375, 2147483648
    %v1386 = vmul.f32 %v1384, 1.442695
    %v1387 = vpow.pop %v1386
    %v1388 = vmul.f32 %v1385, 1.442695
    %v1389 = vpow.pop %v1388
    %v1390 = vadd.f32 %v1387, 1.0
    %v1391 = vadd.f32 %v1389, 1.0
    %v1392 = vrcp.pop %v1390
    %v1393 = vmul.f32 %v1390, %v1392
    %v1394 = vsub.f32 1.0, %v1393
    %v1395 = vmul.f32 %v1392, %v1394
    %v1396 = vadd.f32 %v1392, %v1395
    %vm1397 = vweird.f32 %v1390
    %vm1398 = vweird.f32 %v1392
    %vm1399 = vmor %vm1397, %vm1398
    %v1400 = vsel %vm1399, %v1392, %v1396
    %v1401 = vand.u32 2147483647, %v1390
    %vm1402 = vcmp.eq.f32.partialorder %v1401, 8.507059e+37
    %v1403 = vand.u32 %v1390, 2147483648
    %v1404 = vor.u32 1.1754944e-38, %v1403
    %v1405 = vsel %vm1402, %v1404, %v1400
    %v1406 = vmul.f32 1.0, %v1405
    %v1407 = vrcp.pop %v1391
    %v1408 = vmul.f32 %v1391, %v1407
    %v1409 = vsub.f32 1.0, %v1408
    %v1410 = vmul.f32 %v1407, %v1409
    %v1411 = vadd.f32 %v1407, %v1410
    %vm1412 = vweird.f32 %v1391
    %vm1413 = vweird.f32 %v1407
    %vm1414 = vmor %vm1412, %vm1413
    %v1415 = vsel %vm1414, %v1407, %v1411
    %v1416 = vand.u32 2147483647, %v1391
    %vm1417 = vcmp.eq.f32.partialorder %v1416, 8.507059e+37
    %v1418 = vand.u32 %v1391, 2147483648
    %v1419 = vor.u32 1.1754944e-38, %v1418
    %v1420 = vsel %vm1417, %v1419, %v1415
    %v1421 = vmul.f32 1.0, %v1420
    %v1422 = vxor.u32 %v1382, 2147483648
    %v1423 = vxor.u32 %v1383, 2147483648
    %v1424 = vmul.f32 %v1422, 1.442695
    %v1425 = vpow.pop %v1424
    %v1426 = vmul.f32 %v1423, 1.442695
    %v1427 = vpow.pop %v1426
    %v1428 = vadd.f32 %v1425, 1.0
    %v1429 = vadd.f32 %v1427, 1.0
    %v1430 = vrcp.pop %v1428
    %v1431 = vmul.f32 %v1428, %v1430
    %v1432 = vsub.f32 1.0, %v1431
    %v1433 = vmul.f32 %v1430, %v1432
    %v1434 = vadd.f32 %v1430, %v1433
    %vm1435 = vweird.f32 %v1428
    %vm1436 = vweird.f32 %v1430
    %vm1437 = vmor %vm1435, %vm1436
    %v1438 = vsel %vm1437, %v1430, %v1434
    %v1439 = vand.u32 2147483647, %v1428
    %vm1440 = vcmp.eq.f32.partialorder %v1439, 8.507059e+37
    %v1441 = vand.u32 %v1428, 2147483648
    %v1442 = vor.u32 1.1754944e-38, %v1441
    %v1443 = vsel %vm1440, %v1442, %v1438
    %v1444 = vmul.f32 1.0, %v1443
    %v1445 = vrcp.pop %v1429
    %v1446 = vmul.f32 %v1429, %v1445
    %v1447 = vsub.f32 1.0, %v1446
    %v1448 = vmul.f32 %v1445, %v1447
    %v1449 = vadd.f32 %v1445, %v1448
    %vm1450 = vweird.f32 %v1429
    %vm1451 = vweird.f32 %v1445
    %vm1452 = vmor %vm1450, %vm1451
    %v1453 = vsel %vm1452, %v1445, %v1449
    %v1454 = vand.u32 2147483647, %v1429
    %vm1455 = vcmp.eq.f32.partialorder %v1454, 8.507059e+37
    %v1456 = vand.u32 %v1429, 2147483648
    %v1457 = vor.u32 1.1754944e-38, %v1456
    %v1458 = vsel %vm1455, %v1457, %v1453
    %v1459 = vmul.f32 1.0, %v1458
    %v1460 = vtanh.pop %v1374
    %v1461 = vtanh.pop %v1375
    %v1462 = vtanh.pop %v1382
    %v1463 = vtanh.pop %v1383
    %v1464 = vld [vmem:[#allocation4] sm:$0x3]
    %v1466 = vrot.slane %v1464, 1
    %1467 = vrot.lane.b32.xlu0 %v1464, 32
    %v1468 = vpop.permute.xlu0 %1467
    %1469 = vrot.lane.b32.xlu0 %v1466, 32
    %v1470 = vpop.permute.xlu0 %1469
    %v1473 = vmul.f32 %v1406, %v1468
    %v1474 = vmul.f32 %v1421, %v1470
    %1477 = vrot.lane.b32.xlu0 %v1460, 32
    %v1478 = vpop.permute.xlu0 %1477
    %1479 = vrot.lane.b32.xlu0 %v1461, 32
    %v1480 = vpop.permute.xlu0 %1479
    %v1483 = vmul.f32 %v1406, %v1478
    %v1484 = vmul.f32 %v1421, %v1480
    %1487 = vrot.lane.b32.xlu0 %v1483, 32
    %v1488 = vpop.permute.xlu0 %1487
    %1489 = vrot.lane.b32.xlu0 %v1484, 32
    %v1490 = vpop.permute.xlu0 %1489
    %v1493 = vadd.f32 %v1473, %v1488
    %v1494 = vadd.f32 %v1474, %v1490
    %v1495 = vld [vmem:[#allocation5] sm:$0x3]
    %v1497 = vrot.slane %v1495, 1
    %1498 = vrot.lane.b32.xlu0 %v1495, 32
    %v1499 = vpop.permute.xlu0 %1498
    %1500 = vrot.lane.b32.xlu0 %v1497, 32
    %v1501 = vpop.permute.xlu0 %1500
    %v1504 = vmul.f32 %v1444, %v1499
    %v1505 = vmul.f32 %v1459, %v1501
    %1508 = vrot.lane.b32.xlu0 %v1462, 32
    %v1509 = vpop.permute.xlu0 %1508
    %1510 = vrot.lane.b32.xlu0 %v1463, 32
    %v1511 = vpop.permute.xlu0 %1510
    %v1514 = vmul.f32 %v1444, %v1509
    %v1515 = vmul.f32 %v1459, %v1511
    %1518 = vrot.lane.b32.xlu0 %v1514, 32
    %v1519 = vpop.permute.xlu0 %1518
    %1520 = vrot.lane.b32.xlu0 %v1515, 32
    %v1521 = vpop.permute.xlu0 %1520
    %v1524 = vadd.f32 %v1504, %v1519
    %v1525 = vadd.f32 %v1505, %v1521
    %v1526 = vtanh.pop %v1493
    %v1527 = vtanh.pop %v1494
    %1530 = vrot.lane.b32.xlu0 %v1526, 32
    %v1531 = vpop.permute.xlu0 %1530
    %1532 = vrot.lane.b32.xlu0 %v1527, 32
    %v1533 = vpop.permute.xlu0 %1532
    %v1536 = vmul.f32 %v1406, %v1531
    %v1537 = vmul.f32 %v1421, %v1533
    %v1538 = vtanh.pop %v1524
    %v1539 = vtanh.pop %v1525
    %1542 = vrot.lane.b32.xlu0 %v1538, 32
    %v1543 = vpop.permute.xlu0 %1542
    %1544 = vrot.lane.b32.xlu0 %v1539, 32
    %v1545 = vpop.permute.xlu0 %1544
    %v1548 = vmul.f32 %v1444, %v1543
    %v1549 = vmul.f32 %v1459, %v1545
    %v1552 = vrot.slane %v1494, 7
    %v1553 = vsel %vm486, %v1552, %v1493
    %1554 = vrot.lane.b32.xlu0 %v1553, 96
    %v1555 = vpop.permute.xlu0 %1554
    %1557 = vst.msk [vmem:[#allocation4] sm:$0x3] %vm491, %v1555
    %v1560 = vrot.slane %v1525, 7
    %v1561 = vsel %vm486, %v1560, %v1524
    %1562 = vrot.lane.b32.xlu0 %v1561, 96
    %v1563 = vpop.permute.xlu0 %1562
    %1565 = vst.msk [vmem:[#allocation5] sm:$0x3] %vm491, %v1563
    %v1568 = vrot.slane %v1537, 7
    %v1569 = vsel %vm486, %v1568, %v1536
    %1570 = vrot.lane.b32.xlu0 %v1569, 64
    %v1571 = vpop.permute.xlu0 %1570
    %1573 = vst.msk [vmem:[#allocation2] sm:$0x3] %vm491, %v1571
    %v1576 = vrot.slane %v1549, 7
    %v1577 = vsel %vm486, %v1576, %v1548
    %1578 = vrot.lane.b32.xlu0 %v1577, 64
    %v1579 = vpop.permute.xlu0 %1578
    %1581 = vst.msk [vmem:[#allocation3] sm:$0x3] %vm491, %v1579
    %1582 = vrot.lane.b32.xlu0 %v1536, 64
    %v1583 = vpop.permute.xlu0 %1582
    %1584 = vrot.lane.b32.xlu0 %v1537, 64
    %v1585 = vpop.permute.xlu0 %1584
    %1588 = vst.msk [vmem:[%s8 + $0x4] sm:$0x1] %vm523, %v1583
    %1589 = vst.msk [vmem:[%s8 + $0xc] sm:$0x1] %vm523, %v1585
    %1590 = vrot.lane.b32.xlu0 %v1548, 64
    %v1591 = vpop.permute.xlu0 %1590
    %1592 = vrot.lane.b32.xlu0 %v1549, 64
    %v1593 = vpop.permute.xlu0 %1592
    %1596 = vst.msk [vmem:[%s151 + $0x3] sm:$0x1] %vm523, %v1591
    %1597 = vst.msk [vmem:[%s151 + $0xb] sm:$0x1] %vm523, %v1593
    %v1598 = vld [vmem:[#allocation2] sm:$0x3]
    %v1599 = vpack.c.bf16 %v1598, %v1598
    %v1601 = vsel %vm254, %v1599, 0
    %1603 = vmatpush.bf16.msra.mxu0 0
    %1604 = vmatpush.bf16.msra.mxu0 0
    %1605 = vmatpush.bf16.msra.mxu0 0
    %1606 = vmatpush.bf16.msra.mxu0 0
    %1607 = vmatpush.bf16.msra.mxu0 0
    %1608 = vmatpush.bf16.msra.mxu0 0
    %1609 = vmatpush.bf16.msra.mxu0 %v251
    %1610 = vmatpush.bf16.msra.mxu0 %v250
    %1611 = vmatmul.bf16.gmra.mxu0 %v1601
    %v1612 = vpop.f32.mrf.mxu0
    %v1613 = vadd.f32 0.0, %v1612
    %v1614 = vpop.f32.mrf.mxu0
    %1615 = vdwg.mxu0
    %v1616 = vld [vmem:[#allocation3] sm:$0x3]
    %v1617 = vpack.c.bf16 %v1616, %v1616
    %v1619 = vsel %vm254, %v1617, 0
    %1621 = vmatpush.bf16.msra.mxu0 0
    %1622 = vmatpush.bf16.msra.mxu0 0
    %1623 = vmatpush.bf16.msra.mxu0 0
    %1624 = vmatpush.bf16.msra.mxu0 0
    %1625 = vmatpush.bf16.msra.mxu0 0
    %1626 = vmatpush.bf16.msra.mxu0 0
    %1627 = vmatpush.bf16.msra.mxu0 %v282
    %1628 = vmatpush.bf16.msra.mxu0 %v281
    %1629 = vmatmul.bf16.gmra.mxu0 %v1619
    %v1630 = vpop.f32.mrf.mxu0
    %v1631 = vadd.f32 0.0, %v1630
    %v1632 = vpop.f32.mrf.mxu0
    %1633 = vdwg.mxu0
    %v1634 = vld [vmem:[#allocation6 + $0x5] sm:$0x1]
    %v1635 = vld [vmem:[#allocation6 + $0xd] sm:$0x1]
    %v1637 = vrot.slane %v1613, 1
    %v1640 = vadd.f32 %v1634, %v1613
    %v1641 = vadd.f32 %v1635, %v1637
    %v1642 = vld [vmem:[#allocation7 + $0x2] sm:$0x1]
    %v1643 = vld [vmem:[#allocation7 + $0xa] sm:$0x1]
    %v1645 = vrot.slane %v1631, 1
    %v1648 = vadd.f32 %v1642, %v1631
    %v1649 = vadd.f32 %v1643, %v1645
    %v1650 = vxor.u32 %v1640, 2147483648
    %v1651 = vxor.u32 %v1641, 2147483648
    %v1652 = vmul.f32 %v1650, 1.442695
    %v1653 = vpow.pop %v1652
    %v1654 = vmul.f32 %v1651, 1.442695
    %v1655 = vpow.pop %v1654
    %v1656 = vadd.f32 %v1653, 1.0
    %v1657 = vadd.f32 %v1655, 1.0
    %v1658 = vrcp.pop %v1656
    %v1659 = vmul.f32 %v1656, %v1658
    %v1660 = vsub.f32 1.0, %v1659
    %v1661 = vmul.f32 %v1658, %v1660
    %v1662 = vadd.f32 %v1658, %v1661
    %vm1663 = vweird.f32 %v1656
    %vm1664 = vweird.f32 %v1658
    %vm1665 = vmor %vm1663, %vm1664
    %v1666 = vsel %vm1665, %v1658, %v1662
    %v1667 = vand.u32 2147483647, %v1656
    %vm1668 = vcmp.eq.f32.partialorder %v1667, 8.507059e+37
    %v1669 = vand.u32 %v1656, 2147483648
    %v1670 = vor.u32 1.1754944e-38, %v1669
    %v1671 = vsel %vm1668, %v1670, %v1666
    %v1672 = vmul.f32 1.0, %v1671
    %v1673 = vrcp.pop %v1657
    %v1674 = vmul.f32 %v1657, %v1673
    %v1675 = vsub.f32 1.0, %v1674
    %v1676 = vmul.f32 %v1673, %v1675
    %v1677 = vadd.f32 %v1673, %v1676
    %vm1678 = vweird.f32 %v1657
    %vm1679 = vweird.f32 %v1673
    %vm1680 = vmor %vm1678, %vm1679
    %v1681 = vsel %vm1680, %v1673, %v1677
    %v1682 = vand.u32 2147483647, %v1657
    %vm1683 = vcmp.eq.f32.partialorder %v1682, 8.507059e+37
    %v1684 = vand.u32 %v1657, 2147483648
    %v1685 = vor.u32 1.1754944e-38, %v1684
    %v1686 = vsel %vm1683, %v1685, %v1681
    %v1687 = vmul.f32 1.0, %v1686
    %v1688 = vxor.u32 %v1648, 2147483648
    %v1689 = vxor.u32 %v1649, 2147483648
    %v1690 = vmul.f32 %v1688, 1.442695
    %v1691 = vpow.pop %v1690
    %v1692 = vmul.f32 %v1689, 1.442695
    %v1693 = vpow.pop %v1692
    %v1694 = vadd.f32 %v1691, 1.0
    %v1695 = vadd.f32 %v1693, 1.0
    %v1696 = vrcp.pop %v1694
    %v1697 = vmul.f32 %v1694, %v1696
    %v1698 = vsub.f32 1.0, %v1697
    %v1699 = vmul.f32 %v1696, %v1698
    %v1700 = vadd.f32 %v1696, %v1699
    %vm1701 = vweird.f32 %v1694
    %vm1702 = vweird.f32 %v1696
    %vm1703 = vmor %vm1701, %vm1702
    %v1704 = vsel %vm1703, %v1696, %v1700
    %v1705 = vand.u32 2147483647, %v1694
    %vm1706 = vcmp.eq.f32.partialorder %v1705, 8.507059e+37
    %v1707 = vand.u32 %v1694, 2147483648
    %v1708 = vor.u32 1.1754944e-38, %v1707
    %v1709 = vsel %vm1706, %v1708, %v1704
    %v1710 = vmul.f32 1.0, %v1709
    %v1711 = vrcp.pop %v1695
    %v1712 = vmul.f32 %v1695, %v1711
    %v1713 = vsub.f32 1.0, %v1712
    %v1714 = vmul.f32 %v1711, %v1713
    %v1715 = vadd.f32 %v1711, %v1714
    %vm1716 = vweird.f32 %v1695
    %vm1717 = vweird.f32 %v1711
    %vm1718 = vmor %vm1716, %vm1717
    %v1719 = vsel %vm1718, %v1711, %v1715
    %v1720 = vand.u32 2147483647, %v1695
    %vm1721 = vcmp.eq.f32.partialorder %v1720, 8.507059e+37
    %v1722 = vand.u32 %v1695, 2147483648
    %v1723 = vor.u32 1.1754944e-38, %v1722
    %v1724 = vsel %vm1721, %v1723, %v1719
    %v1725 = vmul.f32 1.0, %v1724
    %v1726 = vtanh.pop %v1640
    %v1727 = vtanh.pop %v1641
    %v1728 = vtanh.pop %v1648
    %v1729 = vtanh.pop %v1649
    %v1730 = vld [vmem:[#allocation4] sm:$0x3]
    %v1732 = vrot.slane %v1730, 1
    %1733 = vrot.lane.b32.xlu0 %v1730, 32
    %v1734 = vpop.permute.xlu0 %1733
    %1735 = vrot.lane.b32.xlu0 %v1732, 32
    %v1736 = vpop.permute.xlu0 %1735
    %v1739 = vmul.f32 %v1672, %v1734
    %v1740 = vmul.f32 %v1687, %v1736
    %1743 = vrot.lane.b32.xlu0 %v1726, 32
    %v1744 = vpop.permute.xlu0 %1743
    %1745 = vrot.lane.b32.xlu0 %v1727, 32
    %v1746 = vpop.permute.xlu0 %1745
    %v1749 = vmul.f32 %v1672, %v1744
    %v1750 = vmul.f32 %v1687, %v1746
    %1753 = vrot.lane.b32.xlu0 %v1749, 32
    %v1754 = vpop.permute.xlu0 %1753
    %1755 = vrot.lane.b32.xlu0 %v1750, 32
    %v1756 = vpop.permute.xlu0 %1755
    %v1759 = vadd.f32 %v1739, %v1754
    %v1760 = vadd.f32 %v1740, %v1756
    %v1761 = vld [vmem:[#allocation5] sm:$0x3]
    %v1763 = vrot.slane %v1761, 1
    %1764 = vrot.lane.b32.xlu0 %v1761, 32
    %v1765 = vpop.permute.xlu0 %1764
    %1766 = vrot.lane.b32.xlu0 %v1763, 32
    %v1767 = vpop.permute.xlu0 %1766
    %v1770 = vmul.f32 %v1710, %v1765
    %v1771 = vmul.f32 %v1725, %v1767
    %1774 = vrot.lane.b32.xlu0 %v1728, 32
    %v1775 = vpop.permute.xlu0 %1774
    %1776 = vrot.lane.b32.xlu0 %v1729, 32
    %v1777 = vpop.permute.xlu0 %1776
    %v1780 = vmul.f32 %v1710, %v1775
    %v1781 = vmul.f32 %v1725, %v1777
    %1784 = vrot.lane.b32.xlu0 %v1780, 32
    %v1785 = vpop.permute.xlu0 %1784
    %1786 = vrot.lane.b32.xlu0 %v1781, 32
    %v1787 = vpop.permute.xlu0 %1786
    %v1790 = vadd.f32 %v1770, %v1785
    %v1791 = vadd.f32 %v1771, %v1787
    %v1792 = vtanh.pop %v1759
    %v1793 = vtanh.pop %v1760
    %1796 = vrot.lane.b32.xlu0 %v1792, 32
    %v1797 = vpop.permute.xlu0 %1796
    %1798 = vrot.lane.b32.xlu0 %v1793, 32
    %v1799 = vpop.permute.xlu0 %1798
    %v1802 = vmul.f32 %v1672, %v1797
    %v1803 = vmul.f32 %v1687, %v1799
    %v1804 = vtanh.pop %v1790
    %v1805 = vtanh.pop %v1791
    %1808 = vrot.lane.b32.xlu0 %v1804, 32
    %v1809 = vpop.permute.xlu0 %1808
    %1810 = vrot.lane.b32.xlu0 %v1805, 32
    %v1811 = vpop.permute.xlu0 %1810
    %v1814 = vmul.f32 %v1710, %v1809
    %v1815 = vmul.f32 %v1725, %v1811
    %v1818 = vrot.slane %v1760, 7
    %v1819 = vsel %vm486, %v1818, %v1759
    %1820 = vrot.lane.b32.xlu0 %v1819, 96
    %v1821 = vpop.permute.xlu0 %1820
    %1823 = vst.msk [vmem:[#allocation4] sm:$0x3] %vm491, %v1821
    %v1826 = vrot.slane %v1791, 7
    %v1827 = vsel %vm486, %v1826, %v1790
    %1828 = vrot.lane.b32.xlu0 %v1827, 96
    %v1829 = vpop.permute.xlu0 %1828
    %1831 = vst.msk [vmem:[#allocation5] sm:$0x3] %vm491, %v1829
    %v1834 = vrot.slane %v1803, 7
    %v1835 = vsel %vm486, %v1834, %v1802
    %1836 = vrot.lane.b32.xlu0 %v1835, 64
    %v1837 = vpop.permute.xlu0 %1836
    %1839 = vst.msk [vmem:[#allocation2] sm:$0x3] %vm491, %v1837
    %v1842 = vrot.slane %v1815, 7
    %v1843 = vsel %vm486, %v1842, %v1814
    %1844 = vrot.lane.b32.xlu0 %v1843, 64
    %v1845 = vpop.permute.xlu0 %1844
    %1847 = vst.msk [vmem:[#allocation3] sm:$0x3] %vm491, %v1845
    %1848 = vrot.lane.b32.xlu0 %v1802, 64
    %v1849 = vpop.permute.xlu0 %1848
    %1850 = vrot.lane.b32.xlu0 %v1803, 64
    %v1851 = vpop.permute.xlu0 %1850
    %1854 = vst.msk [vmem:[%s8 + $0x5] sm:$0x1] %vm523, %v1849
    %1855 = vst.msk [vmem:[%s8 + $0xd] sm:$0x1] %vm523, %v1851
    %1856 = vrot.lane.b32.xlu0 %v1814, 64
    %v1857 = vpop.permute.xlu0 %1856
    %1858 = vrot.lane.b32.xlu0 %v1815, 64
    %v1859 = vpop.permute.xlu0 %1858
    %1862 = vst.msk [vmem:[%s151 + $0x2] sm:$0x1] %vm523, %v1857
    %1863 = vst.msk [vmem:[%s151 + $0xa] sm:$0x1] %vm523, %v1859
    %v1864 = vld [vmem:[#allocation2] sm:$0x3]
    %v1865 = vpack.c.bf16 %v1864, %v1864
    %v1867 = vsel %vm254, %v1865, 0
    %1869 = vmatpush.bf16.msra.mxu0 0
    %1870 = vmatpush.bf16.msra.mxu0 0
    %1871 = vmatpush.bf16.msra.mxu0 0
    %1872 = vmatpush.bf16.msra.mxu0 0
    %1873 = vmatpush.bf16.msra.mxu0 0
    %1874 = vmatpush.bf16.msra.mxu0 0
    %1875 = vmatpush.bf16.msra.mxu0 %v251
    %1876 = vmatpush.bf16.msra.mxu0 %v250
    %1877 = vmatmul.bf16.gmra.mxu0 %v1867
    %v1878 = vpop.f32.mrf.mxu0
    %v1879 = vadd.f32 0.0, %v1878
    %v1880 = vpop.f32.mrf.mxu0
    %1881 = vdwg.mxu0
    %v1882 = vld [vmem:[#allocation3] sm:$0x3]
    %v1883 = vpack.c.bf16 %v1882, %v1882
    %v1885 = vsel %vm254, %v1883, 0
    %1887 = vmatpush.bf16.msra.mxu0 0
    %1888 = vmatpush.bf16.msra.mxu0 0
    %1889 = vmatpush.bf16.msra.mxu0 0
    %1890 = vmatpush.bf16.msra.mxu0 0
    %1891 = vmatpush.bf16.msra.mxu0 0
    %1892 = vmatpush.bf16.msra.mxu0 0
    %1893 = vmatpush.bf16.msra.mxu0 %v282
    %1894 = vmatpush.bf16.msra.mxu0 %v281
    %1895 = vmatmul.bf16.gmra.mxu0 %v1885
    %v1896 = vpop.f32.mrf.mxu0
    %v1897 = vadd.f32 0.0, %v1896
    %v1898 = vpop.f32.mrf.mxu0
    %1899 = vdwg.mxu0
    %v1900 = vld [vmem:[#allocation6 + $0x6] sm:$0x1]
    %v1901 = vld [vmem:[#allocation6 + $0xe] sm:$0x1]
    %v1903 = vrot.slane %v1879, 1
    %v1906 = vadd.f32 %v1900, %v1879
    %v1907 = vadd.f32 %v1901, %v1903
    %v1908 = vld [vmem:[#allocation7 + $0x1] sm:$0x1]
    %v1909 = vld [vmem:[#allocation7 + $0x9] sm:$0x1]
    %v1911 = vrot.slane %v1897, 1
    %v1914 = vadd.f32 %v1908, %v1897
    %v1915 = vadd.f32 %v1909, %v1911
    %v1916 = vxor.u32 %v1906, 2147483648
    %v1917 = vxor.u32 %v1907, 2147483648
    %v1918 = vmul.f32 %v1916, 1.442695
    %v1919 = vpow.pop %v1918
    %v1920 = vmul.f32 %v1917, 1.442695
    %v1921 = vpow.pop %v1920
    %v1922 = vadd.f32 %v1919, 1.0
    %v1923 = vadd.f32 %v1921, 1.0
    %v1924 = vrcp.pop %v1922
    %v1925 = vmul.f32 %v1922, %v1924
    %v1926 = vsub.f32 1.0, %v1925
    %v1927 = vmul.f32 %v1924, %v1926
    %v1928 = vadd.f32 %v1924, %v1927
    %vm1929 = vweird.f32 %v1922
    %vm1930 = vweird.f32 %v1924
    %vm1931 = vmor %vm1929, %vm1930
    %v1932 = vsel %vm1931, %v1924, %v1928
    %v1933 = vand.u32 2147483647, %v1922
    %vm1934 = vcmp.eq.f32.partialorder %v1933, 8.507059e+37
    %v1935 = vand.u32 %v1922, 2147483648
    %v1936 = vor.u32 1.1754944e-38, %v1935
    %v1937 = vsel %vm1934, %v1936, %v1932
    %v1938 = vmul.f32 1.0, %v1937
    %v1939 = vrcp.pop %v1923
    %v1940 = vmul.f32 %v1923, %v1939
    %v1941 = vsub.f32 1.0, %v1940
    %v1942 = vmul.f32 %v1939, %v1941
    %v1943 = vadd.f32 %v1939, %v1942
    %vm1944 = vweird.f32 %v1923
    %vm1945 = vweird.f32 %v1939
    %vm1946 = vmor %vm1944, %vm1945
    %v1947 = vsel %vm1946, %v1939, %v1943
    %v1948 = vand.u32 2147483647, %v1923
    %vm1949 = vcmp.eq.f32.partialorder %v1948, 8.507059e+37
    %v1950 = vand.u32 %v1923, 2147483648
    %v1951 = vor.u32 1.1754944e-38, %v1950
    %v1952 = vsel %vm1949, %v1951, %v1947
    %v1953 = vmul.f32 1.0, %v1952
    %v1954 = vxor.u32 %v1914, 2147483648
    %v1955 = vxor.u32 %v1915, 2147483648
    %v1956 = vmul.f32 %v1954, 1.442695
    %v1957 = vpow.pop %v1956
    %v1958 = vmul.f32 %v1955, 1.442695
    %v1959 = vpow.pop %v1958
    %v1960 = vadd.f32 %v1957, 1.0
    %v1961 = vadd.f32 %v1959, 1.0
    %v1962 = vrcp.pop %v1960
    %v1963 = vmul.f32 %v1960, %v1962
    %v1964 = vsub.f32 1.0, %v1963
    %v1965 = vmul.f32 %v1962, %v1964
    %v1966 = vadd.f32 %v1962, %v1965
    %vm1967 = vweird.f32 %v1960
    %vm1968 = vweird.f32 %v1962
    %vm1969 = vmor %vm1967, %vm1968
    %v1970 = vsel %vm1969, %v1962, %v1966
    %v1971 = vand.u32 2147483647, %v1960
    %vm1972 = vcmp.eq.f32.partialorder %v1971, 8.507059e+37
    %v1973 = vand.u32 %v1960, 2147483648
    %v1974 = vor.u32 1.1754944e-38, %v1973
    %v1975 = vsel %vm1972, %v1974, %v1970
    %v1976 = vmul.f32 1.0, %v1975
    %v1977 = vrcp.pop %v1961
    %v1978 = vmul.f32 %v1961, %v1977
    %v1979 = vsub.f32 1.0, %v1978
    %v1980 = vmul.f32 %v1977, %v1979
    %v1981 = vadd.f32 %v1977, %v1980
    %vm1982 = vweird.f32 %v1961
    %vm1983 = vweird.f32 %v1977
    %vm1984 = vmor %vm1982, %vm1983
    %v1985 = vsel %vm1984, %v1977, %v1981
    %v1986 = vand.u32 2147483647, %v1961
    %vm1987 = vcmp.eq.f32.partialorder %v1986, 8.507059e+37
    %v1988 = vand.u32 %v1961, 2147483648
    %v1989 = vor.u32 1.1754944e-38, %v1988
    %v1990 = vsel %vm1987, %v1989, %v1985
    %v1991 = vmul.f32 1.0, %v1990
    %v1992 = vtanh.pop %v1906
    %v1993 = vtanh.pop %v1907
    %v1994 = vtanh.pop %v1914
    %v1995 = vtanh.pop %v1915
    %v1996 = vld [vmem:[#allocation4] sm:$0x3]
    %v1998 = vrot.slane %v1996, 1
    %1999 = vrot.lane.b32.xlu0 %v1996, 32
    %v2000 = vpop.permute.xlu0 %1999
    %2001 = vrot.lane.b32.xlu0 %v1998, 32
    %v2002 = vpop.permute.xlu0 %2001
    %v2005 = vmul.f32 %v1938, %v2000
    %v2006 = vmul.f32 %v1953, %v2002
    %2009 = vrot.lane.b32.xlu0 %v1992, 32
    %v2010 = vpop.permute.xlu0 %2009
    %2011 = vrot.lane.b32.xlu0 %v1993, 32
    %v2012 = vpop.permute.xlu0 %2011
    %v2015 = vmul.f32 %v1938, %v2010
    %v2016 = vmul.f32 %v1953, %v2012
    %2019 = vrot.lane.b32.xlu0 %v2015, 32
    %v2020 = vpop.permute.xlu0 %2019
    %2021 = vrot.lane.b32.xlu0 %v2016, 32
    %v2022 = vpop.permute.xlu0 %2021
    %v2025 = vadd.f32 %v2005, %v2020
    %v2026 = vadd.f32 %v2006, %v2022
    %v2027 = vld [vmem:[#allocation5] sm:$0x3]
    %v2029 = vrot.slane %v2027, 1
    %2030 = vrot.lane.b32.xlu0 %v2027, 32
    %v2031 = vpop.permute.xlu0 %2030
    %2032 = vrot.lane.b32.xlu0 %v2029, 32
    %v2033 = vpop.permute.xlu0 %2032
    %v2036 = vmul.f32 %v1976, %v2031
    %v2037 = vmul.f32 %v1991, %v2033
    %2040 = vrot.lane.b32.xlu0 %v1994, 32
    %v2041 = vpop.permute.xlu0 %2040
    %2042 = vrot.lane.b32.xlu0 %v1995, 32
    %v2043 = vpop.permute.xlu0 %2042
    %v2046 = vmul.f32 %v1976, %v2041
    %v2047 = vmul.f32 %v1991, %v2043
    %2050 = vrot.lane.b32.xlu0 %v2046, 32
    %v2051 = vpop.permute.xlu0 %2050
    %2052 = vrot.lane.b32.xlu0 %v2047, 32
    %v2053 = vpop.permute.xlu0 %2052
    %v2056 = vadd.f32 %v2036, %v2051
    %v2057 = vadd.f32 %v2037, %v2053
    %v2058 = vtanh.pop %v2025
    %v2059 = vtanh.pop %v2026
    %2062 = vrot.lane.b32.xlu0 %v2058, 32
    %v2063 = vpop.permute.xlu0 %2062
    %2064 = vrot.lane.b32.xlu0 %v2059, 32
    %v2065 = vpop.permute.xlu0 %2064
    %v2068 = vmul.f32 %v1938, %v2063
    %v2069 = vmul.f32 %v1953, %v2065
    %v2070 = vtanh.pop %v2056
    %v2071 = vtanh.pop %v2057
    %2074 = vrot.lane.b32.xlu0 %v2070, 32
    %v2075 = vpop.permute.xlu0 %2074
    %2076 = vrot.lane.b32.xlu0 %v2071, 32
    %v2077 = vpop.permute.xlu0 %2076
    %v2080 = vmul.f32 %v1976, %v2075
    %v2081 = vmul.f32 %v1991, %v2077
    %v2084 = vrot.slane %v2026, 7
    %v2085 = vsel %vm486, %v2084, %v2025
    %2086 = vrot.lane.b32.xlu0 %v2085, 96
    %v2087 = vpop.permute.xlu0 %2086
    %2089 = vst.msk [vmem:[#allocation4] sm:$0x3] %vm491, %v2087
    %v2092 = vrot.slane %v2057, 7
    %v2093 = vsel %vm486, %v2092, %v2056
    %2094 = vrot.lane.b32.xlu0 %v2093, 96
    %v2095 = vpop.permute.xlu0 %2094
    %2097 = vst.msk [vmem:[#allocation5] sm:$0x3] %vm491, %v2095
    %v2100 = vrot.slane %v2069, 7
    %v2101 = vsel %vm486, %v2100, %v2068
    %2102 = vrot.lane.b32.xlu0 %v2101, 64
    %v2103 = vpop.permute.xlu0 %2102
    %2105 = vst.msk [vmem:[#allocation2] sm:$0x3] %vm491, %v2103
    %v2108 = vrot.slane %v2081, 7
    %v2109 = vsel %vm486, %v2108, %v2080
    %2110 = vrot.lane.b32.xlu0 %v2109, 64
    %v2111 = vpop.permute.xlu0 %2110
    %2113 = vst.msk [vmem:[#allocation3] sm:$0x3] %vm491, %v2111
    %2114 = vrot.lane.b32.xlu0 %v2068, 64
    %v2115 = vpop.permute.xlu0 %2114
    %2116 = vrot.lane.b32.xlu0 %v2069, 64
    %v2117 = vpop.permute.xlu0 %2116
    %2120 = vst.msk [vmem:[%s8 + $0x6] sm:$0x1] %vm523, %v2115
    %2121 = vst.msk [vmem:[%s8 + $0xe] sm:$0x1] %vm523, %v2117
    %2122 = vrot.lane.b32.xlu0 %v2080, 64
    %v2123 = vpop.permute.xlu0 %2122
    %2124 = vrot.lane.b32.xlu0 %v2081, 64
    %v2125 = vpop.permute.xlu0 %2124
    %2128 = vst.msk [vmem:[%s151 + $0x1] sm:$0x1] %vm523, %v2123
    %2129 = vst.msk [vmem:[%s151 + $0x9] sm:$0x1] %vm523, %v2125
    %v2130 = vld [vmem:[#allocation2] sm:$0x3]
    %v2131 = vpack.c.bf16 %v2130, %v2130
    %v2133 = vsel %vm254, %v2131, 0
    %2135 = vmatpush.bf16.msra.mxu0 0
    %2136 = vmatpush.bf16.msra.mxu0 0
    %2137 = vmatpush.bf16.msra.mxu0 0
    %2138 = vmatpush.bf16.msra.mxu0 0
    %2139 = vmatpush.bf16.msra.mxu0 0
    %2140 = vmatpush.bf16.msra.mxu0 0
    %2141 = vmatpush.bf16.msra.mxu0 %v251
    %2142 = vmatpush.bf16.msra.mxu0 %v250
    %2143 = vmatmul.bf16.gmra.mxu0 %v2133
    %v2144 = vpop.f32.mrf.mxu0
    %v2145 = vadd.f32 0.0, %v2144
    %v2146 = vpop.f32.mrf.mxu0
    %2147 = vdwg.mxu0
    %v2148 = vld [vmem:[#allocation3] sm:$0x3]
    %v2149 = vpack.c.bf16 %v2148, %v2148
    %v2151 = vsel %vm254, %v2149, 0
    %2153 = vmatpush.bf16.msra.mxu0 0
    %2154 = vmatpush.bf16.msra.mxu0 0
    %2155 = vmatpush.bf16.msra.mxu0 0
    %2156 = vmatpush.bf16.msra.mxu0 0
    %2157 = vmatpush.bf16.msra.mxu0 0
    %2158 = vmatpush.bf16.msra.mxu0 0
    %2159 = vmatpush.bf16.msra.mxu0 %v282
    %2160 = vmatpush.bf16.msra.mxu0 %v281
    %2161 = vmatmul.bf16.gmra.mxu0 %v2151
    %v2162 = vpop.f32.mrf.mxu0
    %v2163 = vadd.f32 0.0, %v2162
    %v2164 = vpop.f32.mrf.mxu0
    %2165 = vdwg.mxu0
    %v2166 = vld [vmem:[#allocation6 + $0x7] sm:$0x1]
    %v2167 = vld [vmem:[#allocation6 + $0xf] sm:$0x1]
    %v2169 = vrot.slane %v2145, 1
    %v2172 = vadd.f32 %v2166, %v2145
    %v2173 = vadd.f32 %v2167, %v2169
    %v2174 = vld [vmem:[#allocation7] sm:$0x1]
    %v2175 = vld [vmem:[#allocation7 + $0x8] sm:$0x1]
    %v2177 = vrot.slane %v2163, 1
    %v2180 = vadd.f32 %v2174, %v2163
    %v2181 = vadd.f32 %v2175, %v2177
    %v2182 = vxor.u32 %v2172, 2147483648
    %v2183 = vxor.u32 %v2173, 2147483648
    %v2184 = vmul.f32 %v2182, 1.442695
    %v2185 = vpow.pop %v2184
    %v2186 = vmul.f32 %v2183, 1.442695
    %v2187 = vpow.pop %v2186
    %v2188 = vadd.f32 %v2185, 1.0
    %v2189 = vadd.f32 %v2187, 1.0
    %v2190 = vrcp.pop %v2188
    %v2191 = vmul.f32 %v2188, %v2190
    %v2192 = vsub.f32 1.0, %v2191
    %v2193 = vmul.f32 %v2190, %v2192
    %v2194 = vadd.f32 %v2190, %v2193
    %vm2195 = vweird.f32 %v2188
    %vm2196 = vweird.f32 %v2190
    %vm2197 = vmor %vm2195, %vm2196
    %v2198 = vsel %vm2197, %v2190, %v2194
    %v2199 = vand.u32 2147483647, %v2188
    %vm2200 = vcmp.eq.f32.partialorder %v2199, 8.507059e+37
    %v2201 = vand.u32 %v2188, 2147483648
    %v2202 = vor.u32 1.1754944e-38, %v2201
    %v2203 = vsel %vm2200, %v2202, %v2198
    %v2204 = vmul.f32 1.0, %v2203
    %v2205 = vrcp.pop %v2189
    %v2206 = vmul.f32 %v2189, %v2205
    %v2207 = vsub.f32 1.0, %v2206
    %v2208 = vmul.f32 %v2205, %v2207
    %v2209 = vadd.f32 %v2205, %v2208
    %vm2210 = vweird.f32 %v2189
    %vm2211 = vweird.f32 %v2205
    %vm2212 = vmor %vm2210, %vm2211
    %v2213 = vsel %vm2212, %v2205, %v2209
    %v2214 = vand.u32 2147483647, %v2189
    %vm2215 = vcmp.eq.f32.partialorder %v2214, 8.507059e+37
    %v2216 = vand.u32 %v2189, 2147483648
    %v2217 = vor.u32 1.1754944e-38, %v2216
    %v2218 = vsel %vm2215, %v2217, %v2213
    %v2219 = vmul.f32 1.0, %v2218
    %v2220 = vxor.u32 %v2180, 2147483648
    %v2221 = vxor.u32 %v2181, 2147483648
    %v2222 = vmul.f32 %v2220, 1.442695
    %v2223 = vpow.pop %v2222
    %v2224 = vmul.f32 %v2221, 1.442695
    %v2225 = vpow.pop %v2224
    %v2226 = vadd.f32 %v2223, 1.0
    %v2227 = vadd.f32 %v2225, 1.0
    %v2228 = vrcp.pop %v2226
    %v2229 = vmul.f32 %v2226, %v2228
    %v2230 = vsub.f32 1.0, %v2229
    %v2231 = vmul.f32 %v2228, %v2230
    %v2232 = vadd.f32 %v2228, %v2231
    %vm2233 = vweird.f32 %v2226
    %vm2234 = vweird.f32 %v2228
    %vm2235 = vmor %vm2233, %vm2234
    %v2236 = vsel %vm2235, %v2228, %v2232
    %v2237 = vand.u32 2147483647, %v2226
    %vm2238 = vcmp.eq.f32.partialorder %v2237, 8.507059e+37
    %v2239 = vand.u32 %v2226, 2147483648
    %v2240 = vor.u32 1.1754944e-38, %v2239
    %v2241 = vsel %vm2238, %v2240, %v2236
    %v2242 = vmul.f32 1.0, %v2241
    %v2243 = vrcp.pop %v2227
    %v2244 = vmul.f32 %v2227, %v2243
    %v2245 = vsub.f32 1.0, %v2244
    %v2246 = vmul.f32 %v2243, %v2245
    %v2247 = vadd.f32 %v2243, %v2246
    %vm2248 = vweird.f32 %v2227
    %vm2249 = vweird.f32 %v2243
    %vm2250 = vmor %vm2248, %vm2249
    %v2251 = vsel %vm2250, %v2243, %v2247
    %v2252 = vand.u32 2147483647, %v2227
    %vm2253 = vcmp.eq.f32.partialorder %v2252, 8.507059e+37
    %v2254 = vand.u32 %v2227, 2147483648
    %v2255 = vor.u32 1.1754944e-38, %v2254
    %v2256 = vsel %vm2253, %v2255, %v2251
    %v2257 = vmul.f32 1.0, %v2256
    %v2258 = vtanh.pop %v2172
    %v2259 = vtanh.pop %v2173
    %v2260 = vtanh.pop %v2180
    %v2261 = vtanh.pop %v2181
    %v2262 = vld [vmem:[#allocation4] sm:$0x3]
    %v2264 = vrot.slane %v2262, 1
    %2265 = vrot.lane.b32.xlu0 %v2262, 32
    %v2266 = vpop.permute.xlu0 %2265
    %2267 = vrot.lane.b32.xlu0 %v2264, 32
    %v2268 = vpop.permute.xlu0 %2267
    %v2271 = vmul.f32 %v2204, %v2266
    %v2272 = vmul.f32 %v2219, %v2268
    %2275 = vrot.lane.b32.xlu0 %v2258, 32
    %v2276 = vpop.permute.xlu0 %2275
    %2277 = vrot.lane.b32.xlu0 %v2259, 32
    %v2278 = vpop.permute.xlu0 %2277
    %v2281 = vmul.f32 %v2204, %v2276
    %v2282 = vmul.f32 %v2219, %v2278
    %2285 = vrot.lane.b32.xlu0 %v2281, 32
    %v2286 = vpop.permute.xlu0 %2285
    %2287 = vrot.lane.b32.xlu0 %v2282, 32
    %v2288 = vpop.permute.xlu0 %2287
    %v2291 = vadd.f32 %v2271, %v2286
    %v2292 = vadd.f32 %v2272, %v2288
    %v2293 = vld [vmem:[#allocation5] sm:$0x3]
    %v2295 = vrot.slane %v2293, 1
    %2296 = vrot.lane.b32.xlu0 %v2293, 32
    %v2297 = vpop.permute.xlu0 %2296
    %2298 = vrot.lane.b32.xlu0 %v2295, 32
    %v2299 = vpop.permute.xlu0 %2298
    %v2302 = vmul.f32 %v2242, %v2297
    %v2303 = vmul.f32 %v2257, %v2299
    %2306 = vrot.lane.b32.xlu0 %v2260, 32
    %v2307 = vpop.permute.xlu0 %2306
    %2308 = vrot.lane.b32.xlu0 %v2261, 32
    %v2309 = vpop.permute.xlu0 %2308
    %v2312 = vmul.f32 %v2242, %v2307
    %v2313 = vmul.f32 %v2257, %v2309
    %2316 = vrot.lane.b32.xlu0 %v2312, 32
    %v2317 = vpop.permute.xlu0 %2316
    %2318 = vrot.lane.b32.xlu0 %v2313, 32
    %v2319 = vpop.permute.xlu0 %2318
    %v2322 = vadd.f32 %v2302, %v2317
    %v2323 = vadd.f32 %v2303, %v2319
    %v2324 = vtanh.pop %v2291
    %v2325 = vtanh.pop %v2292
    %2328 = vrot.lane.b32.xlu0 %v2324, 32
    %v2329 = vpop.permute.xlu0 %2328
    %2330 = vrot.lane.b32.xlu0 %v2325, 32
    %v2331 = vpop.permute.xlu0 %2330
    %v2334 = vmul.f32 %v2204, %v2329
    %v2335 = vmul.f32 %v2219, %v2331
    %v2336 = vtanh.pop %v2322
    %v2337 = vtanh.pop %v2323
    %2340 = vrot.lane.b32.xlu0 %v2336, 32
    %v2341 = vpop.permute.xlu0 %2340
    %2342 = vrot.lane.b32.xlu0 %v2337, 32
    %v2343 = vpop.permute.xlu0 %2342
    %v2346 = vmul.f32 %v2242, %v2341
    %v2347 = vmul.f32 %v2257, %v2343
    %v2350 = vrot.slane %v2292, 7
    %v2351 = vsel %vm486, %v2350, %v2291
    %2352 = vrot.lane.b32.xlu0 %v2351, 96
    %v2353 = vpop.permute.xlu0 %2352
    %2355 = vst.msk [vmem:[#allocation4] sm:$0x3] %vm491, %v2353
    %v2358 = vrot.slane %v2323, 7
    %v2359 = vsel %vm486, %v2358, %v2322
    %2360 = vrot.lane.b32.xlu0 %v2359, 96
    %v2361 = vpop.permute.xlu0 %2360
    %2363 = vst.msk [vmem:[#allocation5] sm:$0x3] %vm491, %v2361
    %v2366 = vrot.slane %v2335, 7
    %v2367 = vsel %vm486, %v2366, %v2334
    %2368 = vrot.lane.b32.xlu0 %v2367, 64
    %v2369 = vpop.permute.xlu0 %2368
    %2371 = vst.msk [vmem:[#allocation2] sm:$0x3] %vm491, %v2369
    %v2374 = vrot.slane %v2347, 7
    %v2375 = vsel %vm486, %v2374, %v2346
    %2376 = vrot.lane.b32.xlu0 %v2375, 64
    %v2377 = vpop.permute.xlu0 %2376
    %2379 = vst.msk [vmem:[#allocation3] sm:$0x3] %vm491, %v2377
    %2380 = vrot.lane.b32.xlu0 %v2334, 64
    %v2381 = vpop.permute.xlu0 %2380
    %2382 = vrot.lane.b32.xlu0 %v2335, 64
    %v2383 = vpop.permute.xlu0 %2382
    %2386 = vst.msk [vmem:[%s8 + $0x7] sm:$0x1] %vm523, %v2381
    %2387 = vst.msk [vmem:[%s8 + $0xf] sm:$0x1] %vm523, %v2383
    %2388 = vrot.lane.b32.xlu0 %v2346, 64
    %v2389 = vpop.permute.xlu0 %2388
    %2390 = vrot.lane.b32.xlu0 %v2347, 64
    %v2391 = vpop.permute.xlu0 %2390
    %2394 = vst.msk [vmem:[%s151] sm:$0x1] %vm523, %v2389
    %2395 = vst.msk [vmem:[%s151 + $0x8] sm:$0x1] %vm523, %v2391
    %s2396 = ssub.s32 0, 0
    %p2397 = scmp.lt.s32.totalorder %s2396, 0
    %s2398 = scalar_select %p2397, %s2396, 0
    %s2399 = smul.addr %s2398, 8
    %s2400 = scalar_lea.vmem %s9, %s2399
    // Predicated region
    $region66: #{composition_layer.1} parent=1 // pred_check
      _
    $region67: #{composition_layer.1} parent=1 // pred_check_branch
      %2402 = sbr.rel (0) target = $region69
    $region68: #{composition_layer.1} parent=1 // pred_region
      _
    $region69: #{composition_layer.1} parent=1 // pred_fallthru
      _
    // Predicated region
    $region70: #{composition_layer.1} parent=1 // pred_check
      _
    $region71: #{composition_layer.1} parent=1 // pred_check_branch
      %2404 = sbr.rel (0) target = $region73
    $region72: #{composition_layer.1} parent=1 // pred_region
      %s2405 = ssub.s32 0, 0
    $region73: #{composition_layer.1} parent=1 // pred_fallthru
      _
    // Predicated region
    $region74: #{composition_layer.1} parent=1 // pred_check
      _
    $region75: #{composition_layer.1} parent=1 // pred_check_branch
      %2407 = sbr.rel (0) target = $region77
    $region76: #{composition_layer.1} parent=1 // pred_region
      _
    $region77: #{composition_layer.1} parent=1 // pred_fallthru
      _
    // Predicated region
    $region78: #{composition_layer.1} parent=1 // pred_check
      _
    $region79: #{composition_layer.1} parent=1 // pred_check_branch
      %2409 = sbr.rel (0) target = $region81
    $region80: #{composition_layer.1} parent=1 // pred_region
      %s2410 = ssub.s32 0, 0
      %p2411 = scmp.lt.s32.totalorder %s2410, 0
      %s2412 = scalar_select %p2411, %s2410, 0
      %s2413 = smul.addr %s2412, 8
      %s2414 = scalar_lea.vmem %s9, %s2413
    $region81: #{composition_layer.1} parent=1 // pred_fallthru
      _
    %2415 = vsyncpa [#allocation9], 1
    %2416 = vsyncpa [#allocation11], 1
    %2417 = vsyncpa [#allocation14], 1
    %2418 = vsyncpa [#allocation17], 1

</llo_original>
